<compile_context>
chip_gen: v6e
topology: v6e:2x2x1
jax: 0.10.0
libtpu: 0.0.40
codegen_flags: <defaults>
</compile_context>

<pallas_src>
import functools
import math

import numpy as np
import jax
import jax.numpy as jnp
from jax.experimental import pallas as pl
from jax.experimental.pallas import tpu as pltpu

# ---------------- model hyper-parameters (module defaults) ----------------
NODE_IN = 37        # node_in_feats
NODE_HID = 64       # node_hidden
EDGE_IN = 6         # edge_in_feats
EDGE_HID = 128      # edge_hidden
MSG_STEPS = 3       # message_steps
T_HID = 128         # transformer_hidden
HEADS = 8           # transformer_heads
FC_HID = 64         # fc_hidden
NUM_CLASS = 1
GMT_NUM_NODES = 300                                           # GMT default num_nodes
GMT_POOL_RATIO = 0.25                                         # default pooling_ratio
NUM_SEEDS1 = int(math.ceil(GMT_NUM_NODES * GMT_POOL_RATIO))   # 75 seeds for GMPool_G

EDGE_TILE = 128                     # lane-dense edge tile for the edge-MLP grid
VMEM_LIMIT = 32 * 1024 * 1024       # scoped VMEM: safe on v5e/v6e and within v7x's 64 MiB


# ---------------- Pallas plumbing ----------------
def _vmem():
    return pl.BlockSpec(memory_space=pltpu.MemorySpace.VMEM)


def _const(shape):
    nd = len(shape)
    return pl.BlockSpec(shape, lambda *_: (0,) * nd)


# ---------------- kernels ----------------
def _edge_mlp_kernel(ea_ref, w1_ref, b1_ref, w2_ref, b2_ref, o_ref):
    # edge network: Linear(6,128) + ReLU + Linear(128, 64*64), per 128-edge tile.
    hmid = jnp.dot(ea_ref[...], w1_ref[...], preferred_element_type=jnp.float32)
    hmid = jnp.maximum(hmid + b1_ref[...], 0.0)
    ew = jnp.dot(hmid, w2_ref[...], preferred_element_type=jnp.float32) + b2_ref[...]
    o_ref[...] = ew.astype(jnp.bfloat16)          # bf16 output: half the HBM/VMEM traffic


def _mp_fused_kernel(x_ref, pw_ref, pb_ref, ew_ref, srcoh_ref, dstoh_ref,
                     rootw_ref, nncb_ref, gruw_ref, grub_ref, h_ref):
    """project_node_feats + MSG_STEPS x (relu(NNConv) -> GRU), all in one kernel.

    No grid: the recurrence is an unrolled fori_loop, so ew / one-hots / weights are
    single-buffered in VMEM and the node state h never leaves the chip.
    """
    # project_node_feats: Linear(37, 64) + ReLU
    h0 = jnp.dot(x_ref[...], pw_ref[...], preferred_element_type=jnp.float32)
    h0 = jnp.maximum(h0 + pb_ref[...], 0.0)

    ew = ew_ref[...]              # (EP, 64, 64) bf16, PyG NNConv (in, out) layout
    srcoh = srcoh_ref[...]        # (EP, N)  bf16
    dstoh = dstoh_ref[...]        # (N, EP)  bf16
    rootw = rootw_ref[...]
    nncb = nncb_ref[...]
    gruw = gruw_ref[...]          # (128, 256) fused [r | z | gi_n | gh_n]
    grub = grub_ref[...]
    H = NODE_HID

    def step(_, h):
        hb = h.astype(jnp.bfloat16)
        # gather source-node feats via one-hot matmul, bf16 x bf16 -> f32 acc (MXU)
        x_src = jnp.dot(srcoh, hb, preferred_element_type=jnp.float32)        # (EP, 64)
        # NNConv messages: reduce over the middle (in) axis of the per-edge weight.
        # bf16 multiply halves the (EP,64,64) temporary + VPU traffic; f32 accumulate.
        # (alternative to measure: batched dot_general einsum('eqi,eio->eqo') on the MXU)
        msgs = jnp.sum(x_src.astype(jnp.bfloat16)[:, :, None] * ew,
                       axis=1, dtype=jnp.float32)                             # (EP, 64)
        # scatter-add onto destination nodes via one-hot matmul
        aggr = jnp.dot(dstoh, msgs.astype(jnp.bfloat16),
                       preferred_element_type=jnp.float32)                    # (N, 64)
        root = jnp.dot(h, rootw, preferred_element_type=jnp.float32)
        m = jnp.maximum(aggr + root + nncb, 0.0)                              # relu(NNConv)

        # GRU cell (input = m, hidden = h): ONE [m|h] @ (128,256) gate matmul.
        gates = jnp.dot(jnp.concatenate([m, h], axis=-1), gruw,
                        preferred_element_type=jnp.float32) + grub            # (N, 256)
        r = jax.nn.sigmoid(gates[:, :H])
        z = jax.nn.sigmoid(gates[:, H:2 * H])
        n = jnp.tanh(gates[:, 2 * H:3 * H] + r * gates[:, 3 * H:])
        return (1.0 - z) * n + z * h

    h_ref[...] = jax.lax.fori_loop(0, MSG_STEPS, step, h0, unroll=True)


def _lin1_gcn_kv_kernel(h_ref, ahat_ref, scat_ref, w1_ref, b1_ref, kvw_ref, kvb_ref,
                        k_ref, v_ref):
    # GMT.lin1, then the GMPool_G GCNConv K/V projections and the dense-batch scatter.
    # GCNConv(x) = Ahat @ (x @ W) + b = (Ahat @ x) @ W + b, so Ahat@x is reused; the
    # K and V weights are fused into one (128, 256) matmul; the scatter is a
    # (B*max_nodes, N) one-hot matmul (no XLA scatter / HBM roundtrip).
    xg = jnp.dot(h_ref[...], w1_ref[...], preferred_element_type=jnp.float32) + b1_ref[...]
    ax = jnp.dot(ahat_ref[...], xg.astype(jnp.bfloat16),
                 preferred_element_type=jnp.float32)                          # (N, 128)
    kv = jnp.dot(ax, kvw_ref[...], preferred_element_type=jnp.float32) + kvb_ref[...]  # (N, 256)
    kvd = jnp.dot(scat_ref[...], kv.astype(jnp.bfloat16),
                  preferred_element_type=jnp.float32)                         # (B*mn, 256)
    k_ref[...] = kvd[:, :T_HID]
    v_ref[...] = kvd[:, T_HID:]


def _mab_core(q2, k2, v2, add_mask2, fcq_w, fcq_b, fco_w, fco_b, *, heads, scale):
    """PyG (glob) GMT MAB on ONE graph: fc_q, per-head attention with softmax over
    the QUERY axis (faithful to the reference), head merge, fc_o residual.

    q2: (nq, dv); k2/v2: (nk, dv); add_mask2: (1, nk) additive key mask or None.
    Heads are disjoint 16-wide column blocks -> static lane slices, so each QK^T /
    AV contraction touches only that head's channels (no 8x redundant full-width
    matmuls, no risky in-kernel (8,16) reshape)."""
    nq, dv = q2.shape
    dh = dv // heads
    qp = jnp.dot(q2, fcq_w, preferred_element_type=jnp.float32) + fcq_b       # (nq, dv)

    outs = []
    for h in range(heads):
        lo, hi = h * dh, (h + 1) * dh
        s = jax.lax.dot_general(qp[:, lo:hi], k2[:, lo:hi],
                                (((1,), (1,)), ((), ())),
                                preferred_element_type=jnp.float32) * scale   # (nq, nk)
        if add_mask2 is not None:
            s = s + add_mask2                        # additive key mask, as in reference
        smax = jnp.max(s, axis=0, keepdims=True)     # softmax over QUERIES (PyG dim=1)
        e = jnp.exp(s - smax)
        a = e / jnp.sum(e, axis=0, keepdims=True)    # exact divide (tolerance-safe)
        outs.append(jnp.dot(a, v2[:, lo:hi], preferred_element_type=jnp.float32))
    attn = qp + jnp.concatenate(outs, axis=-1)       # Q_ + A @ V_
    y = jnp.dot(attn, fco_w, preferred_element_type=jnp.float32) + fco_b
    return attn + jnp.maximum(y, 0.0)                # out + relu(fc_o(out))


def _mab_gkv_kernel(q_ref, k_ref, v_ref, mask_ref, fcqw_ref, fcqb_ref,
                    fcow_ref, fcob_ref, o_ref, *, heads, scale):
    # GMPool_G: K/V are dense-batched GCNConv outputs (one graph per grid step).
    o_ref[...] = _mab_core(q_ref[...], k_ref[...], v_ref[...], mask_ref[...],
                           fcqw_ref[...], fcqb_ref[...], fcow_ref[...], fcob_ref[...],
                           heads=heads, scale=scale)


def _mab_linkv_kernel(q_ref, x_ref, kvw_ref, kvb_ref, fcqw_ref, fcqb_ref,
                      fcow_ref, fcob_ref, o_ref, *, heads, scale):
    # SelfAtt (SAB) / GMPool_I: K/V are Linear projections of x, fused into one
    # (128, 256) matmul, one graph per grid step.
    x = x_ref[...]
    kv = jnp.dot(x, kvw_ref[...], preferred_element_type=jnp.float32) + kvb_ref[...]
    k = kv[:, :T_HID]
    v = kv[:, T_HID:]
    o_ref[...] = _mab_core(q_ref[...], k, v, None,
                           fcqw_ref[...], fcqb_ref[...], fcow_ref[...], fcob_ref[...],
                           heads=heads, scale=scale)


def _head_kernel(x_ref, w_lin2_ref, b_lin2_ref, w_fc_ref, b_fc_ref,
                 w_out_ref, b_out_ref, o_ref):
    # GMT.lin2 (128->64) -> relu(fc0 64->64) -> (dropout: eval identity) -> lin2 (64->1)
    y = jnp.dot(x_ref[...], w_lin2_ref[...], preferred_element_type=jnp.float32) + b_lin2_ref[...]
    y = jnp.maximum(jnp.dot(y, w_fc_ref[...], preferred_element_type=jnp.float32) + b_fc_ref[...], 0.0)
    # TODO(synk): training-mode Dropout(0.2) omitted; eval-mode (identity) semantics used.
    o_ref[...] = jnp.dot(y, w_out_ref[...], preferred_element_type=jnp.float32) + b_out_ref[...]


# ---------------- kernel wrappers ----------------
def edge_network(edge_attr_p, p):
    EP = edge_attr_p.shape[0]
    flops = 2 * EP * (EDGE_IN * EDGE_HID + EDGE_HID * NODE_HID * NODE_HID)
    bytes_acc = int(edge_attr_p.size * 4 + p['edge_w2'].size * 4
                    + EP * NODE_HID * NODE_HID * 2)
    ew = pl.pallas_call(
        _edge_mlp_kernel,
        out_shape=jax.ShapeDtypeStruct((EP, NODE_HID * NODE_HID), jnp.bfloat16),
        grid=(EP // EDGE_TILE,),
        in_specs=[pl.BlockSpec((EDGE_TILE, EDGE_IN), lambda i: (i, 0)),
                  _const(p['edge_w1'].shape), _const(p['edge_b1'].shape),
                  _const(p['edge_w2'].shape), _const(p['edge_b2'].shape)],
        out_specs=pl.BlockSpec((EDGE_TILE, NODE_HID * NODE_HID), lambda i: (i, 0)),
        compiler_params=pltpu.CompilerParams(
            dimension_semantics=("parallel",), vmem_limit_bytes=VMEM_LIMIT),
        cost_estimate=pl.CostEstimate(flops=int(flops), transcendentals=0,
                                      bytes_accessed=bytes_acc),
    )(edge_attr_p, p['edge_w1'], p['edge_b1'], p['edge_w2'], p['edge_b2'])
    # PyG NNConv layout: view(-1, in_channels, out_channels). No transpose needed.
    return ew.reshape(EP, NODE_HID, NODE_HID)


def message_passing(x, ew, src_oh, dst_oh, p):
    N = x.shape[0]
    EP = ew.shape[0]
    flops = (2 * N * NODE_IN * NODE_HID
             + MSG_STEPS * (2 * EP * N * NODE_HID + 2 * EP * NODE_HID * NODE_HID
                            + 2 * N * EP * NODE_HID + 2 * N * NODE_HID * NODE_HID
                            + 2 * N * (2 * NODE_HID) * (4 * NODE_HID)))
    trans = MSG_STEPS * N * 3 * NODE_HID
    bytes_acc = int(x.size * 4 + (ew.size + src_oh.size + dst_oh.size) * 2
                    + N * NODE_HID * 4)
    args = (x, p['proj_w'], p['proj_b'], ew, src_oh, dst_oh,
            p['root_w'], p['nnconv_b'], p['gru_w'], p['gru_b'])
    return pl.pallas_call(
        _mp_fused_kernel,
        out_shape=jax.ShapeDtypeStruct((N, NODE_HID), jnp.float32),
        in_specs=[_vmem() for _ in args],
        out_specs=_vmem(),
        compiler_params=pltpu.CompilerParams(vmem_limit_bytes=VMEM_LIMIT),
        cost_estimate=pl.CostEstimate(flops=int(flops), transcendentals=int(trans),
                                      bytes_accessed=bytes_acc),
    )(*args)


def lin1_gcn_kv(h, ahat, scatter_oh, g):
    N = h.shape[0]
    BM = scatter_oh.shape[0]
    flops = (2 * N * NODE_HID * T_HID + 2 * N * N * T_HID
             + 2 * N * T_HID * 2 * T_HID + 2 * BM * N * 2 * T_HID)
    bytes_acc = int(h.size * 4 + (ahat.size + scatter_oh.size) * 2
                    + g['p1_kv_w'].size * 4 + BM * 2 * T_HID * 4)
    args = (h, ahat, scatter_oh, g['lin1_w'], g['lin1_b'], g['p1_kv_w'], g['p1_kv_b'])
    return pl.pallas_call(
        _lin1_gcn_kv_kernel,
        out_shape=(jax.ShapeDtypeStruct((BM, T_HID), jnp.float32),
                   jax.ShapeDtypeStruct((BM, T_HID), jnp.float32)),
        in_specs=[_vmem() for _ in args],
        out_specs=(_vmem(), _vmem()),
        compiler_params=pltpu.CompilerParams(vmem_limit_bytes=VMEM_LIMIT),
        cost_estimate=pl.CostEstimate(flops=int(flops), transcendentals=0,
                                      bytes_accessed=bytes_acc),
    )(*args)


def mab_pool_g(S, Kd, Vd, add_mask, g):
    B, mn, _ = Kd.shape
    nq = S.shape[1]
    kern = functools.partial(_mab_gkv_kernel, heads=HEADS, scale=1.0 / math.sqrt(T_HID))
    flops = B * (4 * nq * T_HID * T_HID + 4 * nq * mn * T_HID)
    trans = B * HEADS * nq * mn
    bytes_acc = int((S.size + Kd.size + Vd.size + add_mask.size
                     + 4 * T_HID * T_HID + B * nq * T_HID) * 4)
    return pl.pallas_call(
        kern,
        out_shape=jax.ShapeDtypeStruct((B, nq, T_HID), jnp.float32),
        grid=(B,),
        in_specs=[pl.BlockSpec((None, nq, T_HID), lambda b: (0, 0, 0)),
                  pl.BlockSpec((None, mn, T_HID), lambda b: (b, 0, 0)),
                  pl.BlockSpec((None, mn, T_HID), lambda b: (b, 0, 0)),
                  pl.BlockSpec((None, 1, mn), lambda b: (b, 0, 0)),
                  _const(g['p1_fcq_w'].shape), _const(g['p1_fcq_b'].shape),
                  _const(g['p1_fco_w'].shape), _const(g['p1_fco_b'].shape)],
        out_specs=pl.BlockSpec((None, nq, T_HID), lambda b: (b, 0, 0)),
        compiler_params=pltpu.CompilerParams(
            dimension_semantics=("parallel",), vmem_limit_bytes=VMEM_LIMIT),
        cost_estimate=pl.CostEstimate(flops=int(flops), transcendentals=int(trans),
                                      bytes_accessed=bytes_acc),
    )(S, Kd, Vd, add_mask,
      g['p1_fcq_w'], g['p1_fcq_b'], g['p1_fco_w'], g['p1_fco_b'])


def mab_lin_kv(Q, X, g, prefix):
    B, nk, _ = X.shape
    nq = Q.shape[1]
    q_shared = (Q.shape[0] == 1)      # learned seeds shared across graphs (GMPool_I)
    q_map = (lambda b: (0, 0, 0)) if q_shared else (lambda b: (b, 0, 0))
    kern = functools.partial(_mab_linkv_kernel, heads=HEADS, scale=1.0 / math.sqrt(T_HID))
    flops = B * (4 * nk * T_HID * T_HID + 4 * nq * T_HID * T_HID + 4 * nq * nk * T_HID)
    trans = B * HEADS * nq * nk
    bytes_acc = int((Q.size + X.size + B * nq * T_HID + 6 * T_HID * T_HID) * 4)
    return pl.pallas_call(
        kern,
        out_shape=jax.ShapeDtypeStruct((B, nq, T_HID), jnp.float32),
        grid=(B,),
        in_specs=[pl.BlockSpec((None, nq, T_HID), q_map),
                  pl.BlockSpec((None, nk, T_HID), lambda b: (b, 0, 0)),
                  _const(g[prefix + '_kv_w'].shape), _const(g[prefix + '_kv_b'].shape),
                  _const(g[prefix + '_fcq_w'].shape), _const(g[prefix + '_fcq_b'].shape),
                  _const(g[prefix + '_fco_w'].shape), _const(g[prefix + '_fco_b'].shape)],
        out_specs=pl.BlockSpec((None, nq, T_HID), lambda b: (b, 0, 0)),
        compiler_params=pltpu.CompilerParams(
            dimension_semantics=("parallel",), vmem_limit_bytes=VMEM_LIMIT),
        cost_estimate=pl.CostEstimate(flops=int(flops), transcendentals=int(trans),
                                      bytes_accessed=bytes_acc),
    )(Q, X,
      g[prefix + '_kv_w'], g[prefix + '_kv_b'],
      g[prefix + '_fcq_w'], g[prefix + '_fcq_b'],
      g[prefix + '_fco_w'], g[prefix + '_fco_b'])


def head(x, p, g):
    B = x.shape[0]
    args = (x, g['lin2_w'], g['lin2_b'], p['fc0_w'], p['fc0_b'], p['out_w'], p['out_b'])
    return pl.pallas_call(
        _head_kernel,
        out_shape=jax.ShapeDtypeStruct((B, NUM_CLASS), jnp.float32),
        in_specs=[_vmem() for _ in args],
        out_specs=_vmem(),
    )(*args)


# ---------------- static graph structures (computed ONCE, outside forward) ----------------
def precompute_graph(edge_index, batch, num_nodes):
    src = np.asarray(edge_index[0])
    dst = np.asarray(edge_index[1])
    batch_np = np.asarray(batch)
    N, E = num_nodes, src.shape[0]
    B = int(batch_np.max()) + 1
    EP = int(np.ceil(E / EDGE_TILE)) * EDGE_TILE    # pad edges to the edge tile

    # one-hot entries are exact in bf16: zero-accuracy-loss gather/scatter, half the VMEM
    src_oh = np.zeros((EP, N), np.float32)
    src_oh[np.arange(E), src] = 1.0
    dst_oh = np.zeros((N, EP), np.float32)
    dst_oh[dst, np.arange(E)] = 1.0

    # GCN: D^-1/2 (A + I) D^-1/2, A[i,j] = #edges j->i
    A = np.zeros((N, N), np.float32)
    np.add.at(A, (dst, src), 1.0)
    A = A + np.eye(N, dtype=np.float32)
    deg = A.sum(axis=1)
    dinv = np.where(deg > 0, 1.0 / np.sqrt(deg), 0.0).astype(np.float32)
    ahat = (dinv[:, None] * A) * dinv[None, :]

    # dense-batch scatter one-hot (B*max_nodes, N) + additive key mask (B, 1, max_nodes)
    counts = np.bincount(batch_np, minlength=B)
    mn = int(counts.max())
    pos = np.zeros(N, np.int32)
    c = np.zeros(B, np.int32)
    for i, b in enumerate(batch_np):
        pos[i] = c[b]
        c[b] += 1
    scat = np.zeros((B * mn, N), np.float32)
    scat[batch_np * mn + pos, np.arange(N)] = 1.0
    node_mask = np.zeros((B, mn), np.float32)
    node_mask[batch_np, pos] = 1.0
    add_mask = ((1.0 - node_mask) * (-1e9))[:, None, :]

    return dict(
        src_oh=jnp.asarray(src_oh, jnp.bfloat16),
        dst_oh=jnp.asarray(dst_oh, jnp.bfloat16),
        ahat=jnp.asarray(ahat, jnp.bfloat16),
        scatter_oh=jnp.asarray(scat, jnp.bfloat16),
        add_mask=jnp.asarray(add_mask, jnp.float32),
        num_graphs=B, max_nodes=mn, num_edges=E, num_edges_padded=EP)


# ---------------- parameters ----------------
def _init_linear(key, fan_in, fan_out):
    kw, kb = jax.random.split(key)
    w = jax.random.normal(kw, (fan_in, fan_out), jnp.float32) * (1.0 / np.sqrt(fan_in))
    b = jax.random.normal(kb, (1, fan_out), jnp.float32) * 0.01
    return w, b


def init_params(key):
    keys = iter(jax.random.split(key, 64))
    p = {}
    p['proj_w'], p['proj_b'] = _init_linear(next(keys), NODE_IN, NODE_HID)
    p['edge_w1'], p['edge_b1'] = _init_linear(next(keys), EDGE_IN, EDGE_HID)
    # edge_w2 columns map to the flattened (in, out) per-edge weight (PyG NNConv layout).
    p['edge_w2'], p['edge_b2'] = _init_linear(next(keys), EDGE_HID, NODE_HID * NODE_HID)
    p['root_w'], _ = _init_linear(next(keys), NODE_HID, NODE_HID)
    p['nnconv_b'] = jax.random.normal(next(keys), (1, NODE_HID), jnp.float32) * 0.01

    # GRU (PyTorch gate order r|z|n, pre-transposed to (in, 3H)), fused into ONE
    # (2H, 4H) block weight for the [m|h] @ W gate matmul: columns = [r | z | gi_n | gh_n].
    H = NODE_HID
    s = 1.0 / np.sqrt(H)
    wih = jax.random.uniform(next(keys), (H, 3 * H), jnp.float32, -s, s)
    whh = jax.random.uniform(next(keys), (H, 3 * H), jnp.float32, -s, s)
    bih = jax.random.uniform(next(keys), (1, 3 * H), jnp.float32, -s, s)
    bhh = jax.random.uniform(next(keys), (1, 3 * H), jnp.float32, -s, s)
    zeros = jnp.zeros((H, H), jnp.float32)
    p['gru_w'] = jnp.concatenate([
        jnp.concatenate([wih[:, :H], wih[:, H:2 * H], wih[:, 2 * H:], zeros], axis=1),
        jnp.concatenate([whh[:, :H], whh[:, H:2 * H], zeros, whh[:, 2 * H:]], axis=1),
    ], axis=0)                                                          # (128, 256)
    p['gru_b'] = jnp.concatenate([bih[:, :H] + bhh[:, :H],
                                  bih[:, H:2 * H] + bhh[:, H:2 * H],
                                  bih[:, 2 * H:], bhh[:, 2 * H:]], axis=1)   # (1, 256)

    # GraphMultisetTransformer (pool_sequences = GMPool_G, SelfAtt, GMPool_I)
    g = {}
    g['lin1_w'], g['lin1_b'] = _init_linear(next(keys), NODE_HID, T_HID)
    g['lin2_w'], g['lin2_b'] = _init_linear(next(keys), T_HID, FC_HID)
    g['p1_S'] = jax.random.normal(next(keys), (1, NUM_SEEDS1, T_HID), jnp.float32) * (1.0 / np.sqrt(T_HID))
    g['p3_S'] = jax.random.normal(next(keys), (1, 1, T_HID), jnp.float32) * (1.0 / np.sqrt(T_HID))
    for prefix in ('p1', 'p2', 'p3'):
        g[prefix + '_fcq_w'], g[prefix + '_fcq_b'] = _init_linear(next(keys), T_HID, T_HID)
        kw, kb = _init_linear(next(keys), T_HID, T_HID)
        vw, vb = _init_linear(next(keys), T_HID, T_HID)
        # K and V projections fused into a single (128, 256) matmul (sliced in-kernel).
        g[prefix + '_kv_w'] = jnp.concatenate([kw, vw], axis=1)
        g[prefix + '_kv_b'] = jnp.concatenate([kb, vb], axis=1)
        g[prefix + '_fco_w'], g[prefix + '_fco_b'] = _init_linear(next(keys), T_HID, T_HID)
    p['gmt'] = g

    # fc head (n_fc_layers=1) + final lin2 (critic=False)
    p['fc0_w'], p['fc0_b'] = _init_linear(next(keys), FC_HID, FC_HID)
    p['out_w'], p['out_b'] = _init_linear(next(keys), FC_HID, NUM_CLASS)
    return p


# ---------------- forward ----------------
def mpnn_forward(p, x, edge_attr, graph):
    x = jnp.asarray(x, jnp.float32)
    edge_attr = jnp.asarray(edge_attr, jnp.float32)
    B = graph['num_graphs']
    mn = graph['max_nodes']
    EP = graph['num_edges_padded']
    g = p['gmt']

    # ---- edge network (loop-invariant, hoisted; tiled over edges, bf16 out) ----
    ea = jnp.pad(edge_attr, ((0, EP - edge_attr.shape[0]), (0, 0)))
    ew = edge_network(ea, p)                                          # (EP, in, out) bf16

    # ---- fused projection + 3x (relu(NNConv) -> GRU)  (1 grid-less pallas_call) ----
    h = message_passing(x, ew, graph['src_oh'], graph['dst_oh'], p)   # (N, 64) f32

    # ---- GMT front end: lin1 + GCN K/V + dense-batch scatter (1 pallas_call) ----
    kd_flat, vd_flat = lin1_gcn_kv(h, graph['ahat'], graph['scatter_oh'], g)
    Kd = kd_flat.reshape(B, mn, T_HID)
    Vd = vd_flat.reshape(B, mn, T_HID)

    # ---- 3 fused MAB stages, gridded over graphs ("parallel") ----
    bx = mab_pool_g(g['p1_S'], Kd, Vd, graph['add_mask'], g)          # GMPool_G  (B, 75, 128)
    bx = mab_lin_kv(bx, bx, g, 'p2')                                  # SelfAtt   (B, 75, 128)
    bx = mab_lin_kv(g['p3_S'], bx, g, 'p3')                           # GMPool_I  (B, 1, 128)

    # ---- fused head: GMT.lin2 -> relu(fc0) -> lin2 (1 pallas_call) ----
    out = head(bx.reshape(B, T_HID), p, g)
    return out                                                        # (B, 1)


# ---------------- main ----------------
if __name__ == "__main__":
    key = jax.random.PRNGKey(0)
    pkey, xkey, ekey = jax.random.split(key, 3)
    params = init_params(pkey)

    # small synthetic batch: 2 graphs, 6 nodes each, bidirectional ring edges
    nodes_per_graph, num_graphs = 6, 2
    N = nodes_per_graph * num_graphs
    x = jax.random.normal(xkey, (N, NODE_IN), jnp.float32)

    src_list, dst_list = [], []
    for gidx in range(num_graphs):
        off = gidx * nodes_per_graph
        for i in range(nodes_per_graph):
            j = (i + 1) % nodes_per_graph
            src_list += [off + i, off + j]
            dst_list += [off + j, off + i]
    edge_index = np.array([src_list, dst_list], np.int32)             # (2, 24)
    E = edge_index.shape[1]
    edge_attr = jax.random.normal(ekey, (E, EDGE_IN), jnp.float32)
    batch = np.array([gidx for gidx in range(num_graphs) for _ in range(nodes_per_graph)],
                     np.int32)

    # static graph structures built once (cached across forward passes)
    graph = precompute_graph(edge_index, batch, N)

    out = mpnn_forward(params, x, edge_attr, graph)
    out = jax.block_until_ready(out)
    assert out.shape == (num_graphs, NUM_CLASS), out.shape
    assert np.all(np.isfinite(np.asarray(out)))
    print("KERNEL_OK")
</pallas_src>

<mosaic_0001>
module attributes {stable_mosaic.version = 11 : i64} {
  func.func @_edge_mlp_kernel(%arg0: i32, %arg1: memref<128x6xf32, #tpu.memory_space<vmem>>, %arg2: memref<6x128xf32, #tpu.memory_space<vmem>>, %arg3: memref<1x128xf32, #tpu.memory_space<vmem>>, %arg4: memref<128x4096xf32, #tpu.memory_space<vmem>>, %arg5: memref<1x4096xf32, #tpu.memory_space<vmem>>, %arg6: memref<128x4096xbf16, #tpu.memory_space<vmem>>) attributes {dimension_semantics = [#tpu.dimension_semantics<parallel>], iteration_bounds = array<i64: 1>, scalar_prefetch = 0 : i64, scratch_operands = 0 : i64, tpu.core_type = #tpu.core_type<tc>, window_params = [{transform_indices = @transform_0, window_bounds = array<i64: 128, 6>}, {pipeline_mode = #tpu.pipeline_mode<synchronous>, transform_indices = @transform_1, window_bounds = array<i64: 6, 128>}, {pipeline_mode = #tpu.pipeline_mode<synchronous>, transform_indices = @transform_2, window_bounds = array<i64: 1, 128>}, {pipeline_mode = #tpu.pipeline_mode<synchronous>, transform_indices = @transform_3, window_bounds = array<i64: 128, 4096>}, {pipeline_mode = #tpu.pipeline_mode<synchronous>, transform_indices = @transform_4, window_bounds = array<i64: 1, 4096>}, {transform_indices = @transform_5, window_bounds = array<i64: 128, 4096>}]} {
    %c0 = arith.constant 0 : index
    %c0_0 = arith.constant 0 : index
    %0 = vector.load %arg1[%c0, %c0_0] : memref<128x6xf32, #tpu.memory_space<vmem>>, vector<128x6xf32>
    %c0_1 = arith.constant 0 : index
    %c0_2 = arith.constant 0 : index
    %1 = vector.load %arg2[%c0_1, %c0_2] : memref<6x128xf32, #tpu.memory_space<vmem>>, vector<6x128xf32>
    %cst = arith.constant dense<0.000000e+00> : vector<128x128xf32>
    %2 = tpu.matmul %0, %1, %cst {dimension_numbers = #tpu.dot_dimension_numbers<[1], [0], [0], [1], [0, 0, 1, 1], [], []>} : vector<128x6xf32>, vector<6x128xf32>, vector<128x128xf32> -> vector<128x128xf32>
    %c0_3 = arith.constant 0 : index
    %c0_4 = arith.constant 0 : index
    %3 = vector.load %arg3[%c0_3, %c0_4] : memref<1x128xf32, #tpu.memory_space<vmem>>, vector<1x128xf32>
    %4 = vector.broadcast %3 : vector<1x128xf32> to vector<128x128xf32>
    %5 = arith.addf %2, %4 : vector<128x128xf32>
    %cst_5 = arith.constant 0.000000e+00 : f32
    %6 = vector.broadcast %cst_5 : f32 to vector<128x128xf32>
    %7 = arith.maximumf %5, %6 : vector<128x128xf32>
    %c0_6 = arith.constant 0 : index
    %c0_7 = arith.constant 0 : index
    %8 = vector.load %arg4[%c0_6, %c0_7] : memref<128x4096xf32, #tpu.memory_space<vmem>>, vector<128x4096xf32>
    %cst_8 = arith.constant dense<0.000000e+00> : vector<128x4096xf32>
    %9 = tpu.matmul %7, %8, %cst_8 {dimension_numbers = #tpu.dot_dimension_numbers<[1], [0], [0], [1], [0, 0, 1, 1], [], []>} : vector<128x128xf32>, vector<128x4096xf32>, vector<128x4096xf32> -> vector<128x4096xf32>
    %c0_9 = arith.constant 0 : index
    %c0_10 = arith.constant 0 : index
    %10 = vector.load %arg5[%c0_9, %c0_10] : memref<1x4096xf32, #tpu.memory_space<vmem>>, vector<1x4096xf32>
    %11 = vector.broadcast %10 : vector<1x4096xf32> to vector<128x4096xf32>
    %12 = arith.addf %9, %11 : vector<128x4096xf32>
    %13 = arith.truncf %12 : vector<128x4096xf32> to vector<128x4096xbf16>
    %c0_11 = arith.constant 0 : index
    %c0_12 = arith.constant 0 : index
    %14 = vector.load %arg6[%c0_11, %c0_12] : memref<128x4096xbf16, #tpu.memory_space<vmem>>, vector<128x4096xbf16>
    tpu.vector_store %arg6[%c0_11, %c0_12], %13 {strides = array<i32>} : memref<128x4096xbf16, #tpu.memory_space<vmem>>, vector<128x4096xbf16>,
    return
  }
  func.func @transform_0(%arg0: i32) -> (i32, i32) {
    %c0_i32 = arith.constant 0 : i32
    %c0_i32_0 = arith.constant 0 : i32
    return %arg0, %c0_i32 : i32, i32
  }
  func.func @transform_1(%arg0: i32) -> (i32, i32) {
    %c0_i32 = arith.constant 0 : i32
    %c0_i32_0 = arith.constant 0 : i32
    %c0_i32_1 = arith.constant 0 : i32
    return %c0_i32, %c0_i32_0 : i32, i32
  }
  func.func @transform_2(%arg0: i32) -> (i32, i32) {
    %c0_i32 = arith.constant 0 : i32
    %c0_i32_0 = arith.constant 0 : i32
    %c0_i32_1 = arith.constant 0 : i32
    return %c0_i32, %c0_i32_0 : i32, i32
  }
  func.func @transform_3(%arg0: i32) -> (i32, i32) {
    %c0_i32 = arith.constant 0 : i32
    %c0_i32_0 = arith.constant 0 : i32
    %c0_i32_1 = arith.constant 0 : i32
    return %c0_i32, %c0_i32_0 : i32, i32
  }
  func.func @transform_4(%arg0: i32) -> (i32, i32) {
    %c0_i32 = arith.constant 0 : i32
    %c0_i32_0 = arith.constant 0 : i32
    %c0_i32_1 = arith.constant 0 : i32
    return %c0_i32, %c0_i32_0 : i32, i32
  }
  func.func @transform_5(%arg0: i32) -> (i32, i32) {
    %c0_i32 = arith.constant 0 : i32
    %c0_i32_0 = arith.constant 0 : i32
    return %arg0, %c0_i32 : i32, i32
  }
}

</mosaic_0001>

<llo_original>
// kernel: tpu_custom_call.1
$region0: #{tpu_custom_call.1}
  #allocation0 [shape = 'u32[]', space=smem, size = 0x4, offset = 0x4, fixed_abs, tag = 'smem constant byte address 0x4 - core index']
  #allocation1 [shape = 'u32[144,128]{1,0:T(1,128)}', space=vmem, size = 0x12000, scoped, tag = 'internal scratch']
  %s0 = inlined_call_operand.vmem [shape: f32[128,6], index: 0, kind: input, shape index: {}]
  %s1 = inlined_call_operand.hbm [shape: f32[6,128], index: 1, kind: input, shape index: {}]
  %s2 = inlined_call_operand.hbm [shape: f32[1,128], index: 2, kind: input, shape index: {}]
  %s3 = inlined_call_operand.hbm [shape: f32[128,4096], index: 3, kind: input, shape index: {}]
  %s4 = inlined_call_operand.hbm [shape: f32[1,4096], index: 4, kind: input, shape index: {}]
  %s5 = inlined_call_operand.hbm [shape: bf16[128,4096], index: 5, kind: output, shape index: {}]
  %s6 = sld [smem:[#allocation0]]
  $region46: #{tpu_custom_call.1} parent=0
    _
  %s8 = ssub.s32 1, %s6
  %s9 = scalar_select 0, %s8, %s6
  $region1: #{tpu_custom_call.1} parent=0
    #allocation2 [shape = 'u8[4096]{0}', space=vmem, size = 0x1000, scoped, tag = 'input window, operand 1, single buffered']
    #allocation3 [shape = 's32[1]{0}', space=sflag, size = 0x4, scoped, tag = 'scoped memory for tpu_custom_call.1']
    #allocation4 [shape = 's32[1]{0}', space=sflag, size = 0x4, scoped, tag = 'scoped memory for tpu_custom_call.1']
    #allocation5 [shape = 'u8[512]{0}', space=vmem, size = 0x400, scoped, tag = 'input window, operand 2, single buffered']
    #allocation6 [shape = 's32[1]{0}', space=sflag, size = 0x4, scoped, tag = 'scoped memory for tpu_custom_call.1']
    #allocation7 [shape = 'u8[2097152]{0}', space=vmem, size = 0x200000, scoped, tag = 'input window, operand 3, single buffered']
    #allocation8 [shape = 'u8[16384]{0}', space=vmem, size = 0x4000, scoped, tag = 'input window, operand 4, single buffered']
    #allocation9 [shape = 's32[1]{0}', space=sflag, size = 0x4, scoped, tag = 'scoped memory for tpu_custom_call.1']
    #allocation10 [shape = 'u8[1048576]{0}', space=vmem, size = 0x100000, scoped, tag = 'output window, operand 0, single buffered']
    %10 = vsyncpa [#allocation3], 0
    %11 = vsyncpa [#allocation6], 0
    %12 = vsyncpa [#allocation9], 0
    %13 = vsyncpa [#allocation4], 0
    // Predicated region
    $region2: #{tpu_custom_call.1} parent=1 // pred_check
      _
    $region3: #{tpu_custom_call.1} parent=1 // pred_check_branch
      %15 = sbr.rel (0) target = $region5
    $region4: #{tpu_custom_call.1} parent=1 // pred_region
      _
    $region5: #{tpu_custom_call.1} parent=1 // pred_fallthru
      _
    // Predicated region
    $region6: #{tpu_custom_call.1} parent=1 // pred_check
      _
    $region7: #{tpu_custom_call.1} parent=1 // pred_check_branch
      %17 = sbr.rel (0) target = $region9
    $region8: #{tpu_custom_call.1} parent=1 // pred_region
      %s19 = ssub.s32 128, 128
      %20 = vsyncadd [#allocation3], %s19
      %s22 = sshll.u32 [#allocation2], 4
      %s23 = int_to_ptr.vmem [resolvable:$true] %s22
      %25 = dma.hbm_to_vmem [thread:$0]  %s1, 128, %s23, [#allocation3]
    $region9: #{tpu_custom_call.1} parent=1 // pred_fallthru
      _
    // Predicated region
    $region10: #{tpu_custom_call.1} parent=1 // pred_check
      _
    $region11: #{tpu_custom_call.1} parent=1 // pred_check_branch
      %27 = sbr.rel (0) target = $region13
    $region12: #{tpu_custom_call.1} parent=1 // pred_region
      %s29 = ssub.s32 16, 16
      %30 = vsyncadd [#allocation6], %s29
      %s32 = sshll.u32 [#allocation5], 4
      %s33 = int_to_ptr.vmem [resolvable:$true] %s32
      %35 = dma.hbm_to_vmem [thread:$0]  %s2, 16, %s33, [#allocation6]
    $region13: #{tpu_custom_call.1} parent=1 // pred_fallthru
      _
    // Predicated region
    $region14: #{tpu_custom_call.1} parent=1 // pred_check
      _
    $region15: #{tpu_custom_call.1} parent=1 // pred_check_branch
      %37 = sbr.rel (0) target = $region17
    $region16: #{tpu_custom_call.1} parent=1 // pred_region
      %s39 = ssub.s32 65536, 65536
      %40 = vsyncadd [#allocation6], %s39
      %s41 = sshll.u32 [#allocation7], 4
      %s42 = int_to_ptr.vmem [resolvable:$true] %s41
      %47 = dma.hbm_to_vmem [thread:$0]  %s3, 65536, %s42, [#allocation6], 4096, 4096, 256
    $region17: #{tpu_custom_call.1} parent=1 // pred_fallthru
      _
    // Predicated region
    $region18: #{tpu_custom_call.1} parent=1 // pred_check
      _
    $region19: #{tpu_custom_call.1} parent=1 // pred_check_branch
      %49 = sbr.rel (0) target = $region21
    $region20: #{tpu_custom_call.1} parent=1 // pred_region
      %s51 = ssub.s32 512, 512
      %52 = vsyncadd [#allocation9], %s51
      %s54 = sshll.u32 [#allocation8], 4
      %s55 = int_to_ptr.vmem [resolvable:$true] %s54
      %57 = dma.hbm_to_vmem [thread:$0]  %s4, 512, %s55, [#allocation9]
    $region21: #{tpu_custom_call.1} parent=1 // pred_fallthru
      _
    // Predicated region
    $region22: #{tpu_custom_call.1} parent=1 // pred_check
      _
    $region23: #{tpu_custom_call.1} parent=1 // pred_check_branch
      %59 = sbr.rel (0) target = $region25
    $region24: #{tpu_custom_call.1} parent=1 // pred_region
      %60 = dma.done [#allocation3], 128
    $region25: #{tpu_custom_call.1} parent=1 // pred_fallthru
      _
    // Predicated region
    $region26: #{tpu_custom_call.1} parent=1 // pred_check
      _
    $region27: #{tpu_custom_call.1} parent=1 // pred_check_branch
      %62 = sbr.rel (0) target = $region29
    $region28: #{tpu_custom_call.1} parent=1 // pred_region
      %63 = dma.done [#allocation6], 16
    $region29: #{tpu_custom_call.1} parent=1 // pred_fallthru
      _
    // Predicated region
    $region30: #{tpu_custom_call.1} parent=1 // pred_check
      _
    $region31: #{tpu_custom_call.1} parent=1 // pred_check_branch
      %65 = sbr.rel (0) target = $region33
    $region32: #{tpu_custom_call.1} parent=1 // pred_region
      %66 = dma.done [#allocation6], 65536
    $region33: #{tpu_custom_call.1} parent=1 // pred_fallthru
      _
    // Predicated region
    $region34: #{tpu_custom_call.1} parent=1 // pred_check
      _
    $region35: #{tpu_custom_call.1} parent=1 // pred_check_branch
      %68 = sbr.rel (0) target = $region37
    $region36: #{tpu_custom_call.1} parent=1 // pred_region
      %69 = dma.done [#allocation9], 512
    $region37: #{tpu_custom_call.1} parent=1 // pred_fallthru
      _
    %v70 = vld [vmem:[%s0] sm:$0xff]
    %v71 = vld [vmem:[%s0 + $0x8] sm:$0xff]
    %v72 = vld [vmem:[%s0 + $0x10] sm:$0xff]
    %v73 = vld [vmem:[%s0 + $0x18] sm:$0xff]
    %v74 = vld [vmem:[%s0 + $0x20] sm:$0xff]
    %v75 = vld [vmem:[%s0 + $0x28] sm:$0xff]
    %v76 = vld [vmem:[%s0 + $0x30] sm:$0xff]
    %v77 = vld [vmem:[%s0 + $0x38] sm:$0xff]
    %v78 = vld [vmem:[%s0 + $0x40] sm:$0xff]
    %v79 = vld [vmem:[%s0 + $0x48] sm:$0xff]
    %v80 = vld [vmem:[%s0 + $0x50] sm:$0xff]
    %v81 = vld [vmem:[%s0 + $0x58] sm:$0xff]
    %v82 = vld [vmem:[%s0 + $0x60] sm:$0xff]
    %v83 = vld [vmem:[%s0 + $0x68] sm:$0xff]
    %v84 = vld [vmem:[%s0 + $0x70] sm:$0xff]
    %v85 = vld [vmem:[%s0 + $0x78] sm:$0xff]
    %v86 = vld [vmem:[#allocation2] sm:$0x3f]
    %v87 = vld [vmem:[#allocation5] sm:$0x1]
    %v89 = vlaneseq
    %v90 = vshrl.u32 %v89, 7
    %v91 = vsub.s32 0, %v90
    %v92 = vrot.slane %v87, %v91
    %vm94 = vcmask 48128
    %v96 = vsel %vm94, %v70, 0
    %v99 = vsel %vm94, %v71, 0
    %v102 = vsel %vm94, %v72, 0
    %v105 = vsel %vm94, %v73, 0
    %v108 = vsel %vm94, %v74, 0
    %v111 = vsel %vm94, %v75, 0
    %v114 = vsel %vm94, %v76, 0
    %v117 = vsel %vm94, %v77, 0
    %v120 = vsel %vm94, %v78, 0
    %v123 = vsel %vm94, %v79, 0
    %v126 = vsel %vm94, %v80, 0
    %v129 = vsel %vm94, %v81, 0
    %v132 = vsel %vm94, %v82, 0
    %v135 = vsel %vm94, %v83, 0
    %v138 = vsel %vm94, %v84, 0
    %v141 = vsel %vm94, %v85, 0
    %vm143 = vcmask 1045504
    %v145 = vsel %vm143, %v86, 0
    %147 = vmatprep.subr.mxu0 0.0
    %148 = vmatpush1.msra.mxu0 0.0
    %149 = vmatprep.subr.mxu0 0.0
    %150 = vmatpush1.msra.mxu0 0.0
    %151 = vmatprep.subr.mxu0 0.0
    %152 = vmatpush1.msra.mxu0 0.0
    %153 = vmatprep.subr.mxu0 0.0
    %154 = vmatpush1.msra.mxu0 0.0
    %155 = vmatprep.subr.mxu0 0.0
    %156 = vmatpush1.msra.mxu0 0.0
    %157 = vmatprep.subr.mxu0 0.0
    %158 = vmatpush1.msra.mxu0 0.0
    %159 = vmatprep.subr.mxu0 0.0
    %160 = vmatpush1.msra.mxu0 0.0
    %161 = vmatprep.subr.mxu0 0.0
    %162 = vmatpush1.msra.mxu0 0.0
    %163 = vmatprep.subr.mxu0 0.0
    %164 = vmatpush1.msra.mxu0 0.0
    %165 = vmatprep.subr.mxu0 0.0
    %166 = vmatpush1.msra.mxu0 0.0
    %167 = vmatprep.subr.mxu0 0.0
    %168 = vmatpush1.msra.mxu0 0.0
    %169 = vmatprep.subr.mxu0 0.0
    %170 = vmatpush1.msra.mxu0 0.0
    %171 = vmatprep.subr.mxu0 0.0
    %172 = vmatpush1.msra.mxu0 0.0
    %173 = vmatprep.subr.mxu0 0.0
    %174 = vmatpush1.msra.mxu0 0.0
    %175 = vmatprep.subr.mxu0 0.0
    %176 = vmatpush1.msra.mxu0 0.0
    %177 = vmatprep.subr.mxu0 0.0
    %178 = vmatpush1.msra.mxu0 %v145
    %179 = vmatprep.subr.mxu0 0.0
    %180 = vmatpush2.msra.mxu0 0.0
    %181 = vmatprep.subr.mxu0 0.0
    %182 = vmatpush2.msra.mxu0 0.0
    %183 = vmatprep.subr.mxu0 0.0
    %184 = vmatpush2.msra.mxu0 0.0
    %185 = vmatprep.subr.mxu0 0.0
    %186 = vmatpush2.msra.mxu0 0.0
    %187 = vmatprep.subr.mxu0 0.0
    %188 = vmatpush2.msra.mxu0 0.0
    %189 = vmatprep.subr.mxu0 0.0
    %190 = vmatpush2.msra.mxu0 0.0
    %191 = vmatprep.subr.mxu0 0.0
    %192 = vmatpush2.msra.mxu0 0.0
    %193 = vmatprep.subr.mxu0 0.0
    %194 = vmatpush2.msra.mxu0 0.0
    %195 = vmatprep.subr.mxu0 0.0
    %196 = vmatpush2.msra.mxu0 0.0
    %197 = vmatprep.subr.mxu0 0.0
    %198 = vmatpush2.msra.mxu0 0.0
    %199 = vmatprep.subr.mxu0 0.0
    %200 = vmatpush2.msra.mxu0 0.0
    %201 = vmatprep.subr.mxu0 0.0
    %202 = vmatpush2.msra.mxu0 0.0
    %203 = vmatprep.subr.mxu0 0.0
    %204 = vmatpush2.msra.mxu0 0.0
    %205 = vmatprep.subr.mxu0 0.0
    %206 = vmatpush2.msra.mxu0 0.0
    %207 = vmatprep.subr.mxu0 0.0
    %208 = vmatpush2.msra.mxu0 0.0
    %209 = vmatprep.subr.mxu0 0.0
    %210 = vmatpush2.msra.mxu0 0.0
    %211 = vmatprep.mubr.f32.mxu0 0.0
    %212 = vmatmul.mubr.f32.gmra.mxu0 %v96
    %v213 = vpop.f32.mrf.mxu0
    %v214 = vadd.f32 %v92, %v213
    %v215 = vpop.f32.mrf.mxu0
    %216 = vmatprep.mubr.f32.mxu0 0.0
    %217 = vmatmul.mubr.f32.gmra.mxu0 %v99
    %v218 = vpop.f32.mrf.mxu0
    %v219 = vadd.f32 %v92, %v218
    %v220 = vpop.f32.mrf.mxu0
    %221 = vmatprep.mubr.f32.mxu0 0.0
    %222 = vmatmul.mubr.f32.gmra.mxu0 %v102
    %v223 = vpop.f32.mrf.mxu0
    %v224 = vadd.f32 %v92, %v223
    %v225 = vpop.f32.mrf.mxu0
    %226 = vmatprep.mubr.f32.mxu0 0.0
    %227 = vmatmul.mubr.f32.gmra.mxu0 %v105
    %v228 = vpop.f32.mrf.mxu0
    %v229 = vadd.f32 %v92, %v228
    %v230 = vpop.f32.mrf.mxu0
    %231 = vmatprep.mubr.f32.mxu0 0.0
    %232 = vmatmul.mubr.f32.gmra.mxu0 %v108
    %v233 = vpop.f32.mrf.mxu0
    %v234 = vadd.f32 %v92, %v233
    %v235 = vpop.f32.mrf.mxu0
    %236 = vmatprep.mubr.f32.mxu0 0.0
    %237 = vmatmul.mubr.f32.gmra.mxu0 %v111
    %v238 = vpop.f32.mrf.mxu0
    %v239 = vadd.f32 %v92, %v238
    %v240 = vpop.f32.mrf.mxu0
    %241 = vmatprep.mubr.f32.mxu0 0.0
    %242 = vmatmul.mubr.f32.gmra.mxu0 %v114
    %v243 = vpop.f32.mrf.mxu0
    %v244 = vadd.f32 %v92, %v243
    %v245 = vpop.f32.mrf.mxu0
    %246 = vmatprep.mubr.f32.mxu0 0.0
    %247 = vmatmul.mubr.f32.gmra.mxu0 %v117
    %v248 = vpop.f32.mrf.mxu0
    %v249 = vadd.f32 %v92, %v248
    %v250 = vpop.f32.mrf.mxu0
    %251 = vmatprep.mubr.f32.mxu0 0.0
    %252 = vmatmul.mubr.f32.gmra.mxu0 %v120
    %v253 = vpop.f32.mrf.mxu0
    %v254 = vadd.f32 %v92, %v253
    %v255 = vpop.f32.mrf.mxu0
    %256 = vmatprep.mubr.f32.mxu0 0.0
    %257 = vmatmul.mubr.f32.gmra.mxu0 %v123
    %v258 = vpop.f32.mrf.mxu0
    %v259 = vadd.f32 %v92, %v258
    %v260 = vpop.f32.mrf.mxu0
    %261 = vmatprep.mubr.f32.mxu0 0.0
    %262 = vmatmul.mubr.f32.gmra.mxu0 %v126
    %v263 = vpop.f32.mrf.mxu0
    %v264 = vadd.f32 %v92, %v263
    %v265 = vpop.f32.mrf.mxu0
    %266 = vmatprep.mubr.f32.mxu0 0.0
    %267 = vmatmul.mubr.f32.gmra.mxu0 %v129
    %v268 = vpop.f32.mrf.mxu0
    %v269 = vadd.f32 %v92, %v268
    %v270 = vpop.f32.mrf.mxu0
    %271 = vmatprep.mubr.f32.mxu0 0.0
    %272 = vmatmul.mubr.f32.gmra.mxu0 %v132
    %v273 = vpop.f32.mrf.mxu0
    %v274 = vadd.f32 %v92, %v273
    %v275 = vpop.f32.mrf.mxu0
    %276 = vmatprep.mubr.f32.mxu0 0.0
    %277 = vmatmul.mubr.f32.gmra.mxu0 %v135
    %v278 = vpop.f32.mrf.mxu0
    %v279 = vadd.f32 %v92, %v278
    %v280 = vpop.f32.mrf.mxu0
    %281 = vmatprep.mubr.f32.mxu0 0.0
    %282 = vmatmul.mubr.f32.gmra.mxu0 %v138
    %v283 = vpop.f32.mrf.mxu0
    %v284 = vadd.f32 %v92, %v283
    %v285 = vpop.f32.mrf.mxu0
    %286 = vmatprep.mubr.f32.mxu0 0.0
    %287 = vmatmul.mubr.f32.gmra.mxu0 %v141
    %v288 = vpop.f32.mrf.mxu0
    %v289 = vadd.f32 %v92, %v288
    %v290 = vpop.f32.mrf.mxu0
    %291 = vdwg.mxu0
    %v292 = vmax.f32 %v214, 0.0
    %v293 = vmax.f32 %v219, 0.0
    %v294 = vmax.f32 %v224, 0.0
    %v295 = vmax.f32 %v229, 0.0
    %v296 = vmax.f32 %v234, 0.0
    %v297 = vmax.f32 %v239, 0.0
    %v298 = vmax.f32 %v244, 0.0
    %v299 = vmax.f32 %v249, 0.0
    %v300 = vmax.f32 %v254, 0.0
    %v301 = vmax.f32 %v259, 0.0
    %v302 = vmax.f32 %v264, 0.0
    %v303 = vmax.f32 %v269, 0.0
    %v304 = vmax.f32 %v274, 0.0
    %v305 = vmax.f32 %v279, 0.0
    %v306 = vmax.f32 %v284, 0.0
    %v307 = vmax.f32 %v289, 0.0
    %v308 = vld [vmem:[#allocation7] sm:$0xff]
    %v309 = vld [vmem:[#allocation7 + $0x8] sm:$0xff]
    %v310 = vld [vmem:[#allocation7 + $0x10] sm:$0xff]
    %v311 = vld [vmem:[#allocation7 + $0x18] sm:$0xff]
    %v312 = vld [vmem:[#allocation7 + $0x20] sm:$0xff]
    %v313 = vld [vmem:[#allocation7 + $0x28] sm:$0xff]
    %v314 = vld [vmem:[#allocation7 + $0x30] sm:$0xff]
    %v315 = vld [vmem:[#allocation7 + $0x38] sm:$0xff]
    %v316 = vld [vmem:[#allocation7 + $0x40] sm:$0xff]
    %v317 = vld [vmem:[#allocation7 + $0x48] sm:$0xff]
    %v318 = vld [vmem:[#allocation7 + $0x50] sm:$0xff]
    %v319 = vld [vmem:[#allocation7 + $0x58] sm:$0xff]
    %v320 = vld [vmem:[#allocation7 + $0x60] sm:$0xff]
    %v321 = vld [vmem:[#allocation7 + $0x68] sm:$0xff]
    %v322 = vld [vmem:[#allocation7 + $0x70] sm:$0xff]
    %v323 = vld [vmem:[#allocation7 + $0x78] sm:$0xff]
    %v324 = vld [vmem:[#allocation7 + $0x80] sm:$0xff]
    %v325 = vld [vmem:[#allocation7 + $0x88] sm:$0xff]
    %v326 = vld [vmem:[#allocation7 + $0x90] sm:$0xff]
    %v327 = vld [vmem:[#allocation7 + $0x98] sm:$0xff]
    %v328 = vld [vmem:[#allocation7 + $0xa0] sm:$0xff]
    %v329 = vld [vmem:[#allocation7 + $0xa8] sm:$0xff]
    %v330 = vld [vmem:[#allocation7 + $0xb0] sm:$0xff]
    %v331 = vld [vmem:[#allocation7 + $0xb8] sm:$0xff]
    %v332 = vld [vmem:[#allocation7 + $0xc0] sm:$0xff]
    %v333 = vld [vmem:[#allocation7 + $0xc8] sm:$0xff]
    %v334 = vld [vmem:[#allocation7 + $0xd0] sm:$0xff]
    %v335 = vld [vmem:[#allocation7 + $0xd8] sm:$0xff]
    %v336 = vld [vmem:[#allocation7 + $0xe0] sm:$0xff]
    %v337 = vld [vmem:[#allocation7 + $0xe8] sm:$0xff]
    %v338 = vld [vmem:[#allocation7 + $0xf0] sm:$0xff]
    %v339 = vld [vmem:[#allocation7 + $0xf8] sm:$0xff]
    %v340 = vld [vmem:[#allocation7 + $0x100] sm:$0xff]
    %v341 = vld [vmem:[#allocation7 + $0x108] sm:$0xff]
    %v342 = vld [vmem:[#allocation7 + $0x110] sm:$0xff]
    %v343 = vld [vmem:[#allocation7 + $0x118] sm:$0xff]
    %v344 = vld [vmem:[#allocation7 + $0x120] sm:$0xff]
    %v345 = vld [vmem:[#allocation7 + $0x128] sm:$0xff]
    %v346 = vld [vmem:[#allocation7 + $0x130] sm:$0xff]
    %v347 = vld [vmem:[#allocation7 + $0x138] sm:$0xff]
    %v348 = vld [vmem:[#allocation7 + $0x140] sm:$0xff]
    %v349 = vld [vmem:[#allocation7 + $0x148] sm:$0xff]
    %v350 = vld [vmem:[#allocation7 + $0x150] sm:$0xff]
    %v351 = vld [vmem:[#allocation7 + $0x158] sm:$0xff]
    %v352 = vld [vmem:[#allocation7 + $0x160] sm:$0xff]
    %v353 = vld [vmem:[#allocation7 + $0x168] sm:$0xff]
    %v354 = vld [vmem:[#allocation7 + $0x170] sm:$0xff]
    %v355 = vld [vmem:[#allocation7 + $0x178] sm:$0xff]
    %v356 = vld [vmem:[#allocation7 + $0x180] sm:$0xff]
    %v357 = vld [vmem:[#allocation7 + $0x188] sm:$0xff]
    %v358 = vld [vmem:[#allocation7 + $0x190] sm:$0xff]
    %v359 = vld [vmem:[#allocation7 + $0x198] sm:$0xff]
    %v360 = vld [vmem:[#allocation7 + $0x1a0] sm:$0xff]
    %v361 = vld [vmem:[#allocation7 + $0x1a8] sm:$0xff]
    %v362 = vld [vmem:[#allocation7 + $0x1b0] sm:$0xff]
    %v363 = vld [vmem:[#allocation7 + $0x1b8] sm:$0xff]
    %v364 = vld [vmem:[#allocation7 + $0x1c0] sm:$0xff]
    %v365 = vld [vmem:[#allocation7 + $0x1c8] sm:$0xff]
    %v366 = vld [vmem:[#allocation7 + $0x1d0] sm:$0xff]
    %v367 = vld [vmem:[#allocation7 + $0x1d8] sm:$0xff]
    %v368 = vld [vmem:[#allocation7 + $0x1e0] sm:$0xff]
    %v369 = vld [vmem:[#allocation7 + $0x1e8] sm:$0xff]
    %v370 = vld [vmem:[#allocation7 + $0x1f0] sm:$0xff]
    %v371 = vld [vmem:[#allocation7 + $0x1f8] sm:$0xff]
    %v372 = vld [vmem:[#allocation7 + $0x200] sm:$0xff]
    %v373 = vld [vmem:[#allocation7 + $0x208] sm:$0xff]
    %v374 = vld [vmem:[#allocation7 + $0x210] sm:$0xff]
    %v375 = vld [vmem:[#allocation7 + $0x218] sm:$0xff]
    %v376 = vld [vmem:[#allocation7 + $0x220] sm:$0xff]
    %v377 = vld [vmem:[#allocation7 + $0x228] sm:$0xff]
    %v378 = vld [vmem:[#allocation7 + $0x230] sm:$0xff]
    %v379 = vld [vmem:[#allocation7 + $0x238] sm:$0xff]
    %v380 = vld [vmem:[#allocation7 + $0x240] sm:$0xff]
    %v381 = vld [vmem:[#allocation7 + $0x248] sm:$0xff]
    %v382 = vld [vmem:[#allocation7 + $0x250] sm:$0xff]
    %v383 = vld [vmem:[#allocation7 + $0x258] sm:$0xff]
    %v384 = vld [vmem:[#allocation7 + $0x260] sm:$0xff]
    %v385 = vld [vmem:[#allocation7 + $0x268] sm:$0xff]
    %v386 = vld [vmem:[#allocation7 + $0x270] sm:$0xff]
    %v387 = vld [vmem:[#allocation7 + $0x278] sm:$0xff]
    %v388 = vld [vmem:[#allocation7 + $0x280] sm:$0xff]
    %v389 = vld [vmem:[#allocation7 + $0x288] sm:$0xff]
    %v390 = vld [vmem:[#allocation7 + $0x290] sm:$0xff]
    %v391 = vld [vmem:[#allocation7 + $0x298] sm:$0xff]
    %v392 = vld [vmem:[#allocation7 + $0x2a0] sm:$0xff]
    %v393 = vld [vmem:[#allocation7 + $0x2a8] sm:$0xff]
    %v394 = vld [vmem:[#allocation7 + $0x2b0] sm:$0xff]
    %v395 = vld [vmem:[#allocation7 + $0x2b8] sm:$0xff]
    %v396 = vld [vmem:[#allocation7 + $0x2c0] sm:$0xff]
    %v397 = vld [vmem:[#allocation7 + $0x2c8] sm:$0xff]
    %v398 = vld [vmem:[#allocation7 + $0x2d0] sm:$0xff]
    %v399 = vld [vmem:[#allocation7 + $0x2d8] sm:$0xff]
    %v400 = vld [vmem:[#allocation7 + $0x2e0] sm:$0xff]
    %v401 = vld [vmem:[#allocation7 + $0x2e8] sm:$0xff]
    %v402 = vld [vmem:[#allocation7 + $0x2f0] sm:$0xff]
    %v403 = vld [vmem:[#allocation7 + $0x2f8] sm:$0xff]
    %v404 = vld [vmem:[#allocation7 + $0x300] sm:$0xff]
    %v405 = vld [vmem:[#allocation7 + $0x308] sm:$0xff]
    %v406 = vld [vmem:[#allocation7 + $0x310] sm:$0xff]
    %v407 = vld [vmem:[#allocation7 + $0x318] sm:$0xff]
    %v408 = vld [vmem:[#allocation7 + $0x320] sm:$0xff]
    %v409 = vld [vmem:[#allocation7 + $0x328] sm:$0xff]
    %v410 = vld [vmem:[#allocation7 + $0x330] sm:$0xff]
    %v411 = vld [vmem:[#allocation7 + $0x338] sm:$0xff]
    %v412 = vld [vmem:[#allocation7 + $0x340] sm:$0xff]
    %v413 = vld [vmem:[#allocation7 + $0x348] sm:$0xff]
    %v414 = vld [vmem:[#allocation7 + $0x350] sm:$0xff]
    %v415 = vld [vmem:[#allocation7 + $0x358] sm:$0xff]
    %v416 = vld [vmem:[#allocation7 + $0x360] sm:$0xff]
    %v417 = vld [vmem:[#allocation7 + $0x368] sm:$0xff]
    %v418 = vld [vmem:[#allocation7 + $0x370] sm:$0xff]
    %v419 = vld [vmem:[#allocation7 + $0x378] sm:$0xff]
    %v420 = vld [vmem:[#allocation7 + $0x380] sm:$0xff]
    %v421 = vld [vmem:[#allocation7 + $0x388] sm:$0xff]
    %v422 = vld [vmem:[#allocation7 + $0x390] sm:$0xff]
    %v423 = vld [vmem:[#allocation7 + $0x398] sm:$0xff]
    %v424 = vld [vmem:[#allocation7 + $0x3a0] sm:$0xff]
    %v425 = vld [vmem:[#allocation7 + $0x3a8] sm:$0xff]
    %v426 = vld [vmem:[#allocation7 + $0x3b0] sm:$0xff]
    %v427 = vld [vmem:[#allocation7 + $0x3b8] sm:$0xff]
    %v428 = vld [vmem:[#allocation7 + $0x3c0] sm:$0xff]
    %v429 = vld [vmem:[#allocation7 + $0x3c8] sm:$0xff]
    %v430 = vld [vmem:[#allocation7 + $0x3d0] sm:$0xff]
    %v431 = vld [vmem:[#allocation7 + $0x3d8] sm:$0xff]
    %v432 = vld [vmem:[#allocation7 + $0x3e0] sm:$0xff]
    %v433 = vld [vmem:[#allocation7 + $0x3e8] sm:$0xff]
    %v434 = vld [vmem:[#allocation7 + $0x3f0] sm:$0xff]
    %v435 = vld [vmem:[#allocation7 + $0x3f8] sm:$0xff]
    %v436 = vld [vmem:[#allocation7 + $0x400] sm:$0xff]
    %v437 = vld [vmem:[#allocation7 + $0x408] sm:$0xff]
    %v438 = vld [vmem:[#allocation7 + $0x410] sm:$0xff]
    %v439 = vld [vmem:[#allocation7 + $0x418] sm:$0xff]
    %v440 = vld [vmem:[#allocation7 + $0x420] sm:$0xff]
    %v441 = vld [vmem:[#allocation7 + $0x428] sm:$0xff]
    %v442 = vld [vmem:[#allocation7 + $0x430] sm:$0xff]
    %v443 = vld [vmem:[#allocation7 + $0x438] sm:$0xff]
    %v444 = vld [vmem:[#allocation7 + $0x440] sm:$0xff]
    %v445 = vld [vmem:[#allocation7 + $0x448] sm:$0xff]
    %v446 = vld [vmem:[#allocation7 + $0x450] sm:$0xff]
    %v447 = vld [vmem:[#allocation7 + $0x458] sm:$0xff]
    %v448 = vld [vmem:[#allocation7 + $0x460] sm:$0xff]
    %v449 = vld [vmem:[#allocation7 + $0x468] sm:$0xff]
    %v450 = vld [vmem:[#allocation7 + $0x470] sm:$0xff]
    %v451 = vld [vmem:[#allocation7 + $0x478] sm:$0xff]
    %v452 = vld [vmem:[#allocation7 + $0x480] sm:$0xff]
    %v453 = vld [vmem:[#allocation7 + $0x488] sm:$0xff]
    %v454 = vld [vmem:[#allocation7 + $0x490] sm:$0xff]
    %v455 = vld [vmem:[#allocation7 + $0x498] sm:$0xff]
    %v456 = vld [vmem:[#allocation7 + $0x4a0] sm:$0xff]
    %v457 = vld [vmem:[#allocation7 + $0x4a8] sm:$0xff]
    %v458 = vld [vmem:[#allocation7 + $0x4b0] sm:$0xff]
    %v459 = vld [vmem:[#allocation7 + $0x4b8] sm:$0xff]
    %v460 = vld [vmem:[#allocation7 + $0x4c0] sm:$0xff]
    %v461 = vld [vmem:[#allocation7 + $0x4c8] sm:$0xff]
    %v462 = vld [vmem:[#allocation7 + $0x4d0] sm:$0xff]
    %v463 = vld [vmem:[#allocation7 + $0x4d8] sm:$0xff]
    %v464 = vld [vmem:[#allocation7 + $0x4e0] sm:$0xff]
    %v465 = vld [vmem:[#allocation7 + $0x4e8] sm:$0xff]
    %v466 = vld [vmem:[#allocation7 + $0x4f0] sm:$0xff]
    %v467 = vld [vmem:[#allocation7 + $0x4f8] sm:$0xff]
    %v468 = vld [vmem:[#allocation7 + $0x500] sm:$0xff]
    %v469 = vld [vmem:[#allocation7 + $0x508] sm:$0xff]
    %v470 = vld [vmem:[#allocation7 + $0x510] sm:$0xff]
    %v471 = vld [vmem:[#allocation7 + $0x518] sm:$0xff]
    %v472 = vld [vmem:[#allocation7 + $0x520] sm:$0xff]
    %v473 = vld [vmem:[#allocation7 + $0x528] sm:$0xff]
    %v474 = vld [vmem:[#allocation7 + $0x530] sm:$0xff]
    %v475 = vld [vmem:[#allocation7 + $0x538] sm:$0xff]
    %v476 = vld [vmem:[#allocation7 + $0x540] sm:$0xff]
    %v477 = vld [vmem:[#allocation7 + $0x548] sm:$0xff]
    %v478 = vld [vmem:[#allocation7 + $0x550] sm:$0xff]
    %v479 = vld [vmem:[#allocation7 + $0x558] sm:$0xff]
    %v480 = vld [vmem:[#allocation7 + $0x560] sm:$0xff]
    %v481 = vld [vmem:[#allocation7 + $0x568] sm:$0xff]
    %v482 = vld [vmem:[#allocation7 + $0x570] sm:$0xff]
    %v483 = vld [vmem:[#allocation7 + $0x578] sm:$0xff]
    %v484 = vld [vmem:[#allocation7 + $0x580] sm:$0xff]
    %v485 = vld [vmem:[#allocation7 + $0x588] sm:$0xff]
    %v486 = vld [vmem:[#allocation7 + $0x590] sm:$0xff]
    %v487 = vld [vmem:[#allocation7 + $0x598] sm:$0xff]
    %v488 = vld [vmem:[#allocation7 + $0x5a0] sm:$0xff]
    %v489 = vld [vmem:[#allocation7 + $0x5a8] sm:$0xff]
    %v490 = vld [vmem:[#allocation7 + $0x5b0] sm:$0xff]
    %v491 = vld [vmem:[#allocation7 + $0x5b8] sm:$0xff]
    %v492 = vld [vmem:[#allocation7 + $0x5c0] sm:$0xff]
    %v493 = vld [vmem:[#allocation7 + $0x5c8] sm:$0xff]
    %v494 = vld [vmem:[#allocation7 + $0x5d0] sm:$0xff]
    %v495 = vld [vmem:[#allocation7 + $0x5d8] sm:$0xff]
    %v496 = vld [vmem:[#allocation7 + $0x5e0] sm:$0xff]
    %v497 = vld [vmem:[#allocation7 + $0x5e8] sm:$0xff]
    %v498 = vld [vmem:[#allocation7 + $0x5f0] sm:$0xff]
    %v499 = vld [vmem:[#allocation7 + $0x5f8] sm:$0xff]
    %v500 = vld [vmem:[#allocation7 + $0x600] sm:$0xff]
    %v501 = vld [vmem:[#allocation7 + $0x608] sm:$0xff]
    %v502 = vld [vmem:[#allocation7 + $0x610] sm:$0xff]
    %v503 = vld [vmem:[#allocation7 + $0x618] sm:$0xff]
    %v504 = vld [vmem:[#allocation7 + $0x620] sm:$0xff]
    %v505 = vld [vmem:[#allocation7 + $0x628] sm:$0xff]
    %v506 = vld [vmem:[#allocation7 + $0x630] sm:$0xff]
    %v507 = vld [vmem:[#allocation7 + $0x638] sm:$0xff]
    %v508 = vld [vmem:[#allocation7 + $0x640] sm:$0xff]
    %v509 = vld [vmem:[#allocation7 + $0x648] sm:$0xff]
    %v510 = vld [vmem:[#allocation7 + $0x650] sm:$0xff]
    %v511 = vld [vmem:[#allocation7 + $0x658] sm:$0xff]
    %v512 = vld [vmem:[#allocation7 + $0x660] sm:$0xff]
    %v513 = vld [vmem:[#allocation7 + $0x668] sm:$0xff]
    %v514 = vld [vmem:[#allocation7 + $0x670] sm:$0xff]
    %v515 = vld [vmem:[#allocation7 + $0x678] sm:$0xff]
    %v516 = vld [vmem:[#allocation7 + $0x680] sm:$0xff]
    %v517 = vld [vmem:[#allocation7 + $0x688] sm:$0xff]
    %v518 = vld [vmem:[#allocation7 + $0x690] sm:$0xff]
    %v519 = vld [vmem:[#allocation7 + $0x698] sm:$0xff]
    %v520 = vld [vmem:[#allocation7 + $0x6a0] sm:$0xff]
    %v521 = vld [vmem:[#allocation7 + $0x6a8] sm:$0xff]
    %v522 = vld [vmem:[#allocation7 + $0x6b0] sm:$0xff]
    %v523 = vld [vmem:[#allocation7 + $0x6b8] sm:$0xff]
    %v524 = vld [vmem:[#allocation7 + $0x6c0] sm:$0xff]
    %v525 = vld [vmem:[#allocation7 + $0x6c8] sm:$0xff]
    %v526 = vld [vmem:[#allocation7 + $0x6d0] sm:$0xff]
    %v527 = vld [vmem:[#allocation7 + $0x6d8] sm:$0xff]
    %v528 = vld [vmem:[#allocation7 + $0x6e0] sm:$0xff]
    %v529 = vld [vmem:[#allocation7 + $0x6e8] sm:$0xff]
    %v530 = vld [vmem:[#allocation7 + $0x6f0] sm:$0xff]
    %v531 = vld [vmem:[#allocation7 + $0x6f8] sm:$0xff]
    %v532 = vld [vmem:[#allocation7 + $0x700] sm:$0xff]
    %v533 = vld [vmem:[#allocation7 + $0x708] sm:$0xff]
    %v534 = vld [vmem:[#allocation7 + $0x710] sm:$0xff]
    %v535 = vld [vmem:[#allocation7 + $0x718] sm:$0xff]
    %v536 = vld [vmem:[#allocation7 + $0x720] sm:$0xff]
    %v537 = vld [vmem:[#allocation7 + $0x728] sm:$0xff]
    %v538 = vld [vmem:[#allocation7 + $0x730] sm:$0xff]
    %v539 = vld [vmem:[#allocation7 + $0x738] sm:$0xff]
    %v540 = vld [vmem:[#allocation7 + $0x740] sm:$0xff]
    %v541 = vld [vmem:[#allocation7 + $0x748] sm:$0xff]
    %v542 = vld [vmem:[#allocation7 + $0x750] sm:$0xff]
    %v543 = vld [vmem:[#allocation7 + $0x758] sm:$0xff]
    %v544 = vld [vmem:[#allocation7 + $0x760] sm:$0xff]
    %v545 = vld [vmem:[#allocation7 + $0x768] sm:$0xff]
    %v546 = vld [vmem:[#allocation7 + $0x770] sm:$0xff]
    %v547 = vld [vmem:[#allocation7 + $0x778] sm:$0xff]
    %v548 = vld [vmem:[#allocation7 + $0x780] sm:$0xff]
    %v549 = vld [vmem:[#allocation7 + $0x788] sm:$0xff]
    %v550 = vld [vmem:[#allocation7 + $0x790] sm:$0xff]
    %v551 = vld [vmem:[#allocation7 + $0x798] sm:$0xff]
    %v552 = vld [vmem:[#allocation7 + $0x7a0] sm:$0xff]
    %v553 = vld [vmem:[#allocation7 + $0x7a8] sm:$0xff]
    %v554 = vld [vmem:[#allocation7 + $0x7b0] sm:$0xff]
    %v555 = vld [vmem:[#allocation7 + $0x7b8] sm:$0xff]
    %v556 = vld [vmem:[#allocation7 + $0x7c0] sm:$0xff]
    %v557 = vld [vmem:[#allocation7 + $0x7c8] sm:$0xff]
    %v558 = vld [vmem:[#allocation7 + $0x7d0] sm:$0xff]
    %v559 = vld [vmem:[#allocation7 + $0x7d8] sm:$0xff]
    %v560 = vld [vmem:[#allocation7 + $0x7e0] sm:$0xff]
    %v561 = vld [vmem:[#allocation7 + $0x7e8] sm:$0xff]
    %v562 = vld [vmem:[#allocation7 + $0x7f0] sm:$0xff]
    %v563 = vld [vmem:[#allocation7 + $0x7f8] sm:$0xff]
    %v564 = vld [vmem:[#allocation7 + $0x800] sm:$0xff]
    %v565 = vld [vmem:[#allocation7 + $0x808] sm:$0xff]
    %v566 = vld [vmem:[#allocation7 + $0x810] sm:$0xff]
    %v567 = vld [vmem:[#allocation7 + $0x818] sm:$0xff]
    %v568 = vld [vmem:[#allocation7 + $0x820] sm:$0xff]
    %v569 = vld [vmem:[#allocation7 + $0x828] sm:$0xff]
    %v570 = vld [vmem:[#allocation7 + $0x830] sm:$0xff]
    %v571 = vld [vmem:[#allocation7 + $0x838] sm:$0xff]
    %v572 = vld [vmem:[#allocation7 + $0x840] sm:$0xff]
    %v573 = vld [vmem:[#allocation7 + $0x848] sm:$0xff]
    %v574 = vld [vmem:[#allocation7 + $0x850] sm:$0xff]
    %v575 = vld [vmem:[#allocation7 + $0x858] sm:$0xff]
    %v576 = vld [vmem:[#allocation7 + $0x860] sm:$0xff]
    %v577 = vld [vmem:[#allocation7 + $0x868] sm:$0xff]
    %v578 = vld [vmem:[#allocation7 + $0x870] sm:$0xff]
    %v579 = vld [vmem:[#allocation7 + $0x878] sm:$0xff]
    %v580 = vld [vmem:[#allocation7 + $0x880] sm:$0xff]
    %v581 = vld [vmem:[#allocation7 + $0x888] sm:$0xff]
    %v582 = vld [vmem:[#allocation7 + $0x890] sm:$0xff]
    %v583 = vld [vmem:[#allocation7 + $0x898] sm:$0xff]
    %v584 = vld [vmem:[#allocation7 + $0x8a0] sm:$0xff]
    %v585 = vld [vmem:[#allocation7 + $0x8a8] sm:$0xff]
    %v586 = vld [vmem:[#allocation7 + $0x8b0] sm:$0xff]
    %v587 = vld [vmem:[#allocation7 + $0x8b8] sm:$0xff]
    %v588 = vld [vmem:[#allocation7 + $0x8c0] sm:$0xff]
    %v589 = vld [vmem:[#allocation7 + $0x8c8] sm:$0xff]
    %v590 = vld [vmem:[#allocation7 + $0x8d0] sm:$0xff]
    %v591 = vld [vmem:[#allocation7 + $0x8d8] sm:$0xff]
    %v592 = vld [vmem:[#allocation7 + $0x8e0] sm:$0xff]
    %v593 = vld [vmem:[#allocation7 + $0x8e8] sm:$0xff]
    %v594 = vld [vmem:[#allocation7 + $0x8f0] sm:$0xff]
    %v595 = vld [vmem:[#allocation7 + $0x8f8] sm:$0xff]
    %v596 = vld [vmem:[#allocation7 + $0x900] sm:$0xff]
    %v597 = vld [vmem:[#allocation7 + $0x908] sm:$0xff]
    %v598 = vld [vmem:[#allocation7 + $0x910] sm:$0xff]
    %v599 = vld [vmem:[#allocation7 + $0x918] sm:$0xff]
    %v600 = vld [vmem:[#allocation7 + $0x920] sm:$0xff]
    %v601 = vld [vmem:[#allocation7 + $0x928] sm:$0xff]
    %v602 = vld [vmem:[#allocation7 + $0x930] sm:$0xff]
    %v603 = vld [vmem:[#allocation7 + $0x938] sm:$0xff]
    %v604 = vld [vmem:[#allocation7 + $0x940] sm:$0xff]
    %v605 = vld [vmem:[#allocation7 + $0x948] sm:$0xff]
    %v606 = vld [vmem:[#allocation7 + $0x950] sm:$0xff]
    %v607 = vld [vmem:[#allocation7 + $0x958] sm:$0xff]
    %v608 = vld [vmem:[#allocation7 + $0x960] sm:$0xff]
    %v609 = vld [vmem:[#allocation7 + $0x968] sm:$0xff]
    %v610 = vld [vmem:[#allocation7 + $0x970] sm:$0xff]
    %v611 = vld [vmem:[#allocation7 + $0x978] sm:$0xff]
    %v612 = vld [vmem:[#allocation7 + $0x980] sm:$0xff]
    %v613 = vld [vmem:[#allocation7 + $0x988] sm:$0xff]
    %v614 = vld [vmem:[#allocation7 + $0x990] sm:$0xff]
    %v615 = vld [vmem:[#allocation7 + $0x998] sm:$0xff]
    %v616 = vld [vmem:[#allocation7 + $0x9a0] sm:$0xff]
    %v617 = vld [vmem:[#allocation7 + $0x9a8] sm:$0xff]
    %v618 = vld [vmem:[#allocation7 + $0x9b0] sm:$0xff]
    %v619 = vld [vmem:[#allocation7 + $0x9b8] sm:$0xff]
    %v620 = vld [vmem:[#allocation7 + $0x9c0] sm:$0xff]
    %v621 = vld [vmem:[#allocation7 + $0x9c8] sm:$0xff]
    %v622 = vld [vmem:[#allocation7 + $0x9d0] sm:$0xff]
    %v623 = vld [vmem:[#allocation7 + $0x9d8] sm:$0xff]
    %v624 = vld [vmem:[#allocation7 + $0x9e0] sm:$0xff]
    %v625 = vld [vmem:[#allocation7 + $0x9e8] sm:$0xff]
    %v626 = vld [vmem:[#allocation7 + $0x9f0] sm:$0xff]
    %v627 = vld [vmem:[#allocation7 + $0x9f8] sm:$0xff]
    %v628 = vld [vmem:[#allocation7 + $0xa00] sm:$0xff]
    %v629 = vld [vmem:[#allocation7 + $0xa08] sm:$0xff]
    %v630 = vld [vmem:[#allocation7 + $0xa10] sm:$0xff]
    %v631 = vld [vmem:[#allocation7 + $0xa18] sm:$0xff]
    %v632 = vld [vmem:[#allocation7 + $0xa20] sm:$0xff]
    %v633 = vld [vmem:[#allocation7 + $0xa28] sm:$0xff]
    %v634 = vld [vmem:[#allocation7 + $0xa30] sm:$0xff]
    %v635 = vld [vmem:[#allocation7 + $0xa38] sm:$0xff]
    %v636 = vld [vmem:[#allocation7 + $0xa40] sm:$0xff]
    %v637 = vld [vmem:[#allocation7 + $0xa48] sm:$0xff]
    %v638 = vld [vmem:[#allocation7 + $0xa50] sm:$0xff]
    %v639 = vld [vmem:[#allocation7 + $0xa58] sm:$0xff]
    %v640 = vld [vmem:[#allocation7 + $0xa60] sm:$0xff]
    %v641 = vld [vmem:[#allocation7 + $0xa68] sm:$0xff]
    %v642 = vld [vmem:[#allocation7 + $0xa70] sm:$0xff]
    %v643 = vld [vmem:[#allocation7 + $0xa78] sm:$0xff]
    %v644 = vld [vmem:[#allocation7 + $0xa80] sm:$0xff]
    %v645 = vld [vmem:[#allocation7 + $0xa88] sm:$0xff]
    %v646 = vld [vmem:[#allocation7 + $0xa90] sm:$0xff]
    %v647 = vld [vmem:[#allocation7 + $0xa98] sm:$0xff]
    %v648 = vld [vmem:[#allocation7 + $0xaa0] sm:$0xff]
    %v649 = vld [vmem:[#allocation7 + $0xaa8] sm:$0xff]
    %v650 = vld [vmem:[#allocation7 + $0xab0] sm:$0xff]
    %v651 = vld [vmem:[#allocation7 + $0xab8] sm:$0xff]
    %v652 = vld [vmem:[#allocation7 + $0xac0] sm:$0xff]
    %v653 = vld [vmem:[#allocation7 + $0xac8] sm:$0xff]
    %v654 = vld [vmem:[#allocation7 + $0xad0] sm:$0xff]
    %v655 = vld [vmem:[#allocation7 + $0xad8] sm:$0xff]
    %v656 = vld [vmem:[#allocation7 + $0xae0] sm:$0xff]
    %v657 = vld [vmem:[#allocation7 + $0xae8] sm:$0xff]
    %v658 = vld [vmem:[#allocation7 + $0xaf0] sm:$0xff]
    %v659 = vld [vmem:[#allocation7 + $0xaf8] sm:$0xff]
    %v660 = vld [vmem:[#allocation7 + $0xb00] sm:$0xff]
    %v661 = vld [vmem:[#allocation7 + $0xb08] sm:$0xff]
    %v662 = vld [vmem:[#allocation7 + $0xb10] sm:$0xff]
    %v663 = vld [vmem:[#allocation7 + $0xb18] sm:$0xff]
    %v664 = vld [vmem:[#allocation7 + $0xb20] sm:$0xff]
    %v665 = vld [vmem:[#allocation7 + $0xb28] sm:$0xff]
    %v666 = vld [vmem:[#allocation7 + $0xb30] sm:$0xff]
    %v667 = vld [vmem:[#allocation7 + $0xb38] sm:$0xff]
    %v668 = vld [vmem:[#allocation7 + $0xb40] sm:$0xff]
    %v669 = vld [vmem:[#allocation7 + $0xb48] sm:$0xff]
    %v670 = vld [vmem:[#allocation7 + $0xb50] sm:$0xff]
    %v671 = vld [vmem:[#allocation7 + $0xb58] sm:$0xff]
    %v672 = vld [vmem:[#allocation7 + $0xb60] sm:$0xff]
    %v673 = vld [vmem:[#allocation7 + $0xb68] sm:$0xff]
    %v674 = vld [vmem:[#allocation7 + $0xb70] sm:$0xff]
    %v675 = vld [vmem:[#allocation7 + $0xb78] sm:$0xff]
    %v676 = vld [vmem:[#allocation7 + $0xb80] sm:$0xff]
    %v677 = vld [vmem:[#allocation7 + $0xb88] sm:$0xff]
    %v678 = vld [vmem:[#allocation7 + $0xb90] sm:$0xff]
    %v679 = vld [vmem:[#allocation7 + $0xb98] sm:$0xff]
    %v680 = vld [vmem:[#allocation7 + $0xba0] sm:$0xff]
    %v681 = vld [vmem:[#allocation7 + $0xba8] sm:$0xff]
    %v682 = vld [vmem:[#allocation7 + $0xbb0] sm:$0xff]
    %v683 = vld [vmem:[#allocation7 + $0xbb8] sm:$0xff]
    %v684 = vld [vmem:[#allocation7 + $0xbc0] sm:$0xff]
    %v685 = vld [vmem:[#allocation7 + $0xbc8] sm:$0xff]
    %v686 = vld [vmem:[#allocation7 + $0xbd0] sm:$0xff]
    %v687 = vld [vmem:[#allocation7 + $0xbd8] sm:$0xff]
    %v688 = vld [vmem:[#allocation7 + $0xbe0] sm:$0xff]
    %v689 = vld [vmem:[#allocation7 + $0xbe8] sm:$0xff]
    %v690 = vld [vmem:[#allocation7 + $0xbf0] sm:$0xff]
    %v691 = vld [vmem:[#allocation7 + $0xbf8] sm:$0xff]
    %v692 = vld [vmem:[#allocation7 + $0xc00] sm:$0xff]
    %v693 = vld [vmem:[#allocation7 + $0xc08] sm:$0xff]
    %v694 = vld [vmem:[#allocation7 + $0xc10] sm:$0xff]
    %v695 = vld [vmem:[#allocation7 + $0xc18] sm:$0xff]
    %v696 = vld [vmem:[#allocation7 + $0xc20] sm:$0xff]
    %v697 = vld [vmem:[#allocation7 + $0xc28] sm:$0xff]
    %v698 = vld [vmem:[#allocation7 + $0xc30] sm:$0xff]
    %v699 = vld [vmem:[#allocation7 + $0xc38] sm:$0xff]
    %v700 = vld [vmem:[#allocation7 + $0xc40] sm:$0xff]
    %v701 = vld [vmem:[#allocation7 + $0xc48] sm:$0xff]
    %v702 = vld [vmem:[#allocation7 + $0xc50] sm:$0xff]
    %v703 = vld [vmem:[#allocation7 + $0xc58] sm:$0xff]
    %v704 = vld [vmem:[#allocation7 + $0xc60] sm:$0xff]
    %v705 = vld [vmem:[#allocation7 + $0xc68] sm:$0xff]
    %v706 = vld [vmem:[#allocation7 + $0xc70] sm:$0xff]
    %v707 = vld [vmem:[#allocation7 + $0xc78] sm:$0xff]
    %v708 = vld [vmem:[#allocation7 + $0xc80] sm:$0xff]
    %v709 = vld [vmem:[#allocation7 + $0xc88] sm:$0xff]
    %v710 = vld [vmem:[#allocation7 + $0xc90] sm:$0xff]
    %v711 = vld [vmem:[#allocation7 + $0xc98] sm:$0xff]
    %v712 = vld [vmem:[#allocation7 + $0xca0] sm:$0xff]
    %v713 = vld [vmem:[#allocation7 + $0xca8] sm:$0xff]
    %v714 = vld [vmem:[#allocation7 + $0xcb0] sm:$0xff]
    %v715 = vld [vmem:[#allocation7 + $0xcb8] sm:$0xff]
    %v716 = vld [vmem:[#allocation7 + $0xcc0] sm:$0xff]
    %v717 = vld [vmem:[#allocation7 + $0xcc8] sm:$0xff]
    %v718 = vld [vmem:[#allocation7 + $0xcd0] sm:$0xff]
    %v719 = vld [vmem:[#allocation7 + $0xcd8] sm:$0xff]
    %v720 = vld [vmem:[#allocation7 + $0xce0] sm:$0xff]
    %v721 = vld [vmem:[#allocation7 + $0xce8] sm:$0xff]
    %v722 = vld [vmem:[#allocation7 + $0xcf0] sm:$0xff]
    %v723 = vld [vmem:[#allocation7 + $0xcf8] sm:$0xff]
    %v724 = vld [vmem:[#allocation7 + $0xd00] sm:$0xff]
    %v725 = vld [vmem:[#allocation7 + $0xd08] sm:$0xff]
    %v726 = vld [vmem:[#allocation7 + $0xd10] sm:$0xff]
    %v727 = vld [vmem:[#allocation7 + $0xd18] sm:$0xff]
    %v728 = vld [vmem:[#allocation7 + $0xd20] sm:$0xff]
    %v729 = vld [vmem:[#allocation7 + $0xd28] sm:$0xff]
    %v730 = vld [vmem:[#allocation7 + $0xd30] sm:$0xff]
    %v731 = vld [vmem:[#allocation7 + $0xd38] sm:$0xff]
    %v732 = vld [vmem:[#allocation7 + $0xd40] sm:$0xff]
    %v733 = vld [vmem:[#allocation7 + $0xd48] sm:$0xff]
    %v734 = vld [vmem:[#allocation7 + $0xd50] sm:$0xff]
    %v735 = vld [vmem:[#allocation7 + $0xd58] sm:$0xff]
    %v736 = vld [vmem:[#allocation7 + $0xd60] sm:$0xff]
    %v737 = vld [vmem:[#allocation7 + $0xd68] sm:$0xff]
    %v738 = vld [vmem:[#allocation7 + $0xd70] sm:$0xff]
    %v739 = vld [vmem:[#allocation7 + $0xd78] sm:$0xff]
    %v740 = vld [vmem:[#allocation7 + $0xd80] sm:$0xff]
    %v741 = vld [vmem:[#allocation7 + $0xd88] sm:$0xff]
    %v742 = vld [vmem:[#allocation7 + $0xd90] sm:$0xff]
    %v743 = vld [vmem:[#allocation7 + $0xd98] sm:$0xff]
    %v744 = vld [vmem:[#allocation7 + $0xda0] sm:$0xff]
    %v745 = vld [vmem:[#allocation7 + $0xda8] sm:$0xff]
    %v746 = vld [vmem:[#allocation7 + $0xdb0] sm:$0xff]
    %v747 = vld [vmem:[#allocation7 + $0xdb8] sm:$0xff]
    %v748 = vld [vmem:[#allocation7 + $0xdc0] sm:$0xff]
    %v749 = vld [vmem:[#allocation7 + $0xdc8] sm:$0xff]
    %v750 = vld [vmem:[#allocation7 + $0xdd0] sm:$0xff]
    %v751 = vld [vmem:[#allocation7 + $0xdd8] sm:$0xff]
    %v752 = vld [vmem:[#allocation7 + $0xde0] sm:$0xff]
    %v753 = vld [vmem:[#allocation7 + $0xde8] sm:$0xff]
    %v754 = vld [vmem:[#allocation7 + $0xdf0] sm:$0xff]
    %v755 = vld [vmem:[#allocation7 + $0xdf8] sm:$0xff]
    %v756 = vld [vmem:[#allocation7 + $0xe00] sm:$0xff]
    %v757 = vld [vmem:[#allocation7 + $0xe08] sm:$0xff]
    %v758 = vld [vmem:[#allocation7 + $0xe10] sm:$0xff]
    %v759 = vld [vmem:[#allocation7 + $0xe18] sm:$0xff]
    %v760 = vld [vmem:[#allocation7 + $0xe20] sm:$0xff]
    %v761 = vld [vmem:[#allocation7 + $0xe28] sm:$0xff]
    %v762 = vld [vmem:[#allocation7 + $0xe30] sm:$0xff]
    %v763 = vld [vmem:[#allocation7 + $0xe38] sm:$0xff]
    %v764 = vld [vmem:[#allocation7 + $0xe40] sm:$0xff]
    %v765 = vld [vmem:[#allocation7 + $0xe48] sm:$0xff]
    %v766 = vld [vmem:[#allocation7 + $0xe50] sm:$0xff]
    %v767 = vld [vmem:[#allocation7 + $0xe58] sm:$0xff]
    %v768 = vld [vmem:[#allocation7 + $0xe60] sm:$0xff]
    %v769 = vld [vmem:[#allocation7 + $0xe68] sm:$0xff]
    %v770 = vld [vmem:[#allocation7 + $0xe70] sm:$0xff]
    %v771 = vld [vmem:[#allocation7 + $0xe78] sm:$0xff]
    %v772 = vld [vmem:[#allocation7 + $0xe80] sm:$0xff]
    %v773 = vld [vmem:[#allocation7 + $0xe88] sm:$0xff]
    %v774 = vld [vmem:[#allocation7 + $0xe90] sm:$0xff]
    %v775 = vld [vmem:[#allocation7 + $0xe98] sm:$0xff]
    %v776 = vld [vmem:[#allocation7 + $0xea0] sm:$0xff]
    %v777 = vld [vmem:[#allocation7 + $0xea8] sm:$0xff]
    %v778 = vld [vmem:[#allocation7 + $0xeb0] sm:$0xff]
    %v779 = vld [vmem:[#allocation7 + $0xeb8] sm:$0xff]
    %v780 = vld [vmem:[#allocation7 + $0xec0] sm:$0xff]
    %v781 = vld [vmem:[#allocation7 + $0xec8] sm:$0xff]
    %v782 = vld [vmem:[#allocation7 + $0xed0] sm:$0xff]
    %v783 = vld [vmem:[#allocation7 + $0xed8] sm:$0xff]
    %v784 = vld [vmem:[#allocation7 + $0xee0] sm:$0xff]
    %v785 = vld [vmem:[#allocation7 + $0xee8] sm:$0xff]
    %v786 = vld [vmem:[#allocation7 + $0xef0] sm:$0xff]
    %v787 = vld [vmem:[#allocation7 + $0xef8] sm:$0xff]
    %v788 = vld [vmem:[#allocation7 + $0xf00] sm:$0xff]
    %v789 = vld [vmem:[#allocation7 + $0xf08] sm:$0xff]
    %v790 = vld [vmem:[#allocation7 + $0xf10] sm:$0xff]
    %v791 = vld [vmem:[#allocation7 + $0xf18] sm:$0xff]
    %v792 = vld [vmem:[#allocation7 + $0xf20] sm:$0xff]
    %v793 = vld [vmem:[#allocation7 + $0xf28] sm:$0xff]
    %v794 = vld [vmem:[#allocation7 + $0xf30] sm:$0xff]
    %v795 = vld [vmem:[#allocation7 + $0xf38] sm:$0xff]
    %v796 = vld [vmem:[#allocation7 + $0xf40] sm:$0xff]
    %v797 = vld [vmem:[#allocation7 + $0xf48] sm:$0xff]
    %v798 = vld [vmem:[#allocation7 + $0xf50] sm:$0xff]
    %v799 = vld [vmem:[#allocation7 + $0xf58] sm:$0xff]
    %v800 = vld [vmem:[#allocation7 + $0xf60] sm:$0xff]
    %v801 = vld [vmem:[#allocation7 + $0xf68] sm:$0xff]
    %v802 = vld [vmem:[#allocation7 + $0xf70] sm:$0xff]
    %v803 = vld [vmem:[#allocation7 + $0xf78] sm:$0xff]
    %v804 = vld [vmem:[#allocation7 + $0xf80] sm:$0xff]
    %v805 = vld [vmem:[#allocation7 + $0xf88] sm:$0xff]
    %v806 = vld [vmem:[#allocation7 + $0xf90] sm:$0xff]
    %v807 = vld [vmem:[#allocation7 + $0xf98] sm:$0xff]
    %v808 = vld [vmem:[#allocation7 + $0xfa0] sm:$0xff]
    %v809 = vld [vmem:[#allocation7 + $0xfa8] sm:$0xff]
    %v810 = vld [vmem:[#allocation7 + $0xfb0] sm:$0xff]
    %v811 = vld [vmem:[#allocation7 + $0xfb8] sm:$0xff]
    %v812 = vld [vmem:[#allocation7 + $0xfc0] sm:$0xff]
    %v813 = vld [vmem:[#allocation7 + $0xfc8] sm:$0xff]
    %v814 = vld [vmem:[#allocation7 + $0xfd0] sm:$0xff]
    %v815 = vld [vmem:[#allocation7 + $0xfd8] sm:$0xff]
    %v816 = vld [vmem:[#allocation7 + $0xfe0] sm:$0xff]
    %v817 = vld [vmem:[#allocation7 + $0xfe8] sm:$0xff]
    %v818 = vld [vmem:[#allocation7 + $0xff0] sm:$0xff]
    %v819 = vld [vmem:[#allocation7 + $0xff8] sm:$0xff]
    %v820 = vld [vmem:[#allocation8] sm:$0xff]
    %v821 = vld [vmem:[#allocation8 + $0x8] sm:$0xff]
    %v822 = vld [vmem:[#allocation8 + $0x10] sm:$0xff]
    %v823 = vld [vmem:[#allocation8 + $0x18] sm:$0xff]
    %v828 = vlaneseq
    %v829 = vshrl.u32 %v828, 7
    %v830 = vsub.s32 0, %v829
    %v831 = vrot.slane %v820, %v830
    %v832 = vlaneseq
    %v833 = vshrl.u32 %v832, 7
    %v834 = vsub.s32 1, %v833
    %v835 = vrot.slane %v820, %v834
    %v836 = vlaneseq
    %v837 = vshrl.u32 %v836, 7
    %v838 = vsub.s32 2, %v837
    %v839 = vrot.slane %v820, %v838
    %v840 = vlaneseq
    %v841 = vshrl.u32 %v840, 7
    %v842 = vsub.s32 3, %v841
    %v843 = vrot.slane %v820, %v842
    %v844 = vlaneseq
    %v845 = vshrl.u32 %v844, 7
    %v846 = vsub.s32 4, %v845
    %v847 = vrot.slane %v820, %v846
    %v848 = vlaneseq
    %v849 = vshrl.u32 %v848, 7
    %v850 = vsub.s32 5, %v849
    %v851 = vrot.slane %v820, %v850
    %v852 = vlaneseq
    %v853 = vshrl.u32 %v852, 7
    %v854 = vsub.s32 6, %v853
    %v855 = vrot.slane %v820, %v854
    %v856 = vlaneseq
    %v857 = vshrl.u32 %v856, 7
    %v858 = vsub.s32 7, %v857
    %v859 = vrot.slane %v820, %v858
    %v860 = vlaneseq
    %v861 = vshrl.u32 %v860, 7
    %v862 = vsub.s32 0, %v861
    %v863 = vrot.slane %v821, %v862
    %v864 = vlaneseq
    %v865 = vshrl.u32 %v864, 7
    %v866 = vsub.s32 1, %v865
    %v867 = vrot.slane %v821, %v866
    %v868 = vlaneseq
    %v869 = vshrl.u32 %v868, 7
    %v870 = vsub.s32 2, %v869
    %v871 = vrot.slane %v821, %v870
    %v872 = vlaneseq
    %v873 = vshrl.u32 %v872, 7
    %v874 = vsub.s32 3, %v873
    %v875 = vrot.slane %v821, %v874
    %v876 = vlaneseq
    %v877 = vshrl.u32 %v876, 7
    %v878 = vsub.s32 4, %v877
    %v879 = vrot.slane %v821, %v878
    %v880 = vlaneseq
    %v881 = vshrl.u32 %v880, 7
    %v882 = vsub.s32 5, %v881
    %v883 = vrot.slane %v821, %v882
    %v884 = vlaneseq
    %v885 = vshrl.u32 %v884, 7
    %v886 = vsub.s32 6, %v885
    %v887 = vrot.slane %v821, %v886
    %v888 = vlaneseq
    %v889 = vshrl.u32 %v888, 7
    %v890 = vsub.s32 7, %v889
    %v891 = vrot.slane %v821, %v890
    %v892 = vlaneseq
    %v893 = vshrl.u32 %v892, 7
    %v894 = vsub.s32 0, %v893
    %v895 = vrot.slane %v822, %v894
    %v896 = vlaneseq
    %v897 = vshrl.u32 %v896, 7
    %v898 = vsub.s32 1, %v897
    %v899 = vrot.slane %v822, %v898
    %v900 = vlaneseq
    %v901 = vshrl.u32 %v900, 7
    %v902 = vsub.s32 2, %v901
    %v903 = vrot.slane %v822, %v902
    %v904 = vlaneseq
    %v905 = vshrl.u32 %v904, 7
    %v906 = vsub.s32 3, %v905
    %v907 = vrot.slane %v822, %v906
    %v908 = vlaneseq
    %v909 = vshrl.u32 %v908, 7
    %v910 = vsub.s32 4, %v909
    %v911 = vrot.slane %v822, %v910
    %v912 = vlaneseq
    %v913 = vshrl.u32 %v912, 7
    %v914 = vsub.s32 5, %v913
    %v915 = vrot.slane %v822, %v914
    %v916 = vlaneseq
    %v917 = vshrl.u32 %v916, 7
    %v918 = vsub.s32 6, %v917
    %v919 = vrot.slane %v822, %v918
    %v920 = vlaneseq
    %v921 = vshrl.u32 %v920, 7
    %v922 = vsub.s32 7, %v921
    %v923 = vrot.slane %v822, %v922
    %v924 = vlaneseq
    %v925 = vshrl.u32 %v924, 7
    %v926 = vsub.s32 0, %v925
    %v927 = vrot.slane %v823, %v926
    %v928 = vlaneseq
    %v929 = vshrl.u32 %v928, 7
    %v930 = vsub.s32 1, %v929
    %v931 = vrot.slane %v823, %v930
    %v932 = vlaneseq
    %v933 = vshrl.u32 %v932, 7
    %v934 = vsub.s32 2, %v933
    %v935 = vrot.slane %v823, %v934
    %v936 = vlaneseq
    %v937 = vshrl.u32 %v936, 7
    %v938 = vsub.s32 3, %v937
    %v939 = vrot.slane %v823, %v938
    %v940 = vlaneseq
    %v941 = vshrl.u32 %v940, 7
    %v942 = vsub.s32 4, %v941
    %v943 = vrot.slane %v823, %v942
    %v944 = vlaneseq
    %v945 = vshrl.u32 %v944, 7
    %v946 = vsub.s32 5, %v945
    %v947 = vrot.slane %v823, %v946
    %v948 = vlaneseq
    %v949 = vshrl.u32 %v948, 7
    %v950 = vsub.s32 6, %v949
    %v951 = vrot.slane %v823, %v950
    %v952 = vlaneseq
    %v953 = vshrl.u32 %v952, 7
    %v954 = vsub.s32 7, %v953
    %v955 = vrot.slane %v823, %v954
    %988 = vmatprep.subr.mxu0 %v789
    %989 = vmatpush1.msra.mxu0 %v788
    %990 = vmatprep.subr.mxu0 %v757
    %991 = vmatpush1.msra.mxu0 %v756
    %992 = vmatprep.subr.mxu0 %v725
    %993 = vmatpush1.msra.mxu0 %v724
    %994 = vmatprep.subr.mxu0 %v693
    %995 = vmatpush1.msra.mxu0 %v692
    %996 = vmatprep.subr.mxu0 %v661
    %997 = vmatpush1.msra.mxu0 %v660
    %998 = vmatprep.subr.mxu0 %v629
    %999 = vmatpush1.msra.mxu0 %v628
    %1000 = vmatprep.subr.mxu0 %v597
    %1001 = vmatpush1.msra.mxu0 %v596
    %1002 = vmatprep.subr.mxu0 %v565
    %1003 = vmatpush1.msra.mxu0 %v564
    %1004 = vmatprep.subr.mxu0 %v533
    %1005 = vmatpush1.msra.mxu0 %v532
    %1006 = vmatprep.subr.mxu0 %v501
    %1007 = vmatpush1.msra.mxu0 %v500
    %1008 = vmatprep.subr.mxu0 %v469
    %1009 = vmatpush1.msra.mxu0 %v468
    %1010 = vmatprep.subr.mxu0 %v437
    %1011 = vmatpush1.msra.mxu0 %v436
    %1012 = vmatprep.subr.mxu0 %v405
    %1013 = vmatpush1.msra.mxu0 %v404
    %1014 = vmatprep.subr.mxu0 %v373
    %1015 = vmatpush1.msra.mxu0 %v372
    %1016 = vmatprep.subr.mxu0 %v341
    %1017 = vmatpush1.msra.mxu0 %v340
    %1018 = vmatprep.subr.mxu0 %v309
    %1019 = vmatpush1.msra.mxu0 %v308
    %1020 = vmatprep.subr.mxu0 0.0
    %1021 = vmatpush2.msra.mxu0 0.0
    %1022 = vmatprep.subr.mxu0 0.0
    %1023 = vmatpush2.msra.mxu0 0.0
    %1024 = vmatprep.subr.mxu0 0.0
    %1025 = vmatpush2.msra.mxu0 0.0
    %1026 = vmatprep.subr.mxu0 0.0
    %1027 = vmatpush2.msra.mxu0 0.0
    %1028 = vmatprep.subr.mxu0 0.0
    %1029 = vmatpush2.msra.mxu0 0.0
    %1030 = vmatprep.subr.mxu0 0.0
    %1031 = vmatpush2.msra.mxu0 0.0
    %1032 = vmatprep.subr.mxu0 0.0
    %1033 = vmatpush2.msra.mxu0 0.0
    %1034 = vmatprep.subr.mxu0 0.0
    %1035 = vmatpush2.msra.mxu0 0.0
    %1036 = vmatprep.subr.mxu0 0.0
    %1037 = vmatpush2.msra.mxu0 0.0
    %1038 = vmatprep.subr.mxu0 0.0
    %1039 = vmatpush2.msra.mxu0 0.0
    %1040 = vmatprep.subr.mxu0 0.0
    %1041 = vmatpush2.msra.mxu0 0.0
    %1042 = vmatprep.subr.mxu0 0.0
    %1043 = vmatpush2.msra.mxu0 0.0
    %1044 = vmatprep.subr.mxu0 0.0
    %1045 = vmatpush2.msra.mxu0 0.0
    %1046 = vmatprep.subr.mxu0 0.0
    %1047 = vmatpush2.msra.mxu0 0.0
    %1048 = vmatprep.subr.mxu0 0.0
    %1049 = vmatpush2.msra.mxu0 0.0
    %1050 = vmatprep.subr.mxu0 0.0
    %1051 = vmatpush2.msra.mxu0 0.0
    %1052 = vmatprep.mubr.f32.mxu0 0.0
    %1053 = vmatmul.mubr.f32.gmra.mxu0 %v292
    %v1054 = vpop.f32.mrf.mxu0
    %v1055 = vadd.f32 %v831, %v1054
    %v1056 = vpop.f32.mrf.mxu0
    %v1057 = vadd.f32 %v835, %v1056
    %1058 = vmatprep.mubr.f32.mxu0 0.0
    %1059 = vmatmul.mubr.f32.gmra.mxu0 %v293
    %v1060 = vpop.f32.mrf.mxu0
    %v1061 = vadd.f32 %v831, %v1060
    %v1062 = vpop.f32.mrf.mxu0
    %v1063 = vadd.f32 %v835, %v1062
    %1064 = vmatprep.mubr.f32.mxu0 0.0
    %1065 = vmatmul.mubr.f32.gmra.mxu0 %v294
    %v1066 = vpop.f32.mrf.mxu0
    %v1067 = vadd.f32 %v831, %v1066
    %v1068 = vpop.f32.mrf.mxu0
    %v1069 = vadd.f32 %v835, %v1068
    %1070 = vmatprep.mubr.f32.mxu0 0.0
    %1071 = vmatmul.mubr.f32.gmra.mxu0 %v295
    %v1072 = vpop.f32.mrf.mxu0
    %v1073 = vadd.f32 %v831, %v1072
    %v1074 = vpop.f32.mrf.mxu0
    %v1075 = vadd.f32 %v835, %v1074
    %1076 = vmatprep.mubr.f32.mxu0 0.0
    %1077 = vmatmul.mubr.f32.gmra.mxu0 %v296
    %v1078 = vpop.f32.mrf.mxu0
    %v1079 = vadd.f32 %v831, %v1078
    %v1080 = vpop.f32.mrf.mxu0
    %v1081 = vadd.f32 %v835, %v1080
    %1082 = vmatprep.mubr.f32.mxu0 0.0
    %1083 = vmatmul.mubr.f32.gmra.mxu0 %v297
    %v1084 = vpop.f32.mrf.mxu0
    %v1085 = vadd.f32 %v831, %v1084
    %v1086 = vpop.f32.mrf.mxu0
    %v1087 = vadd.f32 %v835, %v1086
    %1088 = vmatprep.mubr.f32.mxu0 0.0
    %1089 = vmatmul.mubr.f32.gmra.mxu0 %v298
    %v1090 = vpop.f32.mrf.mxu0
    %v1091 = vadd.f32 %v831, %v1090
    %v1092 = vpop.f32.mrf.mxu0
    %v1093 = vadd.f32 %v835, %v1092
    %1094 = vmatprep.mubr.f32.mxu0 0.0
    %1095 = vmatmul.mubr.f32.gmra.mxu0 %v299
    %v1096 = vpop.f32.mrf.mxu0
    %v1097 = vadd.f32 %v831, %v1096
    %v1098 = vpop.f32.mrf.mxu0
    %v1099 = vadd.f32 %v835, %v1098
    %1100 = vmatprep.mubr.f32.mxu0 0.0
    %1101 = vmatmul.mubr.f32.gmra.mxu0 %v300
    %v1102 = vpop.f32.mrf.mxu0
    %v1103 = vadd.f32 %v831, %v1102
    %v1104 = vpop.f32.mrf.mxu0
    %v1105 = vadd.f32 %v835, %v1104
    %1106 = vmatprep.mubr.f32.mxu0 0.0
    %1107 = vmatmul.mubr.f32.gmra.mxu0 %v301
    %v1108 = vpop.f32.mrf.mxu0
    %v1109 = vadd.f32 %v831, %v1108
    %v1110 = vpop.f32.mrf.mxu0
    %v1111 = vadd.f32 %v835, %v1110
    %1112 = vmatprep.mubr.f32.mxu0 0.0
    %1113 = vmatmul.mubr.f32.gmra.mxu0 %v302
    %v1114 = vpop.f32.mrf.mxu0
    %v1115 = vadd.f32 %v831, %v1114
    %v1116 = vpop.f32.mrf.mxu0
    %v1117 = vadd.f32 %v835, %v1116
    %1118 = vmatprep.mubr.f32.mxu0 0.0
    %1119 = vmatmul.mubr.f32.gmra.mxu0 %v303
    %v1120 = vpop.f32.mrf.mxu0
    %v1121 = vadd.f32 %v831, %v1120
    %v1122 = vpop.f32.mrf.mxu0
    %v1123 = vadd.f32 %v835, %v1122
    %1124 = vmatprep.mubr.f32.mxu0 0.0
    %1125 = vmatmul.mubr.f32.gmra.mxu0 %v304
    %v1126 = vpop.f32.mrf.mxu0
    %v1127 = vadd.f32 %v831, %v1126
    %v1128 = vpop.f32.mrf.mxu0
    %v1129 = vadd.f32 %v835, %v1128
    %1130 = vmatprep.mubr.f32.mxu0 0.0
    %1131 = vmatmul.mubr.f32.gmra.mxu0 %v305
    %v1132 = vpop.f32.mrf.mxu0
    %v1133 = vadd.f32 %v831, %v1132
    %v1134 = vpop.f32.mrf.mxu0
    %v1135 = vadd.f32 %v835, %v1134
    %1136 = vmatprep.mubr.f32.mxu0 0.0
    %1137 = vmatmul.mubr.f32.gmra.mxu0 %v306
    %v1138 = vpop.f32.mrf.mxu0
    %v1139 = vadd.f32 %v831, %v1138
    %v1140 = vpop.f32.mrf.mxu0
    %v1141 = vadd.f32 %v835, %v1140
    %1142 = vmatprep.mubr.f32.mxu0 0.0
    %1143 = vmatmul.mubr.f32.gmra.mxu0 %v307
    %v1144 = vpop.f32.mrf.mxu0
    %v1145 = vadd.f32 %v831, %v1144
    %v1146 = vpop.f32.mrf.mxu0
    %v1147 = vadd.f32 %v835, %v1146
    %1148 = vdwg.mxu0
    %1149 = vmatprep.subr.mxu0 %v791
    %1150 = vmatpush1.msra.mxu0 %v790
    %1151 = vmatprep.subr.mxu0 %v759
    %1152 = vmatpush1.msra.mxu0 %v758
    %1153 = vmatprep.subr.mxu0 %v727
    %1154 = vmatpush1.msra.mxu0 %v726
    %1155 = vmatprep.subr.mxu0 %v695
    %1156 = vmatpush1.msra.mxu0 %v694
    %1157 = vmatprep.subr.mxu0 %v663
    %1158 = vmatpush1.msra.mxu0 %v662
    %1159 = vmatprep.subr.mxu0 %v631
    %1160 = vmatpush1.msra.mxu0 %v630
    %1161 = vmatprep.subr.mxu0 %v599
    %1162 = vmatpush1.msra.mxu0 %v598
    %1163 = vmatprep.subr.mxu0 %v567
    %1164 = vmatpush1.msra.mxu0 %v566
    %1165 = vmatprep.subr.mxu0 %v535
    %1166 = vmatpush1.msra.mxu0 %v534
    %1167 = vmatprep.subr.mxu0 %v503
    %1168 = vmatpush1.msra.mxu0 %v502
    %1169 = vmatprep.subr.mxu0 %v471
    %1170 = vmatpush1.msra.mxu0 %v470
    %1171 = vmatprep.subr.mxu0 %v439
    %1172 = vmatpush1.msra.mxu0 %v438
    %1173 = vmatprep.subr.mxu0 %v407
    %1174 = vmatpush1.msra.mxu0 %v406
    %1175 = vmatprep.subr.mxu0 %v375
    %1176 = vmatpush1.msra.mxu0 %v374
    %1177 = vmatprep.subr.mxu0 %v343
    %1178 = vmatpush1.msra.mxu0 %v342
    %1179 = vmatprep.subr.mxu0 %v311
    %1180 = vmatpush1.msra.mxu0 %v310
    %1181 = vmatprep.subr.mxu0 0.0
    %1182 = vmatpush2.msra.mxu0 0.0
    %1183 = vmatprep.subr.mxu0 0.0
    %1184 = vmatpush2.msra.mxu0 0.0
    %1185 = vmatprep.subr.mxu0 0.0
    %1186 = vmatpush2.msra.mxu0 0.0
    %1187 = vmatprep.subr.mxu0 0.0
    %1188 = vmatpush2.msra.mxu0 0.0
    %1189 = vmatprep.subr.mxu0 0.0
    %1190 = vmatpush2.msra.mxu0 0.0
    %1191 = vmatprep.subr.mxu0 0.0
    %1192 = vmatpush2.msra.mxu0 0.0
    %1193 = vmatprep.subr.mxu0 0.0
    %1194 = vmatpush2.msra.mxu0 0.0
    %1195 = vmatprep.subr.mxu0 0.0
    %1196 = vmatpush2.msra.mxu0 0.0
    %1197 = vmatprep.subr.mxu0 0.0
    %1198 = vmatpush2.msra.mxu0 0.0
    %1199 = vmatprep.subr.mxu0 0.0
    %1200 = vmatpush2.msra.mxu0 0.0
    %1201 = vmatprep.subr.mxu0 0.0
    %1202 = vmatpush2.msra.mxu0 0.0
    %1203 = vmatprep.subr.mxu0 0.0
    %1204 = vmatpush2.msra.mxu0 0.0
    %1205 = vmatprep.subr.mxu0 0.0
    %1206 = vmatpush2.msra.mxu0 0.0
    %1207 = vmatprep.subr.mxu0 0.0
    %1208 = vmatpush2.msra.mxu0 0.0
    %1209 = vmatprep.subr.mxu0 0.0
    %1210 = vmatpush2.msra.mxu0 0.0
    %1211 = vmatprep.subr.mxu0 0.0
    %1212 = vmatpush2.msra.mxu0 0.0
    %1213 = vmatprep.mubr.f32.mxu0 0.0
    %1214 = vmatmul.mubr.f32.gmra.mxu0 %v292
    %v1215 = vpop.f32.mrf.mxu0
    %v1216 = vadd.f32 %v839, %v1215
    %v1217 = vpop.f32.mrf.mxu0
    %v1218 = vadd.f32 %v843, %v1217
    %1219 = vmatprep.mubr.f32.mxu0 0.0
    %1220 = vmatmul.mubr.f32.gmra.mxu0 %v293
    %v1221 = vpop.f32.mrf.mxu0
    %v1222 = vadd.f32 %v839, %v1221
    %v1223 = vpop.f32.mrf.mxu0
    %v1224 = vadd.f32 %v843, %v1223
    %1225 = vmatprep.mubr.f32.mxu0 0.0
    %1226 = vmatmul.mubr.f32.gmra.mxu0 %v294
    %v1227 = vpop.f32.mrf.mxu0
    %v1228 = vadd.f32 %v839, %v1227
    %v1229 = vpop.f32.mrf.mxu0
    %v1230 = vadd.f32 %v843, %v1229
    %1231 = vmatprep.mubr.f32.mxu0 0.0
    %1232 = vmatmul.mubr.f32.gmra.mxu0 %v295
    %v1233 = vpop.f32.mrf.mxu0
    %v1234 = vadd.f32 %v839, %v1233
    %v1235 = vpop.f32.mrf.mxu0
    %v1236 = vadd.f32 %v843, %v1235
    %1237 = vmatprep.mubr.f32.mxu0 0.0
    %1238 = vmatmul.mubr.f32.gmra.mxu0 %v296
    %v1239 = vpop.f32.mrf.mxu0
    %v1240 = vadd.f32 %v839, %v1239
    %v1241 = vpop.f32.mrf.mxu0
    %v1242 = vadd.f32 %v843, %v1241
    %1243 = vmatprep.mubr.f32.mxu0 0.0
    %1244 = vmatmul.mubr.f32.gmra.mxu0 %v297
    %v1245 = vpop.f32.mrf.mxu0
    %v1246 = vadd.f32 %v839, %v1245
    %v1247 = vpop.f32.mrf.mxu0
    %v1248 = vadd.f32 %v843, %v1247
    %1249 = vmatprep.mubr.f32.mxu0 0.0
    %1250 = vmatmul.mubr.f32.gmra.mxu0 %v298
    %v1251 = vpop.f32.mrf.mxu0
    %v1252 = vadd.f32 %v839, %v1251
    %v1253 = vpop.f32.mrf.mxu0
    %v1254 = vadd.f32 %v843, %v1253
    %1255 = vmatprep.mubr.f32.mxu0 0.0
    %1256 = vmatmul.mubr.f32.gmra.mxu0 %v299
    %v1257 = vpop.f32.mrf.mxu0
    %v1258 = vadd.f32 %v839, %v1257
    %v1259 = vpop.f32.mrf.mxu0
    %v1260 = vadd.f32 %v843, %v1259
    %1261 = vmatprep.mubr.f32.mxu0 0.0
    %1262 = vmatmul.mubr.f32.gmra.mxu0 %v300
    %v1263 = vpop.f32.mrf.mxu0
    %v1264 = vadd.f32 %v839, %v1263
    %v1265 = vpop.f32.mrf.mxu0
    %v1266 = vadd.f32 %v843, %v1265
    %1267 = vmatprep.mubr.f32.mxu0 0.0
    %1268 = vmatmul.mubr.f32.gmra.mxu0 %v301
    %v1269 = vpop.f32.mrf.mxu0
    %v1270 = vadd.f32 %v839, %v1269
    %v1271 = vpop.f32.mrf.mxu0
    %v1272 = vadd.f32 %v843, %v1271
    %1273 = vmatprep.mubr.f32.mxu0 0.0
    %1274 = vmatmul.mubr.f32.gmra.mxu0 %v302
    %v1275 = vpop.f32.mrf.mxu0
    %v1276 = vadd.f32 %v839, %v1275
    %v1277 = vpop.f32.mrf.mxu0
    %v1278 = vadd.f32 %v843, %v1277
    %1279 = vmatprep.mubr.f32.mxu0 0.0
    %1280 = vmatmul.mubr.f32.gmra.mxu0 %v303
    %v1281 = vpop.f32.mrf.mxu0
    %v1282 = vadd.f32 %v839, %v1281
    %v1283 = vpop.f32.mrf.mxu0
    %v1284 = vadd.f32 %v843, %v1283
    %1285 = vmatprep.mubr.f32.mxu0 0.0
    %1286 = vmatmul.mubr.f32.gmra.mxu0 %v304
    %v1287 = vpop.f32.mrf.mxu0
    %v1288 = vadd.f32 %v839, %v1287
    %v1289 = vpop.f32.mrf.mxu0
    %v1290 = vadd.f32 %v843, %v1289
    %1291 = vmatprep.mubr.f32.mxu0 0.0
    %1292 = vmatmul.mubr.f32.gmra.mxu0 %v305
    %v1293 = vpop.f32.mrf.mxu0
    %v1294 = vadd.f32 %v839, %v1293
    %v1295 = vpop.f32.mrf.mxu0
    %v1296 = vadd.f32 %v843, %v1295
    %1297 = vmatprep.mubr.f32.mxu0 0.0
    %1298 = vmatmul.mubr.f32.gmra.mxu0 %v306
    %v1299 = vpop.f32.mrf.mxu0
    %v1300 = vadd.f32 %v839, %v1299
    %v1301 = vpop.f32.mrf.mxu0
    %v1302 = vadd.f32 %v843, %v1301
    %1303 = vmatprep.mubr.f32.mxu0 0.0
    %1304 = vmatmul.mubr.f32.gmra.mxu0 %v307
    %v1305 = vpop.f32.mrf.mxu0
    %v1306 = vadd.f32 %v839, %v1305
    %v1307 = vpop.f32.mrf.mxu0
    %v1308 = vadd.f32 %v843, %v1307
    %1309 = vdwg.mxu0
    %1310 = vmatprep.subr.mxu0 %v793
    %1311 = vmatpush1.msra.mxu0 %v792
    %1312 = vmatprep.subr.mxu0 %v761
    %1313 = vmatpush1.msra.mxu0 %v760
    %1314 = vmatprep.subr.mxu0 %v729
    %1315 = vmatpush1.msra.mxu0 %v728
    %1316 = vmatprep.subr.mxu0 %v697
    %1317 = vmatpush1.msra.mxu0 %v696
    %1318 = vmatprep.subr.mxu0 %v665
    %1319 = vmatpush1.msra.mxu0 %v664
    %1320 = vmatprep.subr.mxu0 %v633
    %1321 = vmatpush1.msra.mxu0 %v632
    %1322 = vmatprep.subr.mxu0 %v601
    %1323 = vmatpush1.msra.mxu0 %v600
    %1324 = vmatprep.subr.mxu0 %v569
    %1325 = vmatpush1.msra.mxu0 %v568
    %1326 = vmatprep.subr.mxu0 %v537
    %1327 = vmatpush1.msra.mxu0 %v536
    %1328 = vmatprep.subr.mxu0 %v505
    %1329 = vmatpush1.msra.mxu0 %v504
    %1330 = vmatprep.subr.mxu0 %v473
    %1331 = vmatpush1.msra.mxu0 %v472
    %1332 = vmatprep.subr.mxu0 %v441
    %1333 = vmatpush1.msra.mxu0 %v440
    %1334 = vmatprep.subr.mxu0 %v409
    %1335 = vmatpush1.msra.mxu0 %v408
    %1336 = vmatprep.subr.mxu0 %v377
    %1337 = vmatpush1.msra.mxu0 %v376
    %1338 = vmatprep.subr.mxu0 %v345
    %1339 = vmatpush1.msra.mxu0 %v344
    %1340 = vmatprep.subr.mxu0 %v313
    %1341 = vmatpush1.msra.mxu0 %v312
    %1342 = vmatprep.subr.mxu0 0.0
    %1343 = vmatpush2.msra.mxu0 0.0
    %1344 = vmatprep.subr.mxu0 0.0
    %1345 = vmatpush2.msra.mxu0 0.0
    %1346 = vmatprep.subr.mxu0 0.0
    %1347 = vmatpush2.msra.mxu0 0.0
    %1348 = vmatprep.subr.mxu0 0.0
    %1349 = vmatpush2.msra.mxu0 0.0
    %1350 = vmatprep.subr.mxu0 0.0
    %1351 = vmatpush2.msra.mxu0 0.0
    %1352 = vmatprep.subr.mxu0 0.0
    %1353 = vmatpush2.msra.mxu0 0.0
    %1354 = vmatprep.subr.mxu0 0.0
    %1355 = vmatpush2.msra.mxu0 0.0
    %1356 = vmatprep.subr.mxu0 0.0
    %1357 = vmatpush2.msra.mxu0 0.0
    %1358 = vmatprep.subr.mxu0 0.0
    %1359 = vmatpush2.msra.mxu0 0.0
    %1360 = vmatprep.subr.mxu0 0.0
    %1361 = vmatpush2.msra.mxu0 0.0
    %1362 = vmatprep.subr.mxu0 0.0
    %1363 = vmatpush2.msra.mxu0 0.0
    %1364 = vmatprep.subr.mxu0 0.0
    %1365 = vmatpush2.msra.mxu0 0.0
    %1366 = vmatprep.subr.mxu0 0.0
    %1367 = vmatpush2.msra.mxu0 0.0
    %1368 = vmatprep.subr.mxu0 0.0
    %1369 = vmatpush2.msra.mxu0 0.0
    %1370 = vmatprep.subr.mxu0 0.0
    %1371 = vmatpush2.msra.mxu0 0.0
    %1372 = vmatprep.subr.mxu0 0.0
    %1373 = vmatpush2.msra.mxu0 0.0
    %1374 = vmatprep.mubr.f32.mxu0 0.0
    %1375 = vmatmul.mubr.f32.gmra.mxu0 %v292
    %v1376 = vpop.f32.mrf.mxu0
    %v1377 = vadd.f32 %v847, %v1376
    %v1378 = vpop.f32.mrf.mxu0
    %v1379 = vadd.f32 %v851, %v1378
    %1380 = vmatprep.mubr.f32.mxu0 0.0
    %1381 = vmatmul.mubr.f32.gmra.mxu0 %v293
    %v1382 = vpop.f32.mrf.mxu0
    %v1383 = vadd.f32 %v847, %v1382
    %v1384 = vpop.f32.mrf.mxu0
    %v1385 = vadd.f32 %v851, %v1384
    %1386 = vmatprep.mubr.f32.mxu0 0.0
    %1387 = vmatmul.mubr.f32.gmra.mxu0 %v294
    %v1388 = vpop.f32.mrf.mxu0
    %v1389 = vadd.f32 %v847, %v1388
    %v1390 = vpop.f32.mrf.mxu0
    %v1391 = vadd.f32 %v851, %v1390
    %1392 = vmatprep.mubr.f32.mxu0 0.0
    %1393 = vmatmul.mubr.f32.gmra.mxu0 %v295
    %v1394 = vpop.f32.mrf.mxu0
    %v1395 = vadd.f32 %v847, %v1394
    %v1396 = vpop.f32.mrf.mxu0
    %v1397 = vadd.f32 %v851, %v1396
    %1398 = vmatprep.mubr.f32.mxu0 0.0
    %1399 = vmatmul.mubr.f32.gmra.mxu0 %v296
    %v1400 = vpop.f32.mrf.mxu0
    %v1401 = vadd.f32 %v847, %v1400
    %v1402 = vpop.f32.mrf.mxu0
    %v1403 = vadd.f32 %v851, %v1402
    %1404 = vmatprep.mubr.f32.mxu0 0.0
    %1405 = vmatmul.mubr.f32.gmra.mxu0 %v297
    %v1406 = vpop.f32.mrf.mxu0
    %v1407 = vadd.f32 %v847, %v1406
    %v1408 = vpop.f32.mrf.mxu0
    %v1409 = vadd.f32 %v851, %v1408
    %1410 = vmatprep.mubr.f32.mxu0 0.0
    %1411 = vmatmul.mubr.f32.gmra.mxu0 %v298
    %v1412 = vpop.f32.mrf.mxu0
    %v1413 = vadd.f32 %v847, %v1412
    %v1414 = vpop.f32.mrf.mxu0
    %v1415 = vadd.f32 %v851, %v1414
    %1416 = vmatprep.mubr.f32.mxu0 0.0
    %1417 = vmatmul.mubr.f32.gmra.mxu0 %v299
    %v1418 = vpop.f32.mrf.mxu0
    %v1419 = vadd.f32 %v847, %v1418
    %v1420 = vpop.f32.mrf.mxu0
    %v1421 = vadd.f32 %v851, %v1420
    %1422 = vmatprep.mubr.f32.mxu0 0.0
    %1423 = vmatmul.mubr.f32.gmra.mxu0 %v300
    %v1424 = vpop.f32.mrf.mxu0
    %v1425 = vadd.f32 %v847, %v1424
    %v1426 = vpop.f32.mrf.mxu0
    %v1427 = vadd.f32 %v851, %v1426
    %1428 = vmatprep.mubr.f32.mxu0 0.0
    %1429 = vmatmul.mubr.f32.gmra.mxu0 %v301
    %v1430 = vpop.f32.mrf.mxu0
    %v1431 = vadd.f32 %v847, %v1430
    %v1432 = vpop.f32.mrf.mxu0
    %v1433 = vadd.f32 %v851, %v1432
    %1434 = vmatprep.mubr.f32.mxu0 0.0
    %1435 = vmatmul.mubr.f32.gmra.mxu0 %v302
    %v1436 = vpop.f32.mrf.mxu0
    %v1437 = vadd.f32 %v847, %v1436
    %v1438 = vpop.f32.mrf.mxu0
    %v1439 = vadd.f32 %v851, %v1438
    %1440 = vmatprep.mubr.f32.mxu0 0.0
    %1441 = vmatmul.mubr.f32.gmra.mxu0 %v303
    %v1442 = vpop.f32.mrf.mxu0
    %v1443 = vadd.f32 %v847, %v1442
    %v1444 = vpop.f32.mrf.mxu0
    %v1445 = vadd.f32 %v851, %v1444
    %1446 = vmatprep.mubr.f32.mxu0 0.0
    %1447 = vmatmul.mubr.f32.gmra.mxu0 %v304
    %v1448 = vpop.f32.mrf.mxu0
    %v1449 = vadd.f32 %v847, %v1448
    %v1450 = vpop.f32.mrf.mxu0
    %v1451 = vadd.f32 %v851, %v1450
    %1452 = vmatprep.mubr.f32.mxu0 0.0
    %1453 = vmatmul.mubr.f32.gmra.mxu0 %v305
    %v1454 = vpop.f32.mrf.mxu0
    %v1455 = vadd.f32 %v847, %v1454
    %v1456 = vpop.f32.mrf.mxu0
    %v1457 = vadd.f32 %v851, %v1456
    %1458 = vmatprep.mubr.f32.mxu0 0.0
    %1459 = vmatmul.mubr.f32.gmra.mxu0 %v306
    %v1460 = vpop.f32.mrf.mxu0
    %v1461 = vadd.f32 %v847, %v1460
    %v1462 = vpop.f32.mrf.mxu0
    %v1463 = vadd.f32 %v851, %v1462
    %1464 = vmatprep.mubr.f32.mxu0 0.0
    %1465 = vmatmul.mubr.f32.gmra.mxu0 %v307
    %v1466 = vpop.f32.mrf.mxu0
    %v1467 = vadd.f32 %v847, %v1466
    %v1468 = vpop.f32.mrf.mxu0
    %v1469 = vadd.f32 %v851, %v1468
    %1470 = vdwg.mxu0
    %1471 = vmatprep.subr.mxu0 %v795
    %1472 = vmatpush1.msra.mxu0 %v794
    %1473 = vmatprep.subr.mxu0 %v763
    %1474 = vmatpush1.msra.mxu0 %v762
    %1475 = vmatprep.subr.mxu0 %v731
    %1476 = vmatpush1.msra.mxu0 %v730
    %1477 = vmatprep.subr.mxu0 %v699
    %1478 = vmatpush1.msra.mxu0 %v698
    %1479 = vmatprep.subr.mxu0 %v667
    %1480 = vmatpush1.msra.mxu0 %v666
    %1481 = vmatprep.subr.mxu0 %v635
    %1482 = vmatpush1.msra.mxu0 %v634
    %1483 = vmatprep.subr.mxu0 %v603
    %1484 = vmatpush1.msra.mxu0 %v602
    %1485 = vmatprep.subr.mxu0 %v571
    %1486 = vmatpush1.msra.mxu0 %v570
    %1487 = vmatprep.subr.mxu0 %v539
    %1488 = vmatpush1.msra.mxu0 %v538
    %1489 = vmatprep.subr.mxu0 %v507
    %1490 = vmatpush1.msra.mxu0 %v506
    %1491 = vmatprep.subr.mxu0 %v475
    %1492 = vmatpush1.msra.mxu0 %v474
    %1493 = vmatprep.subr.mxu0 %v443
    %1494 = vmatpush1.msra.mxu0 %v442
    %1495 = vmatprep.subr.mxu0 %v411
    %1496 = vmatpush1.msra.mxu0 %v410
    %1497 = vmatprep.subr.mxu0 %v379
    %1498 = vmatpush1.msra.mxu0 %v378
    %1499 = vmatprep.subr.mxu0 %v347
    %1500 = vmatpush1.msra.mxu0 %v346
    %1501 = vmatprep.subr.mxu0 %v315
    %1502 = vmatpush1.msra.mxu0 %v314
    %1503 = vmatprep.subr.mxu0 0.0
    %1504 = vmatpush2.msra.mxu0 0.0
    %1505 = vmatprep.subr.mxu0 0.0
    %1506 = vmatpush2.msra.mxu0 0.0
    %1507 = vmatprep.subr.mxu0 0.0
    %1508 = vmatpush2.msra.mxu0 0.0
    %1509 = vmatprep.subr.mxu0 0.0
    %1510 = vmatpush2.msra.mxu0 0.0
    %1511 = vmatprep.subr.mxu0 0.0
    %1512 = vmatpush2.msra.mxu0 0.0
    %1513 = vmatprep.subr.mxu0 0.0
    %1514 = vmatpush2.msra.mxu0 0.0
    %1515 = vmatprep.subr.mxu0 0.0
    %1516 = vmatpush2.msra.mxu0 0.0
    %1517 = vmatprep.subr.mxu0 0.0
    %1518 = vmatpush2.msra.mxu0 0.0
    %1519 = vmatprep.subr.mxu0 0.0
    %1520 = vmatpush2.msra.mxu0 0.0
    %1521 = vmatprep.subr.mxu0 0.0
    %1522 = vmatpush2.msra.mxu0 0.0
    %1523 = vmatprep.subr.mxu0 0.0
    %1524 = vmatpush2.msra.mxu0 0.0
    %1525 = vmatprep.subr.mxu0 0.0
    %1526 = vmatpush2.msra.mxu0 0.0
    %1527 = vmatprep.subr.mxu0 0.0
    %1528 = vmatpush2.msra.mxu0 0.0
    %1529 = vmatprep.subr.mxu0 0.0
    %1530 = vmatpush2.msra.mxu0 0.0
    %1531 = vmatprep.subr.mxu0 0.0
    %1532 = vmatpush2.msra.mxu0 0.0
    %1533 = vmatprep.subr.mxu0 0.0
    %1534 = vmatpush2.msra.mxu0 0.0
    %1535 = vmatprep.mubr.f32.mxu0 0.0
    %1536 = vmatmul.mubr.f32.gmra.mxu0 %v292
    %v1537 = vpop.f32.mrf.mxu0
    %v1538 = vadd.f32 %v855, %v1537
    %v1539 = vpop.f32.mrf.mxu0
    %v1540 = vadd.f32 %v859, %v1539
    %1541 = vmatprep.mubr.f32.mxu0 0.0
    %1542 = vmatmul.mubr.f32.gmra.mxu0 %v293
    %v1543 = vpop.f32.mrf.mxu0
    %v1544 = vadd.f32 %v855, %v1543
    %v1545 = vpop.f32.mrf.mxu0
    %v1546 = vadd.f32 %v859, %v1545
    %1547 = vmatprep.mubr.f32.mxu0 0.0
    %1548 = vmatmul.mubr.f32.gmra.mxu0 %v294
    %v1549 = vpop.f32.mrf.mxu0
    %v1550 = vadd.f32 %v855, %v1549
    %v1551 = vpop.f32.mrf.mxu0
    %v1552 = vadd.f32 %v859, %v1551
    %1553 = vmatprep.mubr.f32.mxu0 0.0
    %1554 = vmatmul.mubr.f32.gmra.mxu0 %v295
    %v1555 = vpop.f32.mrf.mxu0
    %v1556 = vadd.f32 %v855, %v1555
    %v1557 = vpop.f32.mrf.mxu0
    %v1558 = vadd.f32 %v859, %v1557
    %1559 = vmatprep.mubr.f32.mxu0 0.0
    %1560 = vmatmul.mubr.f32.gmra.mxu0 %v296
    %v1561 = vpop.f32.mrf.mxu0
    %v1562 = vadd.f32 %v855, %v1561
    %v1563 = vpop.f32.mrf.mxu0
    %v1564 = vadd.f32 %v859, %v1563
    %1565 = vmatprep.mubr.f32.mxu0 0.0
    %1566 = vmatmul.mubr.f32.gmra.mxu0 %v297
    %v1567 = vpop.f32.mrf.mxu0
    %v1568 = vadd.f32 %v855, %v1567
    %v1569 = vpop.f32.mrf.mxu0
    %v1570 = vadd.f32 %v859, %v1569
    %1571 = vmatprep.mubr.f32.mxu0 0.0
    %1572 = vmatmul.mubr.f32.gmra.mxu0 %v298
    %v1573 = vpop.f32.mrf.mxu0
    %v1574 = vadd.f32 %v855, %v1573
    %v1575 = vpop.f32.mrf.mxu0
    %v1576 = vadd.f32 %v859, %v1575
    %1577 = vmatprep.mubr.f32.mxu0 0.0
    %1578 = vmatmul.mubr.f32.gmra.mxu0 %v299
    %v1579 = vpop.f32.mrf.mxu0
    %v1580 = vadd.f32 %v855, %v1579
    %v1581 = vpop.f32.mrf.mxu0
    %v1582 = vadd.f32 %v859, %v1581
    %1583 = vmatprep.mubr.f32.mxu0 0.0
    %1584 = vmatmul.mubr.f32.gmra.mxu0 %v300
    %v1585 = vpop.f32.mrf.mxu0
    %v1586 = vadd.f32 %v855, %v1585
    %v1587 = vpop.f32.mrf.mxu0
    %v1588 = vadd.f32 %v859, %v1587
    %1589 = vmatprep.mubr.f32.mxu0 0.0
    %1590 = vmatmul.mubr.f32.gmra.mxu0 %v301
    %v1591 = vpop.f32.mrf.mxu0
    %v1592 = vadd.f32 %v855, %v1591
    %v1593 = vpop.f32.mrf.mxu0
    %v1594 = vadd.f32 %v859, %v1593
    %1595 = vmatprep.mubr.f32.mxu0 0.0
    %1596 = vmatmul.mubr.f32.gmra.mxu0 %v302
    %v1597 = vpop.f32.mrf.mxu0
    %v1598 = vadd.f32 %v855, %v1597
    %v1599 = vpop.f32.mrf.mxu0
    %v1600 = vadd.f32 %v859, %v1599
    %1601 = vmatprep.mubr.f32.mxu0 0.0
    %1602 = vmatmul.mubr.f32.gmra.mxu0 %v303
    %v1603 = vpop.f32.mrf.mxu0
    %v1604 = vadd.f32 %v855, %v1603
    %v1605 = vpop.f32.mrf.mxu0
    %v1606 = vadd.f32 %v859, %v1605
    %1607 = vmatprep.mubr.f32.mxu0 0.0
    %1608 = vmatmul.mubr.f32.gmra.mxu0 %v304
    %v1609 = vpop.f32.mrf.mxu0
    %v1610 = vadd.f32 %v855, %v1609
    %v1611 = vpop.f32.mrf.mxu0
    %v1612 = vadd.f32 %v859, %v1611
    %1613 = vmatprep.mubr.f32.mxu0 0.0
    %1614 = vmatmul.mubr.f32.gmra.mxu0 %v305
    %v1615 = vpop.f32.mrf.mxu0
    %v1616 = vadd.f32 %v855, %v1615
    %v1617 = vpop.f32.mrf.mxu0
    %v1618 = vadd.f32 %v859, %v1617
    %1619 = vmatprep.mubr.f32.mxu0 0.0
    %1620 = vmatmul.mubr.f32.gmra.mxu0 %v306
    %v1621 = vpop.f32.mrf.mxu0
    %v1622 = vadd.f32 %v855, %v1621
    %v1623 = vpop.f32.mrf.mxu0
    %v1624 = vadd.f32 %v859, %v1623
    %1625 = vmatprep.mubr.f32.mxu0 0.0
    %1626 = vmatmul.mubr.f32.gmra.mxu0 %v307
    %v1627 = vpop.f32.mrf.mxu0
    %v1628 = vadd.f32 %v855, %v1627
    %v1629 = vpop.f32.mrf.mxu0
    %v1630 = vadd.f32 %v859, %v1629
    %1631 = vdwg.mxu0
    %1632 = vmatprep.subr.mxu0 %v797
    %1633 = vmatpush1.msra.mxu0 %v796
    %1634 = vmatprep.subr.mxu0 %v765
    %1635 = vmatpush1.msra.mxu0 %v764
    %1636 = vmatprep.subr.mxu0 %v733
    %1637 = vmatpush1.msra.mxu0 %v732
    %1638 = vmatprep.subr.mxu0 %v701
    %1639 = vmatpush1.msra.mxu0 %v700
    %1640 = vmatprep.subr.mxu0 %v669
    %1641 = vmatpush1.msra.mxu0 %v668
    %1642 = vmatprep.subr.mxu0 %v637
    %1643 = vmatpush1.msra.mxu0 %v636
    %1644 = vmatprep.subr.mxu0 %v605
    %1645 = vmatpush1.msra.mxu0 %v604
    %1646 = vmatprep.subr.mxu0 %v573
    %1647 = vmatpush1.msra.mxu0 %v572
    %1648 = vmatprep.subr.mxu0 %v541
    %1649 = vmatpush1.msra.mxu0 %v540
    %1650 = vmatprep.subr.mxu0 %v509
    %1651 = vmatpush1.msra.mxu0 %v508
    %1652 = vmatprep.subr.mxu0 %v477
    %1653 = vmatpush1.msra.mxu0 %v476
    %1654 = vmatprep.subr.mxu0 %v445
    %1655 = vmatpush1.msra.mxu0 %v444
    %1656 = vmatprep.subr.mxu0 %v413
    %1657 = vmatpush1.msra.mxu0 %v412
    %1658 = vmatprep.subr.mxu0 %v381
    %1659 = vmatpush1.msra.mxu0 %v380
    %1660 = vmatprep.subr.mxu0 %v349
    %1661 = vmatpush1.msra.mxu0 %v348
    %1662 = vmatprep.subr.mxu0 %v317
    %1663 = vmatpush1.msra.mxu0 %v316
    %1664 = vmatprep.subr.mxu0 0.0
    %1665 = vmatpush2.msra.mxu0 0.0
    %1666 = vmatprep.subr.mxu0 0.0
    %1667 = vmatpush2.msra.mxu0 0.0
    %1668 = vmatprep.subr.mxu0 0.0
    %1669 = vmatpush2.msra.mxu0 0.0
    %1670 = vmatprep.subr.mxu0 0.0
    %1671 = vmatpush2.msra.mxu0 0.0
    %1672 = vmatprep.subr.mxu0 0.0
    %1673 = vmatpush2.msra.mxu0 0.0
    %1674 = vmatprep.subr.mxu0 0.0
    %1675 = vmatpush2.msra.mxu0 0.0
    %1676 = vmatprep.subr.mxu0 0.0
    %1677 = vmatpush2.msra.mxu0 0.0
    %1678 = vmatprep.subr.mxu0 0.0
    %1679 = vmatpush2.msra.mxu0 0.0
    %1680 = vmatprep.subr.mxu0 0.0
    %1681 = vmatpush2.msra.mxu0 0.0
    %1682 = vmatprep.subr.mxu0 0.0
    %1683 = vmatpush2.msra.mxu0 0.0
    %1684 = vmatprep.subr.mxu0 0.0
    %1685 = vmatpush2.msra.mxu0 0.0
    %1686 = vmatprep.subr.mxu0 0.0
    %1687 = vmatpush2.msra.mxu0 0.0
    %1688 = vmatprep.subr.mxu0 0.0
    %1689 = vmatpush2.msra.mxu0 0.0
    %1690 = vmatprep.subr.mxu0 0.0
    %1691 = vmatpush2.msra.mxu0 0.0
    %1692 = vmatprep.subr.mxu0 0.0
    %1693 = vmatpush2.msra.mxu0 0.0
    %1694 = vmatprep.subr.mxu0 0.0
    %1695 = vmatpush2.msra.mxu0 0.0
    %1696 = vmatprep.mubr.f32.mxu0 0.0
    %1697 = vmatmul.mubr.f32.gmra.mxu0 %v292
    %v1698 = vpop.f32.mrf.mxu0
    %v1699 = vadd.f32 %v863, %v1698
    %v1700 = vpop.f32.mrf.mxu0
    %v1701 = vadd.f32 %v867, %v1700
    %1702 = vmatprep.mubr.f32.mxu0 0.0
    %1703 = vmatmul.mubr.f32.gmra.mxu0 %v293
    %v1704 = vpop.f32.mrf.mxu0
    %v1705 = vadd.f32 %v863, %v1704
    %v1706 = vpop.f32.mrf.mxu0
    %v1707 = vadd.f32 %v867, %v1706
    %1708 = vmatprep.mubr.f32.mxu0 0.0
    %1709 = vmatmul.mubr.f32.gmra.mxu0 %v294
    %v1710 = vpop.f32.mrf.mxu0
    %v1711 = vadd.f32 %v863, %v1710
    %v1712 = vpop.f32.mrf.mxu0
    %v1713 = vadd.f32 %v867, %v1712
    %1714 = vmatprep.mubr.f32.mxu0 0.0
    %1715 = vmatmul.mubr.f32.gmra.mxu0 %v295
    %v1716 = vpop.f32.mrf.mxu0
    %v1717 = vadd.f32 %v863, %v1716
    %v1718 = vpop.f32.mrf.mxu0
    %v1719 = vadd.f32 %v867, %v1718
    %1720 = vmatprep.mubr.f32.mxu0 0.0
    %1721 = vmatmul.mubr.f32.gmra.mxu0 %v296
    %v1722 = vpop.f32.mrf.mxu0
    %v1723 = vadd.f32 %v863, %v1722
    %v1724 = vpop.f32.mrf.mxu0
    %v1725 = vadd.f32 %v867, %v1724
    %1726 = vmatprep.mubr.f32.mxu0 0.0
    %1727 = vmatmul.mubr.f32.gmra.mxu0 %v297
    %v1728 = vpop.f32.mrf.mxu0
    %v1729 = vadd.f32 %v863, %v1728
    %v1730 = vpop.f32.mrf.mxu0
    %v1731 = vadd.f32 %v867, %v1730
    %1732 = vmatprep.mubr.f32.mxu0 0.0
    %1733 = vmatmul.mubr.f32.gmra.mxu0 %v298
    %v1734 = vpop.f32.mrf.mxu0
    %v1735 = vadd.f32 %v863, %v1734
    %v1736 = vpop.f32.mrf.mxu0
    %v1737 = vadd.f32 %v867, %v1736
    %1738 = vmatprep.mubr.f32.mxu0 0.0
    %1739 = vmatmul.mubr.f32.gmra.mxu0 %v299
    %v1740 = vpop.f32.mrf.mxu0
    %v1741 = vadd.f32 %v863, %v1740
    %v1742 = vpop.f32.mrf.mxu0
    %v1743 = vadd.f32 %v867, %v1742
    %1744 = vmatprep.mubr.f32.mxu0 0.0
    %1745 = vmatmul.mubr.f32.gmra.mxu0 %v300
    %v1746 = vpop.f32.mrf.mxu0
    %v1747 = vadd.f32 %v863, %v1746
    %v1748 = vpop.f32.mrf.mxu0
    %v1749 = vadd.f32 %v867, %v1748
    %1750 = vmatprep.mubr.f32.mxu0 0.0
    %1751 = vmatmul.mubr.f32.gmra.mxu0 %v301
    %v1752 = vpop.f32.mrf.mxu0
    %v1753 = vadd.f32 %v863, %v1752
    %v1754 = vpop.f32.mrf.mxu0
    %v1755 = vadd.f32 %v867, %v1754
    %1756 = vmatprep.mubr.f32.mxu0 0.0
    %1757 = vmatmul.mubr.f32.gmra.mxu0 %v302
    %v1758 = vpop.f32.mrf.mxu0
    %v1759 = vadd.f32 %v863, %v1758
    %v1760 = vpop.f32.mrf.mxu0
    %v1761 = vadd.f32 %v867, %v1760
    %1762 = vmatprep.mubr.f32.mxu0 0.0
    %1763 = vmatmul.mubr.f32.gmra.mxu0 %v303
    %v1764 = vpop.f32.mrf.mxu0
    %v1765 = vadd.f32 %v863, %v1764
    %v1766 = vpop.f32.mrf.mxu0
    %v1767 = vadd.f32 %v867, %v1766
    %1768 = vmatprep.mubr.f32.mxu0 0.0
    %1769 = vmatmul.mubr.f32.gmra.mxu0 %v304
    %v1770 = vpop.f32.mrf.mxu0
    %v1771 = vadd.f32 %v863, %v1770
    %v1772 = vpop.f32.mrf.mxu0
    %v1773 = vadd.f32 %v867, %v1772
    %1774 = vmatprep.mubr.f32.mxu0 0.0
    %1775 = vmatmul.mubr.f32.gmra.mxu0 %v305
    %v1776 = vpop.f32.mrf.mxu0
    %v1777 = vadd.f32 %v863, %v1776
    %v1778 = vpop.f32.mrf.mxu0
    %v1779 = vadd.f32 %v867, %v1778
    %1780 = vmatprep.mubr.f32.mxu0 0.0
    %1781 = vmatmul.mubr.f32.gmra.mxu0 %v306
    %v1782 = vpop.f32.mrf.mxu0
    %v1783 = vadd.f32 %v863, %v1782
    %v1784 = vpop.f32.mrf.mxu0
    %v1785 = vadd.f32 %v867, %v1784
    %1786 = vmatprep.mubr.f32.mxu0 0.0
    %1787 = vmatmul.mubr.f32.gmra.mxu0 %v307
    %v1788 = vpop.f32.mrf.mxu0
    %v1789 = vadd.f32 %v863, %v1788
    %v1790 = vpop.f32.mrf.mxu0
    %v1791 = vadd.f32 %v867, %v1790
    %1792 = vdwg.mxu0
    %1793 = vmatprep.subr.mxu0 %v799
    %1794 = vmatpush1.msra.mxu0 %v798
    %1795 = vmatprep.subr.mxu0 %v767
    %1796 = vmatpush1.msra.mxu0 %v766
    %1797 = vmatprep.subr.mxu0 %v735
    %1798 = vmatpush1.msra.mxu0 %v734
    %1799 = vmatprep.subr.mxu0 %v703
    %1800 = vmatpush1.msra.mxu0 %v702
    %1801 = vmatprep.subr.mxu0 %v671
    %1802 = vmatpush1.msra.mxu0 %v670
    %1803 = vmatprep.subr.mxu0 %v639
    %1804 = vmatpush1.msra.mxu0 %v638
    %1805 = vmatprep.subr.mxu0 %v607
    %1806 = vmatpush1.msra.mxu0 %v606
    %1807 = vmatprep.subr.mxu0 %v575
    %1808 = vmatpush1.msra.mxu0 %v574
    %1809 = vmatprep.subr.mxu0 %v543
    %1810 = vmatpush1.msra.mxu0 %v542
    %1811 = vmatprep.subr.mxu0 %v511
    %1812 = vmatpush1.msra.mxu0 %v510
    %1813 = vmatprep.subr.mxu0 %v479
    %1814 = vmatpush1.msra.mxu0 %v478
    %1815 = vmatprep.subr.mxu0 %v447
    %1816 = vmatpush1.msra.mxu0 %v446
    %1817 = vmatprep.subr.mxu0 %v415
    %1818 = vmatpush1.msra.mxu0 %v414
    %1819 = vmatprep.subr.mxu0 %v383
    %1820 = vmatpush1.msra.mxu0 %v382
    %1821 = vmatprep.subr.mxu0 %v351
    %1822 = vmatpush1.msra.mxu0 %v350
    %1823 = vmatprep.subr.mxu0 %v319
    %1824 = vmatpush1.msra.mxu0 %v318
    %1825 = vmatprep.subr.mxu0 0.0
    %1826 = vmatpush2.msra.mxu0 0.0
    %1827 = vmatprep.subr.mxu0 0.0
    %1828 = vmatpush2.msra.mxu0 0.0
    %1829 = vmatprep.subr.mxu0 0.0
    %1830 = vmatpush2.msra.mxu0 0.0
    %1831 = vmatprep.subr.mxu0 0.0
    %1832 = vmatpush2.msra.mxu0 0.0
    %1833 = vmatprep.subr.mxu0 0.0
    %1834 = vmatpush2.msra.mxu0 0.0
    %1835 = vmatprep.subr.mxu0 0.0
    %1836 = vmatpush2.msra.mxu0 0.0
    %1837 = vmatprep.subr.mxu0 0.0
    %1838 = vmatpush2.msra.mxu0 0.0
    %1839 = vmatprep.subr.mxu0 0.0
    %1840 = vmatpush2.msra.mxu0 0.0
    %1841 = vmatprep.subr.mxu0 0.0
    %1842 = vmatpush2.msra.mxu0 0.0
    %1843 = vmatprep.subr.mxu0 0.0
    %1844 = vmatpush2.msra.mxu0 0.0
    %1845 = vmatprep.subr.mxu0 0.0
    %1846 = vmatpush2.msra.mxu0 0.0
    %1847 = vmatprep.subr.mxu0 0.0
    %1848 = vmatpush2.msra.mxu0 0.0
    %1849 = vmatprep.subr.mxu0 0.0
    %1850 = vmatpush2.msra.mxu0 0.0
    %1851 = vmatprep.subr.mxu0 0.0
    %1852 = vmatpush2.msra.mxu0 0.0
    %1853 = vmatprep.subr.mxu0 0.0
    %1854 = vmatpush2.msra.mxu0 0.0
    %1855 = vmatprep.subr.mxu0 0.0
    %1856 = vmatpush2.msra.mxu0 0.0
    %1857 = vmatprep.mubr.f32.mxu0 0.0
    %1858 = vmatmul.mubr.f32.gmra.mxu0 %v292
    %v1859 = vpop.f32.mrf.mxu0
    %v1860 = vadd.f32 %v871, %v1859
    %v1861 = vpop.f32.mrf.mxu0
    %v1862 = vadd.f32 %v875, %v1861
    %1863 = vmatprep.mubr.f32.mxu0 0.0
    %1864 = vmatmul.mubr.f32.gmra.mxu0 %v293
    %v1865 = vpop.f32.mrf.mxu0
    %v1866 = vadd.f32 %v871, %v1865
    %v1867 = vpop.f32.mrf.mxu0
    %v1868 = vadd.f32 %v875, %v1867
    %1869 = vmatprep.mubr.f32.mxu0 0.0
    %1870 = vmatmul.mubr.f32.gmra.mxu0 %v294
    %v1871 = vpop.f32.mrf.mxu0
    %v1872 = vadd.f32 %v871, %v1871
    %v1873 = vpop.f32.mrf.mxu0
    %v1874 = vadd.f32 %v875, %v1873
    %1875 = vmatprep.mubr.f32.mxu0 0.0
    %1876 = vmatmul.mubr.f32.gmra.mxu0 %v295
    %v1877 = vpop.f32.mrf.mxu0
    %v1878 = vadd.f32 %v871, %v1877
    %v1879 = vpop.f32.mrf.mxu0
    %v1880 = vadd.f32 %v875, %v1879
    %1881 = vmatprep.mubr.f32.mxu0 0.0
    %1882 = vmatmul.mubr.f32.gmra.mxu0 %v296
    %v1883 = vpop.f32.mrf.mxu0
    %v1884 = vadd.f32 %v871, %v1883
    %v1885 = vpop.f32.mrf.mxu0
    %v1886 = vadd.f32 %v875, %v1885
    %1887 = vmatprep.mubr.f32.mxu0 0.0
    %1888 = vmatmul.mubr.f32.gmra.mxu0 %v297
    %v1889 = vpop.f32.mrf.mxu0
    %v1890 = vadd.f32 %v871, %v1889
    %v1891 = vpop.f32.mrf.mxu0
    %v1892 = vadd.f32 %v875, %v1891
    %1893 = vmatprep.mubr.f32.mxu0 0.0
    %1894 = vmatmul.mubr.f32.gmra.mxu0 %v298
    %v1895 = vpop.f32.mrf.mxu0
    %v1896 = vadd.f32 %v871, %v1895
    %v1897 = vpop.f32.mrf.mxu0
    %v1898 = vadd.f32 %v875, %v1897
    %1899 = vmatprep.mubr.f32.mxu0 0.0
    %1900 = vmatmul.mubr.f32.gmra.mxu0 %v299
    %v1901 = vpop.f32.mrf.mxu0
    %v1902 = vadd.f32 %v871, %v1901
    %v1903 = vpop.f32.mrf.mxu0
    %v1904 = vadd.f32 %v875, %v1903
    %1905 = vmatprep.mubr.f32.mxu0 0.0
    %1906 = vmatmul.mubr.f32.gmra.mxu0 %v300
    %v1907 = vpop.f32.mrf.mxu0
    %v1908 = vadd.f32 %v871, %v1907
    %v1909 = vpop.f32.mrf.mxu0
    %v1910 = vadd.f32 %v875, %v1909
    %1911 = vmatprep.mubr.f32.mxu0 0.0
    %1912 = vmatmul.mubr.f32.gmra.mxu0 %v301
    %v1913 = vpop.f32.mrf.mxu0
    %v1914 = vadd.f32 %v871, %v1913
    %v1915 = vpop.f32.mrf.mxu0
    %v1916 = vadd.f32 %v875, %v1915
    %1917 = vmatprep.mubr.f32.mxu0 0.0
    %1918 = vmatmul.mubr.f32.gmra.mxu0 %v302
    %v1919 = vpop.f32.mrf.mxu0
    %v1920 = vadd.f32 %v871, %v1919
    %v1921 = vpop.f32.mrf.mxu0
    %v1922 = vadd.f32 %v875, %v1921
    %1923 = vmatprep.mubr.f32.mxu0 0.0
    %1924 = vmatmul.mubr.f32.gmra.mxu0 %v303
    %v1925 = vpop.f32.mrf.mxu0
    %v1926 = vadd.f32 %v871, %v1925
    %v1927 = vpop.f32.mrf.mxu0
    %v1928 = vadd.f32 %v875, %v1927
    %1929 = vmatprep.mubr.f32.mxu0 0.0
    %1930 = vmatmul.mubr.f32.gmra.mxu0 %v304
    %v1931 = vpop.f32.mrf.mxu0
    %v1932 = vadd.f32 %v871, %v1931
    %v1933 = vpop.f32.mrf.mxu0
    %v1934 = vadd.f32 %v875, %v1933
    %1935 = vmatprep.mubr.f32.mxu0 0.0
    %1936 = vmatmul.mubr.f32.gmra.mxu0 %v305
    %v1937 = vpop.f32.mrf.mxu0
    %v1938 = vadd.f32 %v871, %v1937
    %v1939 = vpop.f32.mrf.mxu0
    %v1940 = vadd.f32 %v875, %v1939
    %1941 = vmatprep.mubr.f32.mxu0 0.0
    %1942 = vmatmul.mubr.f32.gmra.mxu0 %v306
    %v1943 = vpop.f32.mrf.mxu0
    %v1944 = vadd.f32 %v871, %v1943
    %v1945 = vpop.f32.mrf.mxu0
    %v1946 = vadd.f32 %v875, %v1945
    %1947 = vmatprep.mubr.f32.mxu0 0.0
    %1948 = vmatmul.mubr.f32.gmra.mxu0 %v307
    %v1949 = vpop.f32.mrf.mxu0
    %v1950 = vadd.f32 %v871, %v1949
    %v1951 = vpop.f32.mrf.mxu0
    %v1952 = vadd.f32 %v875, %v1951
    %1953 = vdwg.mxu0
    %1954 = vmatprep.subr.mxu0 %v801
    %1955 = vmatpush1.msra.mxu0 %v800
    %1956 = vmatprep.subr.mxu0 %v769
    %1957 = vmatpush1.msra.mxu0 %v768
    %1958 = vmatprep.subr.mxu0 %v737
    %1959 = vmatpush1.msra.mxu0 %v736
    %1960 = vmatprep.subr.mxu0 %v705
    %1961 = vmatpush1.msra.mxu0 %v704
    %1962 = vmatprep.subr.mxu0 %v673
    %1963 = vmatpush1.msra.mxu0 %v672
    %1964 = vmatprep.subr.mxu0 %v641
    %1965 = vmatpush1.msra.mxu0 %v640
    %1966 = vmatprep.subr.mxu0 %v609
    %1967 = vmatpush1.msra.mxu0 %v608
    %1968 = vmatprep.subr.mxu0 %v577
    %1969 = vmatpush1.msra.mxu0 %v576
    %1970 = vmatprep.subr.mxu0 %v545
    %1971 = vmatpush1.msra.mxu0 %v544
    %1972 = vmatprep.subr.mxu0 %v513
    %1973 = vmatpush1.msra.mxu0 %v512
    %1974 = vmatprep.subr.mxu0 %v481
    %1975 = vmatpush1.msra.mxu0 %v480
    %1976 = vmatprep.subr.mxu0 %v449
    %1977 = vmatpush1.msra.mxu0 %v448
    %1978 = vmatprep.subr.mxu0 %v417
    %1979 = vmatpush1.msra.mxu0 %v416
    %1980 = vmatprep.subr.mxu0 %v385
    %1981 = vmatpush1.msra.mxu0 %v384
    %1982 = vmatprep.subr.mxu0 %v353
    %1983 = vmatpush1.msra.mxu0 %v352
    %1984 = vmatprep.subr.mxu0 %v321
    %1985 = vmatpush1.msra.mxu0 %v320
    %1986 = vmatprep.subr.mxu0 0.0
    %1987 = vmatpush2.msra.mxu0 0.0
    %1988 = vmatprep.subr.mxu0 0.0
    %1989 = vmatpush2.msra.mxu0 0.0
    %1990 = vmatprep.subr.mxu0 0.0
    %1991 = vmatpush2.msra.mxu0 0.0
    %1992 = vmatprep.subr.mxu0 0.0
    %1993 = vmatpush2.msra.mxu0 0.0
    %1994 = vmatprep.subr.mxu0 0.0
    %1995 = vmatpush2.msra.mxu0 0.0
    %1996 = vmatprep.subr.mxu0 0.0
    %1997 = vmatpush2.msra.mxu0 0.0
    %1998 = vmatprep.subr.mxu0 0.0
    %1999 = vmatpush2.msra.mxu0 0.0
    %2000 = vmatprep.subr.mxu0 0.0
    %2001 = vmatpush2.msra.mxu0 0.0
    %2002 = vmatprep.subr.mxu0 0.0
    %2003 = vmatpush2.msra.mxu0 0.0
    %2004 = vmatprep.subr.mxu0 0.0
    %2005 = vmatpush2.msra.mxu0 0.0
    %2006 = vmatprep.subr.mxu0 0.0
    %2007 = vmatpush2.msra.mxu0 0.0
    %2008 = vmatprep.subr.mxu0 0.0
    %2009 = vmatpush2.msra.mxu0 0.0
    %2010 = vmatprep.subr.mxu0 0.0
    %2011 = vmatpush2.msra.mxu0 0.0
    %2012 = vmatprep.subr.mxu0 0.0
    %2013 = vmatpush2.msra.mxu0 0.0
    %2014 = vmatprep.subr.mxu0 0.0
    %2015 = vmatpush2.msra.mxu0 0.0
    %2016 = vmatprep.subr.mxu0 0.0
    %2017 = vmatpush2.msra.mxu0 0.0
    %2018 = vmatprep.mubr.f32.mxu0 0.0
    %2019 = vmatmul.mubr.f32.gmra.mxu0 %v292
    %v2020 = vpop.f32.mrf.mxu0
    %v2021 = vadd.f32 %v879, %v2020
    %v2022 = vpop.f32.mrf.mxu0
    %v2023 = vadd.f32 %v883, %v2022
    %2024 = vmatprep.mubr.f32.mxu0 0.0
    %2025 = vmatmul.mubr.f32.gmra.mxu0 %v293
    %v2026 = vpop.f32.mrf.mxu0
    %v2027 = vadd.f32 %v879, %v2026
    %v2028 = vpop.f32.mrf.mxu0
    %v2029 = vadd.f32 %v883, %v2028
    %2030 = vmatprep.mubr.f32.mxu0 0.0
    %2031 = vmatmul.mubr.f32.gmra.mxu0 %v294
    %v2032 = vpop.f32.mrf.mxu0
    %v2033 = vadd.f32 %v879, %v2032
    %v2034 = vpop.f32.mrf.mxu0
    %v2035 = vadd.f32 %v883, %v2034
    %2036 = vmatprep.mubr.f32.mxu0 0.0
    %2037 = vmatmul.mubr.f32.gmra.mxu0 %v295
    %v2038 = vpop.f32.mrf.mxu0
    %v2039 = vadd.f32 %v879, %v2038
    %v2040 = vpop.f32.mrf.mxu0
    %v2041 = vadd.f32 %v883, %v2040
    %2042 = vmatprep.mubr.f32.mxu0 0.0
    %2043 = vmatmul.mubr.f32.gmra.mxu0 %v296
    %v2044 = vpop.f32.mrf.mxu0
    %v2045 = vadd.f32 %v879, %v2044
    %v2046 = vpop.f32.mrf.mxu0
    %v2047 = vadd.f32 %v883, %v2046
    %2048 = vmatprep.mubr.f32.mxu0 0.0
    %2049 = vmatmul.mubr.f32.gmra.mxu0 %v297
    %v2050 = vpop.f32.mrf.mxu0
    %v2051 = vadd.f32 %v879, %v2050
    %v2052 = vpop.f32.mrf.mxu0
    %v2053 = vadd.f32 %v883, %v2052
    %2054 = vmatprep.mubr.f32.mxu0 0.0
    %2055 = vmatmul.mubr.f32.gmra.mxu0 %v298
    %v2056 = vpop.f32.mrf.mxu0
    %v2057 = vadd.f32 %v879, %v2056
    %v2058 = vpop.f32.mrf.mxu0
    %v2059 = vadd.f32 %v883, %v2058
    %2060 = vmatprep.mubr.f32.mxu0 0.0
    %2061 = vmatmul.mubr.f32.gmra.mxu0 %v299
    %v2062 = vpop.f32.mrf.mxu0
    %v2063 = vadd.f32 %v879, %v2062
    %v2064 = vpop.f32.mrf.mxu0
    %v2065 = vadd.f32 %v883, %v2064
    %2066 = vmatprep.mubr.f32.mxu0 0.0
    %2067 = vmatmul.mubr.f32.gmra.mxu0 %v300
    %v2068 = vpop.f32.mrf.mxu0
    %v2069 = vadd.f32 %v879, %v2068
    %v2070 = vpop.f32.mrf.mxu0
    %v2071 = vadd.f32 %v883, %v2070
    %2072 = vmatprep.mubr.f32.mxu0 0.0
    %2073 = vmatmul.mubr.f32.gmra.mxu0 %v301
    %v2074 = vpop.f32.mrf.mxu0
    %v2075 = vadd.f32 %v879, %v2074
    %v2076 = vpop.f32.mrf.mxu0
    %v2077 = vadd.f32 %v883, %v2076
    %2078 = vmatprep.mubr.f32.mxu0 0.0
    %2079 = vmatmul.mubr.f32.gmra.mxu0 %v302
    %v2080 = vpop.f32.mrf.mxu0
    %v2081 = vadd.f32 %v879, %v2080
    %v2082 = vpop.f32.mrf.mxu0
    %v2083 = vadd.f32 %v883, %v2082
    %2084 = vmatprep.mubr.f32.mxu0 0.0
    %2085 = vmatmul.mubr.f32.gmra.mxu0 %v303
    %v2086 = vpop.f32.mrf.mxu0
    %v2087 = vadd.f32 %v879, %v2086
    %v2088 = vpop.f32.mrf.mxu0
    %v2089 = vadd.f32 %v883, %v2088
    %2090 = vmatprep.mubr.f32.mxu0 0.0
    %2091 = vmatmul.mubr.f32.gmra.mxu0 %v304
    %v2092 = vpop.f32.mrf.mxu0
    %v2093 = vadd.f32 %v879, %v2092
    %v2094 = vpop.f32.mrf.mxu0
    %v2095 = vadd.f32 %v883, %v2094
    %2096 = vmatprep.mubr.f32.mxu0 0.0
    %2097 = vmatmul.mubr.f32.gmra.mxu0 %v305
    %v2098 = vpop.f32.mrf.mxu0
    %v2099 = vadd.f32 %v879, %v2098
    %v2100 = vpop.f32.mrf.mxu0
    %v2101 = vadd.f32 %v883, %v2100
    %2102 = vmatprep.mubr.f32.mxu0 0.0
    %2103 = vmatmul.mubr.f32.gmra.mxu0 %v306
    %v2104 = vpop.f32.mrf.mxu0
    %v2105 = vadd.f32 %v879, %v2104
    %v2106 = vpop.f32.mrf.mxu0
    %v2107 = vadd.f32 %v883, %v2106
    %2108 = vmatprep.mubr.f32.mxu0 0.0
    %2109 = vmatmul.mubr.f32.gmra.mxu0 %v307
    %v2110 = vpop.f32.mrf.mxu0
    %v2111 = vadd.f32 %v879, %v2110
    %v2112 = vpop.f32.mrf.mxu0
    %v2113 = vadd.f32 %v883, %v2112
    %2114 = vdwg.mxu0
    %2115 = vmatprep.subr.mxu0 %v803
    %2116 = vmatpush1.msra.mxu0 %v802
    %2117 = vmatprep.subr.mxu0 %v771
    %2118 = vmatpush1.msra.mxu0 %v770
    %2119 = vmatprep.subr.mxu0 %v739
    %2120 = vmatpush1.msra.mxu0 %v738
    %2121 = vmatprep.subr.mxu0 %v707
    %2122 = vmatpush1.msra.mxu0 %v706
    %2123 = vmatprep.subr.mxu0 %v675
    %2124 = vmatpush1.msra.mxu0 %v674
    %2125 = vmatprep.subr.mxu0 %v643
    %2126 = vmatpush1.msra.mxu0 %v642
    %2127 = vmatprep.subr.mxu0 %v611
    %2128 = vmatpush1.msra.mxu0 %v610
    %2129 = vmatprep.subr.mxu0 %v579
    %2130 = vmatpush1.msra.mxu0 %v578
    %2131 = vmatprep.subr.mxu0 %v547
    %2132 = vmatpush1.msra.mxu0 %v546
    %2133 = vmatprep.subr.mxu0 %v515
    %2134 = vmatpush1.msra.mxu0 %v514
    %2135 = vmatprep.subr.mxu0 %v483
    %2136 = vmatpush1.msra.mxu0 %v482
    %2137 = vmatprep.subr.mxu0 %v451
    %2138 = vmatpush1.msra.mxu0 %v450
    %2139 = vmatprep.subr.mxu0 %v419
    %2140 = vmatpush1.msra.mxu0 %v418
    %2141 = vmatprep.subr.mxu0 %v387
    %2142 = vmatpush1.msra.mxu0 %v386
    %2143 = vmatprep.subr.mxu0 %v355
    %2144 = vmatpush1.msra.mxu0 %v354
    %2145 = vmatprep.subr.mxu0 %v323
    %2146 = vmatpush1.msra.mxu0 %v322
    %2147 = vmatprep.subr.mxu0 0.0
    %2148 = vmatpush2.msra.mxu0 0.0
    %2149 = vmatprep.subr.mxu0 0.0
    %2150 = vmatpush2.msra.mxu0 0.0
    %2151 = vmatprep.subr.mxu0 0.0
    %2152 = vmatpush2.msra.mxu0 0.0
    %2153 = vmatprep.subr.mxu0 0.0
    %2154 = vmatpush2.msra.mxu0 0.0
    %2155 = vmatprep.subr.mxu0 0.0
    %2156 = vmatpush2.msra.mxu0 0.0
    %2157 = vmatprep.subr.mxu0 0.0
    %2158 = vmatpush2.msra.mxu0 0.0
    %2159 = vmatprep.subr.mxu0 0.0
    %2160 = vmatpush2.msra.mxu0 0.0
    %2161 = vmatprep.subr.mxu0 0.0
    %2162 = vmatpush2.msra.mxu0 0.0
    %2163 = vmatprep.subr.mxu0 0.0
    %2164 = vmatpush2.msra.mxu0 0.0
    %2165 = vmatprep.subr.mxu0 0.0
    %2166 = vmatpush2.msra.mxu0 0.0
    %2167 = vmatprep.subr.mxu0 0.0
    %2168 = vmatpush2.msra.mxu0 0.0
    %2169 = vmatprep.subr.mxu0 0.0
    %2170 = vmatpush2.msra.mxu0 0.0
    %2171 = vmatprep.subr.mxu0 0.0
    %2172 = vmatpush2.msra.mxu0 0.0
    %2173 = vmatprep.subr.mxu0 0.0
    %2174 = vmatpush2.msra.mxu0 0.0
    %2175 = vmatprep.subr.mxu0 0.0
    %2176 = vmatpush2.msra.mxu0 0.0
    %2177 = vmatprep.subr.mxu0 0.0
    %2178 = vmatpush2.msra.mxu0 0.0
    %2179 = vmatprep.mubr.f32.mxu0 0.0
    %2180 = vmatmul.mubr.f32.gmra.mxu0 %v292
    %v2181 = vpop.f32.mrf.mxu0
    %v2182 = vadd.f32 %v887, %v2181
    %v2183 = vpop.f32.mrf.mxu0
    %v2184 = vadd.f32 %v891, %v2183
    %2185 = vmatprep.mubr.f32.mxu0 0.0
    %2186 = vmatmul.mubr.f32.gmra.mxu0 %v293
    %v2187 = vpop.f32.mrf.mxu0
    %v2188 = vadd.f32 %v887, %v2187
    %v2189 = vpop.f32.mrf.mxu0
    %v2190 = vadd.f32 %v891, %v2189
    %2191 = vmatprep.mubr.f32.mxu0 0.0
    %2192 = vmatmul.mubr.f32.gmra.mxu0 %v294
    %v2193 = vpop.f32.mrf.mxu0
    %v2194 = vadd.f32 %v887, %v2193
    %v2195 = vpop.f32.mrf.mxu0
    %v2196 = vadd.f32 %v891, %v2195
    %2197 = vmatprep.mubr.f32.mxu0 0.0
    %2198 = vmatmul.mubr.f32.gmra.mxu0 %v295
    %v2199 = vpop.f32.mrf.mxu0
    %v2200 = vadd.f32 %v887, %v2199
    %v2201 = vpop.f32.mrf.mxu0
    %v2202 = vadd.f32 %v891, %v2201
    %2203 = vmatprep.mubr.f32.mxu0 0.0
    %2204 = vmatmul.mubr.f32.gmra.mxu0 %v296
    %v2205 = vpop.f32.mrf.mxu0
    %v2206 = vadd.f32 %v887, %v2205
    %v2207 = vpop.f32.mrf.mxu0
    %v2208 = vadd.f32 %v891, %v2207
    %2209 = vmatprep.mubr.f32.mxu0 0.0
    %2210 = vmatmul.mubr.f32.gmra.mxu0 %v297
    %v2211 = vpop.f32.mrf.mxu0
    %v2212 = vadd.f32 %v887, %v2211
    %v2213 = vpop.f32.mrf.mxu0
    %v2214 = vadd.f32 %v891, %v2213
    %2215 = vmatprep.mubr.f32.mxu0 0.0
    %2216 = vmatmul.mubr.f32.gmra.mxu0 %v298
    %v2217 = vpop.f32.mrf.mxu0
    %v2218 = vadd.f32 %v887, %v2217
    %v2219 = vpop.f32.mrf.mxu0
    %v2220 = vadd.f32 %v891, %v2219
    %2221 = vmatprep.mubr.f32.mxu0 0.0
    %2222 = vmatmul.mubr.f32.gmra.mxu0 %v299
    %v2223 = vpop.f32.mrf.mxu0
    %v2224 = vadd.f32 %v887, %v2223
    %v2225 = vpop.f32.mrf.mxu0
    %v2226 = vadd.f32 %v891, %v2225
    %2227 = vmatprep.mubr.f32.mxu0 0.0
    %2228 = vmatmul.mubr.f32.gmra.mxu0 %v300
    %v2229 = vpop.f32.mrf.mxu0
    %v2230 = vadd.f32 %v887, %v2229
    %v2231 = vpop.f32.mrf.mxu0
    %v2232 = vadd.f32 %v891, %v2231
    %2233 = vmatprep.mubr.f32.mxu0 0.0
    %2234 = vmatmul.mubr.f32.gmra.mxu0 %v301
    %v2235 = vpop.f32.mrf.mxu0
    %v2236 = vadd.f32 %v887, %v2235
    %v2237 = vpop.f32.mrf.mxu0
    %v2238 = vadd.f32 %v891, %v2237
    %2239 = vmatprep.mubr.f32.mxu0 0.0
    %2240 = vmatmul.mubr.f32.gmra.mxu0 %v302
    %v2241 = vpop.f32.mrf.mxu0
    %v2242 = vadd.f32 %v887, %v2241
    %v2243 = vpop.f32.mrf.mxu0
    %v2244 = vadd.f32 %v891, %v2243
    %2245 = vmatprep.mubr.f32.mxu0 0.0
    %2246 = vmatmul.mubr.f32.gmra.mxu0 %v303
    %v2247 = vpop.f32.mrf.mxu0
    %v2248 = vadd.f32 %v887, %v2247
    %v2249 = vpop.f32.mrf.mxu0
    %v2250 = vadd.f32 %v891, %v2249
    %2251 = vmatprep.mubr.f32.mxu0 0.0
    %2252 = vmatmul.mubr.f32.gmra.mxu0 %v304
    %v2253 = vpop.f32.mrf.mxu0
    %v2254 = vadd.f32 %v887, %v2253
    %v2255 = vpop.f32.mrf.mxu0
    %v2256 = vadd.f32 %v891, %v2255
    %2257 = vmatprep.mubr.f32.mxu0 0.0
    %2258 = vmatmul.mubr.f32.gmra.mxu0 %v305
    %v2259 = vpop.f32.mrf.mxu0
    %v2260 = vadd.f32 %v887, %v2259
    %v2261 = vpop.f32.mrf.mxu0
    %v2262 = vadd.f32 %v891, %v2261
    %2263 = vmatprep.mubr.f32.mxu0 0.0
    %2264 = vmatmul.mubr.f32.gmra.mxu0 %v306
    %v2265 = vpop.f32.mrf.mxu0
    %v2266 = vadd.f32 %v887, %v2265
    %v2267 = vpop.f32.mrf.mxu0
    %v2268 = vadd.f32 %v891, %v2267
    %2269 = vmatprep.mubr.f32.mxu0 0.0
    %2270 = vmatmul.mubr.f32.gmra.mxu0 %v307
    %v2271 = vpop.f32.mrf.mxu0
    %v2272 = vadd.f32 %v887, %v2271
    %v2273 = vpop.f32.mrf.mxu0
    %v2274 = vadd.f32 %v891, %v2273
    %2275 = vdwg.mxu0
    %2276 = vmatprep.subr.mxu0 %v805
    %2277 = vmatpush1.msra.mxu0 %v804
    %2278 = vmatprep.subr.mxu0 %v773
    %2279 = vmatpush1.msra.mxu0 %v772
    %2280 = vmatprep.subr.mxu0 %v741
    %2281 = vmatpush1.msra.mxu0 %v740
    %2282 = vmatprep.subr.mxu0 %v709
    %2283 = vmatpush1.msra.mxu0 %v708
    %2284 = vmatprep.subr.mxu0 %v677
    %2285 = vmatpush1.msra.mxu0 %v676
    %2286 = vmatprep.subr.mxu0 %v645
    %2287 = vmatpush1.msra.mxu0 %v644
    %2288 = vmatprep.subr.mxu0 %v613
    %2289 = vmatpush1.msra.mxu0 %v612
    %2290 = vmatprep.subr.mxu0 %v581
    %2291 = vmatpush1.msra.mxu0 %v580
    %2292 = vmatprep.subr.mxu0 %v549
    %2293 = vmatpush1.msra.mxu0 %v548
    %2294 = vmatprep.subr.mxu0 %v517
    %2295 = vmatpush1.msra.mxu0 %v516
    %2296 = vmatprep.subr.mxu0 %v485
    %2297 = vmatpush1.msra.mxu0 %v484
    %2298 = vmatprep.subr.mxu0 %v453
    %2299 = vmatpush1.msra.mxu0 %v452
    %2300 = vmatprep.subr.mxu0 %v421
    %2301 = vmatpush1.msra.mxu0 %v420
    %2302 = vmatprep.subr.mxu0 %v389
    %2303 = vmatpush1.msra.mxu0 %v388
    %2304 = vmatprep.subr.mxu0 %v357
    %2305 = vmatpush1.msra.mxu0 %v356
    %2306 = vmatprep.subr.mxu0 %v325
    %2307 = vmatpush1.msra.mxu0 %v324
    %2308 = vmatprep.subr.mxu0 0.0
    %2309 = vmatpush2.msra.mxu0 0.0
    %2310 = vmatprep.subr.mxu0 0.0
    %2311 = vmatpush2.msra.mxu0 0.0
    %2312 = vmatprep.subr.mxu0 0.0
    %2313 = vmatpush2.msra.mxu0 0.0
    %2314 = vmatprep.subr.mxu0 0.0
    %2315 = vmatpush2.msra.mxu0 0.0
    %2316 = vmatprep.subr.mxu0 0.0
    %2317 = vmatpush2.msra.mxu0 0.0
    %2318 = vmatprep.subr.mxu0 0.0
    %2319 = vmatpush2.msra.mxu0 0.0
    %2320 = vmatprep.subr.mxu0 0.0
    %2321 = vmatpush2.msra.mxu0 0.0
    %2322 = vmatprep.subr.mxu0 0.0
    %2323 = vmatpush2.msra.mxu0 0.0
    %2324 = vmatprep.subr.mxu0 0.0
    %2325 = vmatpush2.msra.mxu0 0.0
    %2326 = vmatprep.subr.mxu0 0.0
    %2327 = vmatpush2.msra.mxu0 0.0
    %2328 = vmatprep.subr.mxu0 0.0
    %2329 = vmatpush2.msra.mxu0 0.0
    %2330 = vmatprep.subr.mxu0 0.0
    %2331 = vmatpush2.msra.mxu0 0.0
    %2332 = vmatprep.subr.mxu0 0.0
    %2333 = vmatpush2.msra.mxu0 0.0
    %2334 = vmatprep.subr.mxu0 0.0
    %2335 = vmatpush2.msra.mxu0 0.0
    %2336 = vmatprep.subr.mxu0 0.0
    %2337 = vmatpush2.msra.mxu0 0.0
    %2338 = vmatprep.subr.mxu0 0.0
    %2339 = vmatpush2.msra.mxu0 0.0
    %2340 = vmatprep.mubr.f32.mxu0 0.0
    %2341 = vmatmul.mubr.f32.gmra.mxu0 %v292
    %v2342 = vpop.f32.mrf.mxu0
    %v2343 = vadd.f32 %v895, %v2342
    %v2344 = vpop.f32.mrf.mxu0
    %v2345 = vadd.f32 %v899, %v2344
    %2346 = vmatprep.mubr.f32.mxu0 0.0
    %2347 = vmatmul.mubr.f32.gmra.mxu0 %v293
    %v2348 = vpop.f32.mrf.mxu0
    %v2349 = vadd.f32 %v895, %v2348
    %v2350 = vpop.f32.mrf.mxu0
    %v2351 = vadd.f32 %v899, %v2350
    %2352 = vmatprep.mubr.f32.mxu0 0.0
    %2353 = vmatmul.mubr.f32.gmra.mxu0 %v294
    %v2354 = vpop.f32.mrf.mxu0
    %v2355 = vadd.f32 %v895, %v2354
    %v2356 = vpop.f32.mrf.mxu0
    %v2357 = vadd.f32 %v899, %v2356
    %2358 = vmatprep.mubr.f32.mxu0 0.0
    %2359 = vmatmul.mubr.f32.gmra.mxu0 %v295
    %v2360 = vpop.f32.mrf.mxu0
    %v2361 = vadd.f32 %v895, %v2360
    %v2362 = vpop.f32.mrf.mxu0
    %v2363 = vadd.f32 %v899, %v2362
    %2364 = vmatprep.mubr.f32.mxu0 0.0
    %2365 = vmatmul.mubr.f32.gmra.mxu0 %v296
    %v2366 = vpop.f32.mrf.mxu0
    %v2367 = vadd.f32 %v895, %v2366
    %v2368 = vpop.f32.mrf.mxu0
    %v2369 = vadd.f32 %v899, %v2368
    %2370 = vmatprep.mubr.f32.mxu0 0.0
    %2371 = vmatmul.mubr.f32.gmra.mxu0 %v297
    %v2372 = vpop.f32.mrf.mxu0
    %v2373 = vadd.f32 %v895, %v2372
    %v2374 = vpop.f32.mrf.mxu0
    %v2375 = vadd.f32 %v899, %v2374
    %2376 = vmatprep.mubr.f32.mxu0 0.0
    %2377 = vmatmul.mubr.f32.gmra.mxu0 %v298
    %v2378 = vpop.f32.mrf.mxu0
    %v2379 = vadd.f32 %v895, %v2378
    %v2380 = vpop.f32.mrf.mxu0
    %v2381 = vadd.f32 %v899, %v2380
    %2382 = vmatprep.mubr.f32.mxu0 0.0
    %2383 = vmatmul.mubr.f32.gmra.mxu0 %v299
    %v2384 = vpop.f32.mrf.mxu0
    %v2385 = vadd.f32 %v895, %v2384
    %v2386 = vpop.f32.mrf.mxu0
    %v2387 = vadd.f32 %v899, %v2386
    %2388 = vmatprep.mubr.f32.mxu0 0.0
    %2389 = vmatmul.mubr.f32.gmra.mxu0 %v300
    %v2390 = vpop.f32.mrf.mxu0
    %v2391 = vadd.f32 %v895, %v2390
    %v2392 = vpop.f32.mrf.mxu0
    %v2393 = vadd.f32 %v899, %v2392
    %2394 = vmatprep.mubr.f32.mxu0 0.0
    %2395 = vmatmul.mubr.f32.gmra.mxu0 %v301
    %v2396 = vpop.f32.mrf.mxu0
    %v2397 = vadd.f32 %v895, %v2396
    %v2398 = vpop.f32.mrf.mxu0
    %v2399 = vadd.f32 %v899, %v2398
    %2400 = vmatprep.mubr.f32.mxu0 0.0
    %2401 = vmatmul.mubr.f32.gmra.mxu0 %v302
    %v2402 = vpop.f32.mrf.mxu0
    %v2403 = vadd.f32 %v895, %v2402
    %v2404 = vpop.f32.mrf.mxu0
    %v2405 = vadd.f32 %v899, %v2404
    %2406 = vmatprep.mubr.f32.mxu0 0.0
    %2407 = vmatmul.mubr.f32.gmra.mxu0 %v303
    %v2408 = vpop.f32.mrf.mxu0
    %v2409 = vadd.f32 %v895, %v2408
    %v2410 = vpop.f32.mrf.mxu0
    %v2411 = vadd.f32 %v899, %v2410
    %2412 = vmatprep.mubr.f32.mxu0 0.0
    %2413 = vmatmul.mubr.f32.gmra.mxu0 %v304
    %v2414 = vpop.f32.mrf.mxu0
    %v2415 = vadd.f32 %v895, %v2414
    %v2416 = vpop.f32.mrf.mxu0
    %v2417 = vadd.f32 %v899, %v2416
    %2418 = vmatprep.mubr.f32.mxu0 0.0
    %2419 = vmatmul.mubr.f32.gmra.mxu0 %v305
    %v2420 = vpop.f32.mrf.mxu0
    %v2421 = vadd.f32 %v895, %v2420
    %v2422 = vpop.f32.mrf.mxu0
    %v2423 = vadd.f32 %v899, %v2422
    %2424 = vmatprep.mubr.f32.mxu0 0.0
    %2425 = vmatmul.mubr.f32.gmra.mxu0 %v306
    %v2426 = vpop.f32.mrf.mxu0
    %v2427 = vadd.f32 %v895, %v2426
    %v2428 = vpop.f32.mrf.mxu0
    %v2429 = vadd.f32 %v899, %v2428
    %2430 = vmatprep.mubr.f32.mxu0 0.0
    %2431 = vmatmul.mubr.f32.gmra.mxu0 %v307
    %v2432 = vpop.f32.mrf.mxu0
    %v2433 = vadd.f32 %v895, %v2432
    %v2434 = vpop.f32.mrf.mxu0
    %v2435 = vadd.f32 %v899, %v2434
    %2436 = vdwg.mxu0
    %2437 = vmatprep.subr.mxu0 %v807
    %2438 = vmatpush1.msra.mxu0 %v806
    %2439 = vmatprep.subr.mxu0 %v775
    %2440 = vmatpush1.msra.mxu0 %v774
    %2441 = vmatprep.subr.mxu0 %v743
    %2442 = vmatpush1.msra.mxu0 %v742
    %2443 = vmatprep.subr.mxu0 %v711
    %2444 = vmatpush1.msra.mxu0 %v710
    %2445 = vmatprep.subr.mxu0 %v679
    %2446 = vmatpush1.msra.mxu0 %v678
    %2447 = vmatprep.subr.mxu0 %v647
    %2448 = vmatpush1.msra.mxu0 %v646
    %2449 = vmatprep.subr.mxu0 %v615
    %2450 = vmatpush1.msra.mxu0 %v614
    %2451 = vmatprep.subr.mxu0 %v583
    %2452 = vmatpush1.msra.mxu0 %v582
    %2453 = vmatprep.subr.mxu0 %v551
    %2454 = vmatpush1.msra.mxu0 %v550
    %2455 = vmatprep.subr.mxu0 %v519
    %2456 = vmatpush1.msra.mxu0 %v518
    %2457 = vmatprep.subr.mxu0 %v487
    %2458 = vmatpush1.msra.mxu0 %v486
    %2459 = vmatprep.subr.mxu0 %v455
    %2460 = vmatpush1.msra.mxu0 %v454
    %2461 = vmatprep.subr.mxu0 %v423
    %2462 = vmatpush1.msra.mxu0 %v422
    %2463 = vmatprep.subr.mxu0 %v391
    %2464 = vmatpush1.msra.mxu0 %v390
    %2465 = vmatprep.subr.mxu0 %v359
    %2466 = vmatpush1.msra.mxu0 %v358
    %2467 = vmatprep.subr.mxu0 %v327
    %2468 = vmatpush1.msra.mxu0 %v326
    %2469 = vmatprep.subr.mxu0 0.0
    %2470 = vmatpush2.msra.mxu0 0.0
    %2471 = vmatprep.subr.mxu0 0.0
    %2472 = vmatpush2.msra.mxu0 0.0
    %2473 = vmatprep.subr.mxu0 0.0
    %2474 = vmatpush2.msra.mxu0 0.0
    %2475 = vmatprep.subr.mxu0 0.0
    %2476 = vmatpush2.msra.mxu0 0.0
    %2477 = vmatprep.subr.mxu0 0.0
    %2478 = vmatpush2.msra.mxu0 0.0
    %2479 = vmatprep.subr.mxu0 0.0
    %2480 = vmatpush2.msra.mxu0 0.0
    %2481 = vmatprep.subr.mxu0 0.0
    %2482 = vmatpush2.msra.mxu0 0.0
    %2483 = vmatprep.subr.mxu0 0.0
    %2484 = vmatpush2.msra.mxu0 0.0
    %2485 = vmatprep.subr.mxu0 0.0
    %2486 = vmatpush2.msra.mxu0 0.0
    %2487 = vmatprep.subr.mxu0 0.0
    %2488 = vmatpush2.msra.mxu0 0.0
    %2489 = vmatprep.subr.mxu0 0.0
    %2490 = vmatpush2.msra.mxu0 0.0
    %2491 = vmatprep.subr.mxu0 0.0
    %2492 = vmatpush2.msra.mxu0 0.0
    %2493 = vmatprep.subr.mxu0 0.0
    %2494 = vmatpush2.msra.mxu0 0.0
    %2495 = vmatprep.subr.mxu0 0.0
    %2496 = vmatpush2.msra.mxu0 0.0
    %2497 = vmatprep.subr.mxu0 0.0
    %2498 = vmatpush2.msra.mxu0 0.0
    %2499 = vmatprep.subr.mxu0 0.0
    %2500 = vmatpush2.msra.mxu0 0.0
    %2501 = vmatprep.mubr.f32.mxu0 0.0
    %2502 = vmatmul.mubr.f32.gmra.mxu0 %v292
    %v2503 = vpop.f32.mrf.mxu0
    %v2504 = vadd.f32 %v903, %v2503
    %v2505 = vpop.f32.mrf.mxu0
    %v2506 = vadd.f32 %v907, %v2505
    %2507 = vmatprep.mubr.f32.mxu0 0.0
    %2508 = vmatmul.mubr.f32.gmra.mxu0 %v293
    %v2509 = vpop.f32.mrf.mxu0
    %v2510 = vadd.f32 %v903, %v2509
    %v2511 = vpop.f32.mrf.mxu0
    %v2512 = vadd.f32 %v907, %v2511
    %2513 = vmatprep.mubr.f32.mxu0 0.0
    %2514 = vmatmul.mubr.f32.gmra.mxu0 %v294
    %v2515 = vpop.f32.mrf.mxu0
    %v2516 = vadd.f32 %v903, %v2515
    %v2517 = vpop.f32.mrf.mxu0
    %v2518 = vadd.f32 %v907, %v2517
    %2519 = vmatprep.mubr.f32.mxu0 0.0
    %2520 = vmatmul.mubr.f32.gmra.mxu0 %v295
    %v2521 = vpop.f32.mrf.mxu0
    %v2522 = vadd.f32 %v903, %v2521
    %v2523 = vpop.f32.mrf.mxu0
    %v2524 = vadd.f32 %v907, %v2523
    %2525 = vmatprep.mubr.f32.mxu0 0.0
    %2526 = vmatmul.mubr.f32.gmra.mxu0 %v296
    %v2527 = vpop.f32.mrf.mxu0
    %v2528 = vadd.f32 %v903, %v2527
    %v2529 = vpop.f32.mrf.mxu0
    %v2530 = vadd.f32 %v907, %v2529
    %2531 = vmatprep.mubr.f32.mxu0 0.0
    %2532 = vmatmul.mubr.f32.gmra.mxu0 %v297
    %v2533 = vpop.f32.mrf.mxu0
    %v2534 = vadd.f32 %v903, %v2533
    %v2535 = vpop.f32.mrf.mxu0
    %v2536 = vadd.f32 %v907, %v2535
    %2537 = vmatprep.mubr.f32.mxu0 0.0
    %2538 = vmatmul.mubr.f32.gmra.mxu0 %v298
    %v2539 = vpop.f32.mrf.mxu0
    %v2540 = vadd.f32 %v903, %v2539
    %v2541 = vpop.f32.mrf.mxu0
    %v2542 = vadd.f32 %v907, %v2541
    %2543 = vmatprep.mubr.f32.mxu0 0.0
    %2544 = vmatmul.mubr.f32.gmra.mxu0 %v299
    %v2545 = vpop.f32.mrf.mxu0
    %v2546 = vadd.f32 %v903, %v2545
    %v2547 = vpop.f32.mrf.mxu0
    %v2548 = vadd.f32 %v907, %v2547
    %2549 = vmatprep.mubr.f32.mxu0 0.0
    %2550 = vmatmul.mubr.f32.gmra.mxu0 %v300
    %v2551 = vpop.f32.mrf.mxu0
    %v2552 = vadd.f32 %v903, %v2551
    %v2553 = vpop.f32.mrf.mxu0
    %v2554 = vadd.f32 %v907, %v2553
    %2555 = vmatprep.mubr.f32.mxu0 0.0
    %2556 = vmatmul.mubr.f32.gmra.mxu0 %v301
    %v2557 = vpop.f32.mrf.mxu0
    %v2558 = vadd.f32 %v903, %v2557
    %v2559 = vpop.f32.mrf.mxu0
    %v2560 = vadd.f32 %v907, %v2559
    %2561 = vmatprep.mubr.f32.mxu0 0.0
    %2562 = vmatmul.mubr.f32.gmra.mxu0 %v302
    %v2563 = vpop.f32.mrf.mxu0
    %v2564 = vadd.f32 %v903, %v2563
    %v2565 = vpop.f32.mrf.mxu0
    %v2566 = vadd.f32 %v907, %v2565
    %2567 = vmatprep.mubr.f32.mxu0 0.0
    %2568 = vmatmul.mubr.f32.gmra.mxu0 %v303
    %v2569 = vpop.f32.mrf.mxu0
    %v2570 = vadd.f32 %v903, %v2569
    %v2571 = vpop.f32.mrf.mxu0
    %v2572 = vadd.f32 %v907, %v2571
    %2573 = vmatprep.mubr.f32.mxu0 0.0
    %2574 = vmatmul.mubr.f32.gmra.mxu0 %v304
    %v2575 = vpop.f32.mrf.mxu0
    %v2576 = vadd.f32 %v903, %v2575
    %v2577 = vpop.f32.mrf.mxu0
    %v2578 = vadd.f32 %v907, %v2577
    %2579 = vmatprep.mubr.f32.mxu0 0.0
    %2580 = vmatmul.mubr.f32.gmra.mxu0 %v305
    %v2581 = vpop.f32.mrf.mxu0
    %v2582 = vadd.f32 %v903, %v2581
    %v2583 = vpop.f32.mrf.mxu0
    %v2584 = vadd.f32 %v907, %v2583
    %2585 = vmatprep.mubr.f32.mxu0 0.0
    %2586 = vmatmul.mubr.f32.gmra.mxu0 %v306
    %v2587 = vpop.f32.mrf.mxu0
    %v2588 = vadd.f32 %v903, %v2587
    %v2589 = vpop.f32.mrf.mxu0
    %v2590 = vadd.f32 %v907, %v2589
    %2591 = vmatprep.mubr.f32.mxu0 0.0
    %2592 = vmatmul.mubr.f32.gmra.mxu0 %v307
    %v2593 = vpop.f32.mrf.mxu0
    %v2594 = vadd.f32 %v903, %v2593
    %v2595 = vpop.f32.mrf.mxu0
    %v2596 = vadd.f32 %v907, %v2595
    %2597 = vdwg.mxu0
    %2598 = vmatprep.subr.mxu0 %v809
    %2599 = vmatpush1.msra.mxu0 %v808
    %2600 = vmatprep.subr.mxu0 %v777
    %2601 = vmatpush1.msra.mxu0 %v776
    %2602 = vmatprep.subr.mxu0 %v745
    %2603 = vmatpush1.msra.mxu0 %v744
    %2604 = vmatprep.subr.mxu0 %v713
    %2605 = vmatpush1.msra.mxu0 %v712
    %2606 = vmatprep.subr.mxu0 %v681
    %2607 = vmatpush1.msra.mxu0 %v680
    %2608 = vmatprep.subr.mxu0 %v649
    %2609 = vmatpush1.msra.mxu0 %v648
    %2610 = vmatprep.subr.mxu0 %v617
    %2611 = vmatpush1.msra.mxu0 %v616
    %2612 = vmatprep.subr.mxu0 %v585
    %2613 = vmatpush1.msra.mxu0 %v584
    %2614 = vmatprep.subr.mxu0 %v553
    %2615 = vmatpush1.msra.mxu0 %v552
    %2616 = vmatprep.subr.mxu0 %v521
    %2617 = vmatpush1.msra.mxu0 %v520
    %2618 = vmatprep.subr.mxu0 %v489
    %2619 = vmatpush1.msra.mxu0 %v488
    %2620 = vmatprep.subr.mxu0 %v457
    %2621 = vmatpush1.msra.mxu0 %v456
    %2622 = vmatprep.subr.mxu0 %v425
    %2623 = vmatpush1.msra.mxu0 %v424
    %2624 = vmatprep.subr.mxu0 %v393
    %2625 = vmatpush1.msra.mxu0 %v392
    %2626 = vmatprep.subr.mxu0 %v361
    %2627 = vmatpush1.msra.mxu0 %v360
    %2628 = vmatprep.subr.mxu0 %v329
    %2629 = vmatpush1.msra.mxu0 %v328
    %2630 = vmatprep.subr.mxu0 0.0
    %2631 = vmatpush2.msra.mxu0 0.0
    %2632 = vmatprep.subr.mxu0 0.0
    %2633 = vmatpush2.msra.mxu0 0.0
    %2634 = vmatprep.subr.mxu0 0.0
    %2635 = vmatpush2.msra.mxu0 0.0
    %2636 = vmatprep.subr.mxu0 0.0
    %2637 = vmatpush2.msra.mxu0 0.0
    %2638 = vmatprep.subr.mxu0 0.0
    %2639 = vmatpush2.msra.mxu0 0.0
    %2640 = vmatprep.subr.mxu0 0.0
    %2641 = vmatpush2.msra.mxu0 0.0
    %2642 = vmatprep.subr.mxu0 0.0
    %2643 = vmatpush2.msra.mxu0 0.0
    %2644 = vmatprep.subr.mxu0 0.0
    %2645 = vmatpush2.msra.mxu0 0.0
    %2646 = vmatprep.subr.mxu0 0.0
    %2647 = vmatpush2.msra.mxu0 0.0
    %2648 = vmatprep.subr.mxu0 0.0
    %2649 = vmatpush2.msra.mxu0 0.0
    %2650 = vmatprep.subr.mxu0 0.0
    %2651 = vmatpush2.msra.mxu0 0.0
    %2652 = vmatprep.subr.mxu0 0.0
    %2653 = vmatpush2.msra.mxu0 0.0
    %2654 = vmatprep.subr.mxu0 0.0
    %2655 = vmatpush2.msra.mxu0 0.0
    %2656 = vmatprep.subr.mxu0 0.0
    %2657 = vmatpush2.msra.mxu0 0.0
    %2658 = vmatprep.subr.mxu0 0.0
    %2659 = vmatpush2.msra.mxu0 0.0
    %2660 = vmatprep.subr.mxu0 0.0
    %2661 = vmatpush2.msra.mxu0 0.0
    %2662 = vmatprep.mubr.f32.mxu0 0.0
    %2663 = vmatmul.mubr.f32.gmra.mxu0 %v292
    %v2664 = vpop.f32.mrf.mxu0
    %v2665 = vadd.f32 %v911, %v2664
    %v2666 = vpop.f32.mrf.mxu0
    %v2667 = vadd.f32 %v915, %v2666
    %2668 = vmatprep.mubr.f32.mxu0 0.0
    %2669 = vmatmul.mubr.f32.gmra.mxu0 %v293
    %v2670 = vpop.f32.mrf.mxu0
    %v2671 = vadd.f32 %v911, %v2670
    %v2672 = vpop.f32.mrf.mxu0
    %v2673 = vadd.f32 %v915, %v2672
    %2674 = vmatprep.mubr.f32.mxu0 0.0
    %2675 = vmatmul.mubr.f32.gmra.mxu0 %v294
    %v2676 = vpop.f32.mrf.mxu0
    %v2677 = vadd.f32 %v911, %v2676
    %v2678 = vpop.f32.mrf.mxu0
    %v2679 = vadd.f32 %v915, %v2678
    %2680 = vmatprep.mubr.f32.mxu0 0.0
    %2681 = vmatmul.mubr.f32.gmra.mxu0 %v295
    %v2682 = vpop.f32.mrf.mxu0
    %v2683 = vadd.f32 %v911, %v2682
    %v2684 = vpop.f32.mrf.mxu0
    %v2685 = vadd.f32 %v915, %v2684
    %2686 = vmatprep.mubr.f32.mxu0 0.0
    %2687 = vmatmul.mubr.f32.gmra.mxu0 %v296
    %v2688 = vpop.f32.mrf.mxu0
    %v2689 = vadd.f32 %v911, %v2688
    %v2690 = vpop.f32.mrf.mxu0
    %v2691 = vadd.f32 %v915, %v2690
    %2692 = vmatprep.mubr.f32.mxu0 0.0
    %2693 = vmatmul.mubr.f32.gmra.mxu0 %v297
    %v2694 = vpop.f32.mrf.mxu0
    %v2695 = vadd.f32 %v911, %v2694
    %v2696 = vpop.f32.mrf.mxu0
    %v2697 = vadd.f32 %v915, %v2696
    %2698 = vmatprep.mubr.f32.mxu0 0.0
    %2699 = vmatmul.mubr.f32.gmra.mxu0 %v298
    %v2700 = vpop.f32.mrf.mxu0
    %v2701 = vadd.f32 %v911, %v2700
    %v2702 = vpop.f32.mrf.mxu0
    %v2703 = vadd.f32 %v915, %v2702
    %2704 = vmatprep.mubr.f32.mxu0 0.0
    %2705 = vmatmul.mubr.f32.gmra.mxu0 %v299
    %v2706 = vpop.f32.mrf.mxu0
    %v2707 = vadd.f32 %v911, %v2706
    %v2708 = vpop.f32.mrf.mxu0
    %v2709 = vadd.f32 %v915, %v2708
    %2710 = vmatprep.mubr.f32.mxu0 0.0
    %2711 = vmatmul.mubr.f32.gmra.mxu0 %v300
    %v2712 = vpop.f32.mrf.mxu0
    %v2713 = vadd.f32 %v911, %v2712
    %v2714 = vpop.f32.mrf.mxu0
    %v2715 = vadd.f32 %v915, %v2714
    %2716 = vmatprep.mubr.f32.mxu0 0.0
    %2717 = vmatmul.mubr.f32.gmra.mxu0 %v301
    %v2718 = vpop.f32.mrf.mxu0
    %v2719 = vadd.f32 %v911, %v2718
    %v2720 = vpop.f32.mrf.mxu0
    %v2721 = vadd.f32 %v915, %v2720
    %2722 = vmatprep.mubr.f32.mxu0 0.0
    %2723 = vmatmul.mubr.f32.gmra.mxu0 %v302
    %v2724 = vpop.f32.mrf.mxu0
    %v2725 = vadd.f32 %v911, %v2724
    %v2726 = vpop.f32.mrf.mxu0
    %v2727 = vadd.f32 %v915, %v2726
    %2728 = vmatprep.mubr.f32.mxu0 0.0
    %2729 = vmatmul.mubr.f32.gmra.mxu0 %v303
    %v2730 = vpop.f32.mrf.mxu0
    %v2731 = vadd.f32 %v911, %v2730
    %v2732 = vpop.f32.mrf.mxu0
    %v2733 = vadd.f32 %v915, %v2732
    %2734 = vmatprep.mubr.f32.mxu0 0.0
    %2735 = vmatmul.mubr.f32.gmra.mxu0 %v304
    %v2736 = vpop.f32.mrf.mxu0
    %v2737 = vadd.f32 %v911, %v2736
    %v2738 = vpop.f32.mrf.mxu0
    %v2739 = vadd.f32 %v915, %v2738
    %2740 = vmatprep.mubr.f32.mxu0 0.0
    %2741 = vmatmul.mubr.f32.gmra.mxu0 %v305
    %v2742 = vpop.f32.mrf.mxu0
    %v2743 = vadd.f32 %v911, %v2742
    %v2744 = vpop.f32.mrf.mxu0
    %v2745 = vadd.f32 %v915, %v2744
    %2746 = vmatprep.mubr.f32.mxu0 0.0
    %2747 = vmatmul.mubr.f32.gmra.mxu0 %v306
    %v2748 = vpop.f32.mrf.mxu0
    %v2749 = vadd.f32 %v911, %v2748
    %v2750 = vpop.f32.mrf.mxu0
    %v2751 = vadd.f32 %v915, %v2750
    %2752 = vmatprep.mubr.f32.mxu0 0.0
    %2753 = vmatmul.mubr.f32.gmra.mxu0 %v307
    %v2754 = vpop.f32.mrf.mxu0
    %v2755 = vadd.f32 %v911, %v2754
    %v2756 = vpop.f32.mrf.mxu0
    %v2757 = vadd.f32 %v915, %v2756
    %2758 = vdwg.mxu0
    %2759 = vmatprep.subr.mxu0 %v811
    %2760 = vmatpush1.msra.mxu0 %v810
    %2761 = vmatprep.subr.mxu0 %v779
    %2762 = vmatpush1.msra.mxu0 %v778
    %2763 = vmatprep.subr.mxu0 %v747
    %2764 = vmatpush1.msra.mxu0 %v746
    %2765 = vmatprep.subr.mxu0 %v715
    %2766 = vmatpush1.msra.mxu0 %v714
    %2767 = vmatprep.subr.mxu0 %v683
    %2768 = vmatpush1.msra.mxu0 %v682
    %2769 = vmatprep.subr.mxu0 %v651
    %2770 = vmatpush1.msra.mxu0 %v650
    %2771 = vmatprep.subr.mxu0 %v619
    %2772 = vmatpush1.msra.mxu0 %v618
    %2773 = vmatprep.subr.mxu0 %v587
    %2774 = vmatpush1.msra.mxu0 %v586
    %2775 = vmatprep.subr.mxu0 %v555
    %2776 = vmatpush1.msra.mxu0 %v554
    %2777 = vmatprep.subr.mxu0 %v523
    %2778 = vmatpush1.msra.mxu0 %v522
    %2779 = vmatprep.subr.mxu0 %v491
    %2780 = vmatpush1.msra.mxu0 %v490
    %2781 = vmatprep.subr.mxu0 %v459
    %2782 = vmatpush1.msra.mxu0 %v458
    %2783 = vmatprep.subr.mxu0 %v427
    %2784 = vmatpush1.msra.mxu0 %v426
    %2785 = vmatprep.subr.mxu0 %v395
    %2786 = vmatpush1.msra.mxu0 %v394
    %2787 = vmatprep.subr.mxu0 %v363
    %2788 = vmatpush1.msra.mxu0 %v362
    %2789 = vmatprep.subr.mxu0 %v331
    %2790 = vmatpush1.msra.mxu0 %v330
    %2791 = vmatprep.subr.mxu0 0.0
    %2792 = vmatpush2.msra.mxu0 0.0
    %2793 = vmatprep.subr.mxu0 0.0
    %2794 = vmatpush2.msra.mxu0 0.0
    %2795 = vmatprep.subr.mxu0 0.0
    %2796 = vmatpush2.msra.mxu0 0.0
    %2797 = vmatprep.subr.mxu0 0.0
    %2798 = vmatpush2.msra.mxu0 0.0
    %2799 = vmatprep.subr.mxu0 0.0
    %2800 = vmatpush2.msra.mxu0 0.0
    %2801 = vmatprep.subr.mxu0 0.0
    %2802 = vmatpush2.msra.mxu0 0.0
    %2803 = vmatprep.subr.mxu0 0.0
    %2804 = vmatpush2.msra.mxu0 0.0
    %2805 = vmatprep.subr.mxu0 0.0
    %2806 = vmatpush2.msra.mxu0 0.0
    %2807 = vmatprep.subr.mxu0 0.0
    %2808 = vmatpush2.msra.mxu0 0.0
    %2809 = vmatprep.subr.mxu0 0.0
    %2810 = vmatpush2.msra.mxu0 0.0
    %2811 = vmatprep.subr.mxu0 0.0
    %2812 = vmatpush2.msra.mxu0 0.0
    %2813 = vmatprep.subr.mxu0 0.0
    %2814 = vmatpush2.msra.mxu0 0.0
    %2815 = vmatprep.subr.mxu0 0.0
    %2816 = vmatpush2.msra.mxu0 0.0
    %2817 = vmatprep.subr.mxu0 0.0
    %2818 = vmatpush2.msra.mxu0 0.0
    %2819 = vmatprep.subr.mxu0 0.0
    %2820 = vmatpush2.msra.mxu0 0.0
    %2821 = vmatprep.subr.mxu0 0.0
    %2822 = vmatpush2.msra.mxu0 0.0
    %2823 = vmatprep.mubr.f32.mxu0 0.0
    %2824 = vmatmul.mubr.f32.gmra.mxu0 %v292
    %v2825 = vpop.f32.mrf.mxu0
    %v2826 = vadd.f32 %v919, %v2825
    %v2827 = vpop.f32.mrf.mxu0
    %v2828 = vadd.f32 %v923, %v2827
    %2829 = vmatprep.mubr.f32.mxu0 0.0
    %2830 = vmatmul.mubr.f32.gmra.mxu0 %v293
    %v2831 = vpop.f32.mrf.mxu0
    %v2832 = vadd.f32 %v919, %v2831
    %v2833 = vpop.f32.mrf.mxu0
    %v2834 = vadd.f32 %v923, %v2833
    %2835 = vmatprep.mubr.f32.mxu0 0.0
    %2836 = vmatmul.mubr.f32.gmra.mxu0 %v294
    %v2837 = vpop.f32.mrf.mxu0
    %v2838 = vadd.f32 %v919, %v2837
    %v2839 = vpop.f32.mrf.mxu0
    %v2840 = vadd.f32 %v923, %v2839
    %2841 = vmatprep.mubr.f32.mxu0 0.0
    %2842 = vmatmul.mubr.f32.gmra.mxu0 %v295
    %v2843 = vpop.f32.mrf.mxu0
    %v2844 = vadd.f32 %v919, %v2843
    %v2845 = vpop.f32.mrf.mxu0
    %v2846 = vadd.f32 %v923, %v2845
    %2847 = vmatprep.mubr.f32.mxu0 0.0
    %2848 = vmatmul.mubr.f32.gmra.mxu0 %v296
    %v2849 = vpop.f32.mrf.mxu0
    %v2850 = vadd.f32 %v919, %v2849
    %v2851 = vpop.f32.mrf.mxu0
    %v2852 = vadd.f32 %v923, %v2851
    %2853 = vmatprep.mubr.f32.mxu0 0.0
    %2854 = vmatmul.mubr.f32.gmra.mxu0 %v297
    %v2855 = vpop.f32.mrf.mxu0
    %v2856 = vadd.f32 %v919, %v2855
    %v2857 = vpop.f32.mrf.mxu0
    %v2858 = vadd.f32 %v923, %v2857
    %2859 = vmatprep.mubr.f32.mxu0 0.0
    %2860 = vmatmul.mubr.f32.gmra.mxu0 %v298
    %v2861 = vpop.f32.mrf.mxu0
    %v2862 = vadd.f32 %v919, %v2861
    %v2863 = vpop.f32.mrf.mxu0
    %v2864 = vadd.f32 %v923, %v2863
    %2865 = vmatprep.mubr.f32.mxu0 0.0
    %2866 = vmatmul.mubr.f32.gmra.mxu0 %v299
    %v2867 = vpop.f32.mrf.mxu0
    %v2868 = vadd.f32 %v919, %v2867
    %v2869 = vpop.f32.mrf.mxu0
    %v2870 = vadd.f32 %v923, %v2869
    %2871 = vmatprep.mubr.f32.mxu0 0.0
    %2872 = vmatmul.mubr.f32.gmra.mxu0 %v300
    %v2873 = vpop.f32.mrf.mxu0
    %v2874 = vadd.f32 %v919, %v2873
    %v2875 = vpop.f32.mrf.mxu0
    %v2876 = vadd.f32 %v923, %v2875
    %2877 = vmatprep.mubr.f32.mxu0 0.0
    %2878 = vmatmul.mubr.f32.gmra.mxu0 %v301
    %v2879 = vpop.f32.mrf.mxu0
    %v2880 = vadd.f32 %v919, %v2879
    %v2881 = vpop.f32.mrf.mxu0
    %v2882 = vadd.f32 %v923, %v2881
    %2883 = vmatprep.mubr.f32.mxu0 0.0
    %2884 = vmatmul.mubr.f32.gmra.mxu0 %v302
    %v2885 = vpop.f32.mrf.mxu0
    %v2886 = vadd.f32 %v919, %v2885
    %v2887 = vpop.f32.mrf.mxu0
    %v2888 = vadd.f32 %v923, %v2887
    %2889 = vmatprep.mubr.f32.mxu0 0.0
    %2890 = vmatmul.mubr.f32.gmra.mxu0 %v303
    %v2891 = vpop.f32.mrf.mxu0
    %v2892 = vadd.f32 %v919, %v2891
    %v2893 = vpop.f32.mrf.mxu0
    %v2894 = vadd.f32 %v923, %v2893
    %2895 = vmatprep.mubr.f32.mxu0 0.0
    %2896 = vmatmul.mubr.f32.gmra.mxu0 %v304
    %v2897 = vpop.f32.mrf.mxu0
    %v2898 = vadd.f32 %v919, %v2897
    %v2899 = vpop.f32.mrf.mxu0
    %v2900 = vadd.f32 %v923, %v2899
    %2901 = vmatprep.mubr.f32.mxu0 0.0
    %2902 = vmatmul.mubr.f32.gmra.mxu0 %v305
    %v2903 = vpop.f32.mrf.mxu0
    %v2904 = vadd.f32 %v919, %v2903
    %v2905 = vpop.f32.mrf.mxu0
    %v2906 = vadd.f32 %v923, %v2905
    %2907 = vmatprep.mubr.f32.mxu0 0.0
    %2908 = vmatmul.mubr.f32.gmra.mxu0 %v306
    %v2909 = vpop.f32.mrf.mxu0
    %v2910 = vadd.f32 %v919, %v2909
    %v2911 = vpop.f32.mrf.mxu0
    %v2912 = vadd.f32 %v923, %v2911
    %2913 = vmatprep.mubr.f32.mxu0 0.0
    %2914 = vmatmul.mubr.f32.gmra.mxu0 %v307
    %v2915 = vpop.f32.mrf.mxu0
    %v2916 = vadd.f32 %v919, %v2915
    %v2917 = vpop.f32.mrf.mxu0
    %v2918 = vadd.f32 %v923, %v2917
    %2919 = vdwg.mxu0
    %2920 = vmatprep.subr.mxu0 %v813
    %2921 = vmatpush1.msra.mxu0 %v812
    %2922 = vmatprep.subr.mxu0 %v781
    %2923 = vmatpush1.msra.mxu0 %v780
    %2924 = vmatprep.subr.mxu0 %v749
    %2925 = vmatpush1.msra.mxu0 %v748
    %2926 = vmatprep.subr.mxu0 %v717
    %2927 = vmatpush1.msra.mxu0 %v716
    %2928 = vmatprep.subr.mxu0 %v685
    %2929 = vmatpush1.msra.mxu0 %v684
    %2930 = vmatprep.subr.mxu0 %v653
    %2931 = vmatpush1.msra.mxu0 %v652
    %2932 = vmatprep.subr.mxu0 %v621
    %2933 = vmatpush1.msra.mxu0 %v620
    %2934 = vmatprep.subr.mxu0 %v589
    %2935 = vmatpush1.msra.mxu0 %v588
    %2936 = vmatprep.subr.mxu0 %v557
    %2937 = vmatpush1.msra.mxu0 %v556
    %2938 = vmatprep.subr.mxu0 %v525
    %2939 = vmatpush1.msra.mxu0 %v524
    %2940 = vmatprep.subr.mxu0 %v493
    %2941 = vmatpush1.msra.mxu0 %v492
    %2942 = vmatprep.subr.mxu0 %v461
    %2943 = vmatpush1.msra.mxu0 %v460
    %2944 = vmatprep.subr.mxu0 %v429
    %2945 = vmatpush1.msra.mxu0 %v428
    %2946 = vmatprep.subr.mxu0 %v397
    %2947 = vmatpush1.msra.mxu0 %v396
    %2948 = vmatprep.subr.mxu0 %v365
    %2949 = vmatpush1.msra.mxu0 %v364
    %2950 = vmatprep.subr.mxu0 %v333
    %2951 = vmatpush1.msra.mxu0 %v332
    %2952 = vmatprep.subr.mxu0 0.0
    %2953 = vmatpush2.msra.mxu0 0.0
    %2954 = vmatprep.subr.mxu0 0.0
    %2955 = vmatpush2.msra.mxu0 0.0
    %2956 = vmatprep.subr.mxu0 0.0
    %2957 = vmatpush2.msra.mxu0 0.0
    %2958 = vmatprep.subr.mxu0 0.0
    %2959 = vmatpush2.msra.mxu0 0.0
    %2960 = vmatprep.subr.mxu0 0.0
    %2961 = vmatpush2.msra.mxu0 0.0
    %2962 = vmatprep.subr.mxu0 0.0
    %2963 = vmatpush2.msra.mxu0 0.0
    %2964 = vmatprep.subr.mxu0 0.0
    %2965 = vmatpush2.msra.mxu0 0.0
    %2966 = vmatprep.subr.mxu0 0.0
    %2967 = vmatpush2.msra.mxu0 0.0
    %2968 = vmatprep.subr.mxu0 0.0
    %2969 = vmatpush2.msra.mxu0 0.0
    %2970 = vmatprep.subr.mxu0 0.0
    %2971 = vmatpush2.msra.mxu0 0.0
    %2972 = vmatprep.subr.mxu0 0.0
    %2973 = vmatpush2.msra.mxu0 0.0
    %2974 = vmatprep.subr.mxu0 0.0
    %2975 = vmatpush2.msra.mxu0 0.0
    %2976 = vmatprep.subr.mxu0 0.0
    %2977 = vmatpush2.msra.mxu0 0.0
    %2978 = vmatprep.subr.mxu0 0.0
    %2979 = vmatpush2.msra.mxu0 0.0
    %2980 = vmatprep.subr.mxu0 0.0
    %2981 = vmatpush2.msra.mxu0 0.0
    %2982 = vmatprep.subr.mxu0 0.0
    %2983 = vmatpush2.msra.mxu0 0.0
    %2984 = vmatprep.mubr.f32.mxu0 0.0
    %2985 = vmatmul.mubr.f32.gmra.mxu0 %v292
    %v2986 = vpop.f32.mrf.mxu0
    %v2987 = vadd.f32 %v927, %v2986
    %v2988 = vpop.f32.mrf.mxu0
    %v2989 = vadd.f32 %v931, %v2988
    %2990 = vmatprep.mubr.f32.mxu0 0.0
    %2991 = vmatmul.mubr.f32.gmra.mxu0 %v293
    %v2992 = vpop.f32.mrf.mxu0
    %v2993 = vadd.f32 %v927, %v2992
    %v2994 = vpop.f32.mrf.mxu0
    %v2995 = vadd.f32 %v931, %v2994
    %2996 = vmatprep.mubr.f32.mxu0 0.0
    %2997 = vmatmul.mubr.f32.gmra.mxu0 %v294
    %v2998 = vpop.f32.mrf.mxu0
    %v2999 = vadd.f32 %v927, %v2998
    %v3000 = vpop.f32.mrf.mxu0
    %v3001 = vadd.f32 %v931, %v3000
    %3002 = vmatprep.mubr.f32.mxu0 0.0
    %3003 = vmatmul.mubr.f32.gmra.mxu0 %v295
    %v3004 = vpop.f32.mrf.mxu0
    %v3005 = vadd.f32 %v927, %v3004
    %v3006 = vpop.f32.mrf.mxu0
    %v3007 = vadd.f32 %v931, %v3006
    %3008 = vmatprep.mubr.f32.mxu0 0.0
    %3009 = vmatmul.mubr.f32.gmra.mxu0 %v296
    %v3010 = vpop.f32.mrf.mxu0
    %v3011 = vadd.f32 %v927, %v3010
    %v3012 = vpop.f32.mrf.mxu0
    %v3013 = vadd.f32 %v931, %v3012
    %3014 = vmatprep.mubr.f32.mxu0 0.0
    %3015 = vmatmul.mubr.f32.gmra.mxu0 %v297
    %v3016 = vpop.f32.mrf.mxu0
    %v3017 = vadd.f32 %v927, %v3016
    %v3018 = vpop.f32.mrf.mxu0
    %v3019 = vadd.f32 %v931, %v3018
    %3020 = vmatprep.mubr.f32.mxu0 0.0
    %3021 = vmatmul.mubr.f32.gmra.mxu0 %v298
    %v3022 = vpop.f32.mrf.mxu0
    %v3023 = vadd.f32 %v927, %v3022
    %v3024 = vpop.f32.mrf.mxu0
    %v3025 = vadd.f32 %v931, %v3024
    %3026 = vmatprep.mubr.f32.mxu0 0.0
    %3027 = vmatmul.mubr.f32.gmra.mxu0 %v299
    %v3028 = vpop.f32.mrf.mxu0
    %v3029 = vadd.f32 %v927, %v3028
    %v3030 = vpop.f32.mrf.mxu0
    %v3031 = vadd.f32 %v931, %v3030
    %3032 = vmatprep.mubr.f32.mxu0 0.0
    %3033 = vmatmul.mubr.f32.gmra.mxu0 %v300
    %v3034 = vpop.f32.mrf.mxu0
    %v3035 = vadd.f32 %v927, %v3034
    %v3036 = vpop.f32.mrf.mxu0
    %v3037 = vadd.f32 %v931, %v3036
    %3038 = vmatprep.mubr.f32.mxu0 0.0
    %3039 = vmatmul.mubr.f32.gmra.mxu0 %v301
    %v3040 = vpop.f32.mrf.mxu0
    %v3041 = vadd.f32 %v927, %v3040
    %v3042 = vpop.f32.mrf.mxu0
    %v3043 = vadd.f32 %v931, %v3042
    %3044 = vmatprep.mubr.f32.mxu0 0.0
    %3045 = vmatmul.mubr.f32.gmra.mxu0 %v302
    %v3046 = vpop.f32.mrf.mxu0
    %v3047 = vadd.f32 %v927, %v3046
    %v3048 = vpop.f32.mrf.mxu0
    %v3049 = vadd.f32 %v931, %v3048
    %3050 = vmatprep.mubr.f32.mxu0 0.0
    %3051 = vmatmul.mubr.f32.gmra.mxu0 %v303
    %v3052 = vpop.f32.mrf.mxu0
    %v3053 = vadd.f32 %v927, %v3052
    %v3054 = vpop.f32.mrf.mxu0
    %v3055 = vadd.f32 %v931, %v3054
    %3056 = vmatprep.mubr.f32.mxu0 0.0
    %3057 = vmatmul.mubr.f32.gmra.mxu0 %v304
    %v3058 = vpop.f32.mrf.mxu0
    %v3059 = vadd.f32 %v927, %v3058
    %v3060 = vpop.f32.mrf.mxu0
    %v3061 = vadd.f32 %v931, %v3060
    %3062 = vmatprep.mubr.f32.mxu0 0.0
    %3063 = vmatmul.mubr.f32.gmra.mxu0 %v305
    %v3064 = vpop.f32.mrf.mxu0
    %v3065 = vadd.f32 %v927, %v3064
    %v3066 = vpop.f32.mrf.mxu0
    %v3067 = vadd.f32 %v931, %v3066
    %3068 = vmatprep.mubr.f32.mxu0 0.0
    %3069 = vmatmul.mubr.f32.gmra.mxu0 %v306
    %v3070 = vpop.f32.mrf.mxu0
    %v3071 = vadd.f32 %v927, %v3070
    %v3072 = vpop.f32.mrf.mxu0
    %v3073 = vadd.f32 %v931, %v3072
    %3074 = vmatprep.mubr.f32.mxu0 0.0
    %3075 = vmatmul.mubr.f32.gmra.mxu0 %v307
    %v3076 = vpop.f32.mrf.mxu0
    %v3077 = vadd.f32 %v927, %v3076
    %v3078 = vpop.f32.mrf.mxu0
    %v3079 = vadd.f32 %v931, %v3078
    %3080 = vdwg.mxu0
    %3081 = vmatprep.subr.mxu0 %v815
    %3082 = vmatpush1.msra.mxu0 %v814
    %3083 = vmatprep.subr.mxu0 %v783
    %3084 = vmatpush1.msra.mxu0 %v782
    %3085 = vmatprep.subr.mxu0 %v751
    %3086 = vmatpush1.msra.mxu0 %v750
    %3087 = vmatprep.subr.mxu0 %v719
    %3088 = vmatpush1.msra.mxu0 %v718
    %3089 = vmatprep.subr.mxu0 %v687
    %3090 = vmatpush1.msra.mxu0 %v686
    %3091 = vmatprep.subr.mxu0 %v655
    %3092 = vmatpush1.msra.mxu0 %v654
    %3093 = vmatprep.subr.mxu0 %v623
    %3094 = vmatpush1.msra.mxu0 %v622
    %3095 = vmatprep.subr.mxu0 %v591
    %3096 = vmatpush1.msra.mxu0 %v590
    %3097 = vmatprep.subr.mxu0 %v559
    %3098 = vmatpush1.msra.mxu0 %v558
    %3099 = vmatprep.subr.mxu0 %v527
    %3100 = vmatpush1.msra.mxu0 %v526
    %3101 = vmatprep.subr.mxu0 %v495
    %3102 = vmatpush1.msra.mxu0 %v494
    %3103 = vmatprep.subr.mxu0 %v463
    %3104 = vmatpush1.msra.mxu0 %v462
    %3105 = vmatprep.subr.mxu0 %v431
    %3106 = vmatpush1.msra.mxu0 %v430
    %3107 = vmatprep.subr.mxu0 %v399
    %3108 = vmatpush1.msra.mxu0 %v398
    %3109 = vmatprep.subr.mxu0 %v367
    %3110 = vmatpush1.msra.mxu0 %v366
    %3111 = vmatprep.subr.mxu0 %v335
    %3112 = vmatpush1.msra.mxu0 %v334
    %3113 = vmatprep.subr.mxu0 0.0
    %3114 = vmatpush2.msra.mxu0 0.0
    %3115 = vmatprep.subr.mxu0 0.0
    %3116 = vmatpush2.msra.mxu0 0.0
    %3117 = vmatprep.subr.mxu0 0.0
    %3118 = vmatpush2.msra.mxu0 0.0
    %3119 = vmatprep.subr.mxu0 0.0
    %3120 = vmatpush2.msra.mxu0 0.0
    %3121 = vmatprep.subr.mxu0 0.0
    %3122 = vmatpush2.msra.mxu0 0.0
    %3123 = vmatprep.subr.mxu0 0.0
    %3124 = vmatpush2.msra.mxu0 0.0
    %3125 = vmatprep.subr.mxu0 0.0
    %3126 = vmatpush2.msra.mxu0 0.0
    %3127 = vmatprep.subr.mxu0 0.0
    %3128 = vmatpush2.msra.mxu0 0.0
    %3129 = vmatprep.subr.mxu0 0.0
    %3130 = vmatpush2.msra.mxu0 0.0
    %3131 = vmatprep.subr.mxu0 0.0
    %3132 = vmatpush2.msra.mxu0 0.0
    %3133 = vmatprep.subr.mxu0 0.0
    %3134 = vmatpush2.msra.mxu0 0.0
    %3135 = vmatprep.subr.mxu0 0.0
    %3136 = vmatpush2.msra.mxu0 0.0
    %3137 = vmatprep.subr.mxu0 0.0
    %3138 = vmatpush2.msra.mxu0 0.0
    %3139 = vmatprep.subr.mxu0 0.0
    %3140 = vmatpush2.msra.mxu0 0.0
    %3141 = vmatprep.subr.mxu0 0.0
    %3142 = vmatpush2.msra.mxu0 0.0
    %3143 = vmatprep.subr.mxu0 0.0
    %3144 = vmatpush2.msra.mxu0 0.0
    %3145 = vmatprep.mubr.f32.mxu0 0.0
    %3146 = vmatmul.mubr.f32.gmra.mxu0 %v292
    %v3147 = vpop.f32.mrf.mxu0
    %v3148 = vadd.f32 %v935, %v3147
    %v3149 = vpop.f32.mrf.mxu0
    %v3150 = vadd.f32 %v939, %v3149
    %3151 = vmatprep.mubr.f32.mxu0 0.0
    %3152 = vmatmul.mubr.f32.gmra.mxu0 %v293
    %v3153 = vpop.f32.mrf.mxu0
    %v3154 = vadd.f32 %v935, %v3153
    %v3155 = vpop.f32.mrf.mxu0
    %v3156 = vadd.f32 %v939, %v3155
    %3157 = vmatprep.mubr.f32.mxu0 0.0
    %3158 = vmatmul.mubr.f32.gmra.mxu0 %v294
    %v3159 = vpop.f32.mrf.mxu0
    %v3160 = vadd.f32 %v935, %v3159
    %v3161 = vpop.f32.mrf.mxu0
    %v3162 = vadd.f32 %v939, %v3161
    %3163 = vmatprep.mubr.f32.mxu0 0.0
    %3164 = vmatmul.mubr.f32.gmra.mxu0 %v295
    %v3165 = vpop.f32.mrf.mxu0
    %v3166 = vadd.f32 %v935, %v3165
    %v3167 = vpop.f32.mrf.mxu0
    %v3168 = vadd.f32 %v939, %v3167
    %3169 = vmatprep.mubr.f32.mxu0 0.0
    %3170 = vmatmul.mubr.f32.gmra.mxu0 %v296
    %v3171 = vpop.f32.mrf.mxu0
    %v3172 = vadd.f32 %v935, %v3171
    %v3173 = vpop.f32.mrf.mxu0
    %v3174 = vadd.f32 %v939, %v3173
    %3175 = vmatprep.mubr.f32.mxu0 0.0
    %3176 = vmatmul.mubr.f32.gmra.mxu0 %v297
    %v3177 = vpop.f32.mrf.mxu0
    %v3178 = vadd.f32 %v935, %v3177
    %v3179 = vpop.f32.mrf.mxu0
    %v3180 = vadd.f32 %v939, %v3179
    %3181 = vmatprep.mubr.f32.mxu0 0.0
    %3182 = vmatmul.mubr.f32.gmra.mxu0 %v298
    %v3183 = vpop.f32.mrf.mxu0
    %v3184 = vadd.f32 %v935, %v3183
    %v3185 = vpop.f32.mrf.mxu0
    %v3186 = vadd.f32 %v939, %v3185
    %3187 = vmatprep.mubr.f32.mxu0 0.0
    %3188 = vmatmul.mubr.f32.gmra.mxu0 %v299
    %v3189 = vpop.f32.mrf.mxu0
    %v3190 = vadd.f32 %v935, %v3189
    %v3191 = vpop.f32.mrf.mxu0
    %v3192 = vadd.f32 %v939, %v3191
    %3193 = vmatprep.mubr.f32.mxu0 0.0
    %3194 = vmatmul.mubr.f32.gmra.mxu0 %v300
    %v3195 = vpop.f32.mrf.mxu0
    %v3196 = vadd.f32 %v935, %v3195
    %v3197 = vpop.f32.mrf.mxu0
    %v3198 = vadd.f32 %v939, %v3197
    %3199 = vmatprep.mubr.f32.mxu0 0.0
    %3200 = vmatmul.mubr.f32.gmra.mxu0 %v301
    %v3201 = vpop.f32.mrf.mxu0
    %v3202 = vadd.f32 %v935, %v3201
    %v3203 = vpop.f32.mrf.mxu0
    %v3204 = vadd.f32 %v939, %v3203
    %3205 = vmatprep.mubr.f32.mxu0 0.0
    %3206 = vmatmul.mubr.f32.gmra.mxu0 %v302
    %v3207 = vpop.f32.mrf.mxu0
    %v3208 = vadd.f32 %v935, %v3207
    %v3209 = vpop.f32.mrf.mxu0
    %v3210 = vadd.f32 %v939, %v3209
    %3211 = vmatprep.mubr.f32.mxu0 0.0
    %3212 = vmatmul.mubr.f32.gmra.mxu0 %v303
    %v3213 = vpop.f32.mrf.mxu0
    %v3214 = vadd.f32 %v935, %v3213
    %v3215 = vpop.f32.mrf.mxu0
    %v3216 = vadd.f32 %v939, %v3215
    %3217 = vmatprep.mubr.f32.mxu0 0.0
    %3218 = vmatmul.mubr.f32.gmra.mxu0 %v304
    %v3219 = vpop.f32.mrf.mxu0
    %v3220 = vadd.f32 %v935, %v3219
    %v3221 = vpop.f32.mrf.mxu0
    %v3222 = vadd.f32 %v939, %v3221
    %3223 = vmatprep.mubr.f32.mxu0 0.0
    %3224 = vmatmul.mubr.f32.gmra.mxu0 %v305
    %v3225 = vpop.f32.mrf.mxu0
    %v3226 = vadd.f32 %v935, %v3225
    %v3227 = vpop.f32.mrf.mxu0
    %v3228 = vadd.f32 %v939, %v3227
    %3229 = vmatprep.mubr.f32.mxu0 0.0
    %3230 = vmatmul.mubr.f32.gmra.mxu0 %v306
    %v3231 = vpop.f32.mrf.mxu0
    %v3232 = vadd.f32 %v935, %v3231
    %v3233 = vpop.f32.mrf.mxu0
    %v3234 = vadd.f32 %v939, %v3233
    %3235 = vmatprep.mubr.f32.mxu0 0.0
    %3236 = vmatmul.mubr.f32.gmra.mxu0 %v307
    %v3237 = vpop.f32.mrf.mxu0
    %v3238 = vadd.f32 %v935, %v3237
    %v3239 = vpop.f32.mrf.mxu0
    %v3240 = vadd.f32 %v939, %v3239
    %3241 = vdwg.mxu0
    %3242 = vmatprep.subr.mxu0 %v817
    %3243 = vmatpush1.msra.mxu0 %v816
    %3244 = vmatprep.subr.mxu0 %v785
    %3245 = vmatpush1.msra.mxu0 %v784
    %3246 = vmatprep.subr.mxu0 %v753
    %3247 = vmatpush1.msra.mxu0 %v752
    %3248 = vmatprep.subr.mxu0 %v721
    %3249 = vmatpush1.msra.mxu0 %v720
    %3250 = vmatprep.subr.mxu0 %v689
    %3251 = vmatpush1.msra.mxu0 %v688
    %3252 = vmatprep.subr.mxu0 %v657
    %3253 = vmatpush1.msra.mxu0 %v656
    %3254 = vmatprep.subr.mxu0 %v625
    %3255 = vmatpush1.msra.mxu0 %v624
    %3256 = vmatprep.subr.mxu0 %v593
    %3257 = vmatpush1.msra.mxu0 %v592
    %3258 = vmatprep.subr.mxu0 %v561
    %3259 = vmatpush1.msra.mxu0 %v560
    %3260 = vmatprep.subr.mxu0 %v529
    %3261 = vmatpush1.msra.mxu0 %v528
    %3262 = vmatprep.subr.mxu0 %v497
    %3263 = vmatpush1.msra.mxu0 %v496
    %3264 = vmatprep.subr.mxu0 %v465
    %3265 = vmatpush1.msra.mxu0 %v464
    %3266 = vmatprep.subr.mxu0 %v433
    %3267 = vmatpush1.msra.mxu0 %v432
    %3268 = vmatprep.subr.mxu0 %v401
    %3269 = vmatpush1.msra.mxu0 %v400
    %3270 = vmatprep.subr.mxu0 %v369
    %3271 = vmatpush1.msra.mxu0 %v368
    %3272 = vmatprep.subr.mxu0 %v337
    %3273 = vmatpush1.msra.mxu0 %v336
    %3274 = vmatprep.subr.mxu0 0.0
    %3275 = vmatpush2.msra.mxu0 0.0
    %3276 = vmatprep.subr.mxu0 0.0
    %3277 = vmatpush2.msra.mxu0 0.0
    %3278 = vmatprep.subr.mxu0 0.0
    %3279 = vmatpush2.msra.mxu0 0.0
    %3280 = vmatprep.subr.mxu0 0.0
    %3281 = vmatpush2.msra.mxu0 0.0
    %3282 = vmatprep.subr.mxu0 0.0
    %3283 = vmatpush2.msra.mxu0 0.0
    %3284 = vmatprep.subr.mxu0 0.0
    %3285 = vmatpush2.msra.mxu0 0.0
    %3286 = vmatprep.subr.mxu0 0.0
    %3287 = vmatpush2.msra.mxu0 0.0
    %3288 = vmatprep.subr.mxu0 0.0
    %3289 = vmatpush2.msra.mxu0 0.0
    %3290 = vmatprep.subr.mxu0 0.0
    %3291 = vmatpush2.msra.mxu0 0.0
    %3292 = vmatprep.subr.mxu0 0.0
    %3293 = vmatpush2.msra.mxu0 0.0
    %3294 = vmatprep.subr.mxu0 0.0
    %3295 = vmatpush2.msra.mxu0 0.0
    %3296 = vmatprep.subr.mxu0 0.0
    %3297 = vmatpush2.msra.mxu0 0.0
    %3298 = vmatprep.subr.mxu0 0.0
    %3299 = vmatpush2.msra.mxu0 0.0
    %3300 = vmatprep.subr.mxu0 0.0
    %3301 = vmatpush2.msra.mxu0 0.0
    %3302 = vmatprep.subr.mxu0 0.0
    %3303 = vmatpush2.msra.mxu0 0.0
    %3304 = vmatprep.subr.mxu0 0.0
    %3305 = vmatpush2.msra.mxu0 0.0
    %3306 = vmatprep.mubr.f32.mxu0 0.0
    %3307 = vmatmul.mubr.f32.gmra.mxu0 %v292
    %v3308 = vpop.f32.mrf.mxu0
    %v3309 = vadd.f32 %v943, %v3308
    %v3310 = vpop.f32.mrf.mxu0
    %v3311 = vadd.f32 %v947, %v3310
    %3312 = vmatprep.mubr.f32.mxu0 0.0
    %3313 = vmatmul.mubr.f32.gmra.mxu0 %v293
    %v3314 = vpop.f32.mrf.mxu0
    %v3315 = vadd.f32 %v943, %v3314
    %v3316 = vpop.f32.mrf.mxu0
    %v3317 = vadd.f32 %v947, %v3316
    %3318 = vmatprep.mubr.f32.mxu0 0.0
    %3319 = vmatmul.mubr.f32.gmra.mxu0 %v294
    %v3320 = vpop.f32.mrf.mxu0
    %v3321 = vadd.f32 %v943, %v3320
    %v3322 = vpop.f32.mrf.mxu0
    %v3323 = vadd.f32 %v947, %v3322
    %3324 = vmatprep.mubr.f32.mxu0 0.0
    %3325 = vmatmul.mubr.f32.gmra.mxu0 %v295
    %v3326 = vpop.f32.mrf.mxu0
    %v3327 = vadd.f32 %v943, %v3326
    %v3328 = vpop.f32.mrf.mxu0
    %v3329 = vadd.f32 %v947, %v3328
    %3330 = vmatprep.mubr.f32.mxu0 0.0
    %3331 = vmatmul.mubr.f32.gmra.mxu0 %v296
    %v3332 = vpop.f32.mrf.mxu0
    %v3333 = vadd.f32 %v943, %v3332
    %v3334 = vpop.f32.mrf.mxu0
    %v3335 = vadd.f32 %v947, %v3334
    %3336 = vmatprep.mubr.f32.mxu0 0.0
    %3337 = vmatmul.mubr.f32.gmra.mxu0 %v297
    %v3338 = vpop.f32.mrf.mxu0
    %v3339 = vadd.f32 %v943, %v3338
    %v3340 = vpop.f32.mrf.mxu0
    %v3341 = vadd.f32 %v947, %v3340
    %3342 = vmatprep.mubr.f32.mxu0 0.0
    %3343 = vmatmul.mubr.f32.gmra.mxu0 %v298
    %v3344 = vpop.f32.mrf.mxu0
    %v3345 = vadd.f32 %v943, %v3344
    %v3346 = vpop.f32.mrf.mxu0
    %v3347 = vadd.f32 %v947, %v3346
    %3348 = vmatprep.mubr.f32.mxu0 0.0
    %3349 = vmatmul.mubr.f32.gmra.mxu0 %v299
    %v3350 = vpop.f32.mrf.mxu0
    %v3351 = vadd.f32 %v943, %v3350
    %v3352 = vpop.f32.mrf.mxu0
    %v3353 = vadd.f32 %v947, %v3352
    %3354 = vmatprep.mubr.f32.mxu0 0.0
    %3355 = vmatmul.mubr.f32.gmra.mxu0 %v300
    %v3356 = vpop.f32.mrf.mxu0
    %v3357 = vadd.f32 %v943, %v3356
    %v3358 = vpop.f32.mrf.mxu0
    %v3359 = vadd.f32 %v947, %v3358
    %3360 = vmatprep.mubr.f32.mxu0 0.0
    %3361 = vmatmul.mubr.f32.gmra.mxu0 %v301
    %v3362 = vpop.f32.mrf.mxu0
    %v3363 = vadd.f32 %v943, %v3362
    %v3364 = vpop.f32.mrf.mxu0
    %v3365 = vadd.f32 %v947, %v3364
    %3366 = vmatprep.mubr.f32.mxu0 0.0
    %3367 = vmatmul.mubr.f32.gmra.mxu0 %v302
    %v3368 = vpop.f32.mrf.mxu0
    %v3369 = vadd.f32 %v943, %v3368
    %v3370 = vpop.f32.mrf.mxu0
    %v3371 = vadd.f32 %v947, %v3370
    %3372 = vmatprep.mubr.f32.mxu0 0.0
    %3373 = vmatmul.mubr.f32.gmra.mxu0 %v303
    %v3374 = vpop.f32.mrf.mxu0
    %v3375 = vadd.f32 %v943, %v3374
    %v3376 = vpop.f32.mrf.mxu0
    %v3377 = vadd.f32 %v947, %v3376
    %3378 = vmatprep.mubr.f32.mxu0 0.0
    %3379 = vmatmul.mubr.f32.gmra.mxu0 %v304
    %v3380 = vpop.f32.mrf.mxu0
    %v3381 = vadd.f32 %v943, %v3380
    %v3382 = vpop.f32.mrf.mxu0
    %v3383 = vadd.f32 %v947, %v3382
    %3384 = vmatprep.mubr.f32.mxu0 0.0
    %3385 = vmatmul.mubr.f32.gmra.mxu0 %v305
    %v3386 = vpop.f32.mrf.mxu0
    %v3387 = vadd.f32 %v943, %v3386
    %v3388 = vpop.f32.mrf.mxu0
    %v3389 = vadd.f32 %v947, %v3388
    %3390 = vmatprep.mubr.f32.mxu0 0.0
    %3391 = vmatmul.mubr.f32.gmra.mxu0 %v306
    %v3392 = vpop.f32.mrf.mxu0
    %v3393 = vadd.f32 %v943, %v3392
    %v3394 = vpop.f32.mrf.mxu0
    %v3395 = vadd.f32 %v947, %v3394
    %3396 = vmatprep.mubr.f32.mxu0 0.0
    %3397 = vmatmul.mubr.f32.gmra.mxu0 %v307
    %v3398 = vpop.f32.mrf.mxu0
    %v3399 = vadd.f32 %v943, %v3398
    %v3400 = vpop.f32.mrf.mxu0
    %v3401 = vadd.f32 %v947, %v3400
    %3402 = vdwg.mxu0
    %3403 = vmatprep.subr.mxu0 %v819
    %3404 = vmatpush1.msra.mxu0 %v818
    %3405 = vmatprep.subr.mxu0 %v787
    %3406 = vmatpush1.msra.mxu0 %v786
    %3407 = vmatprep.subr.mxu0 %v755
    %3408 = vmatpush1.msra.mxu0 %v754
    %3409 = vmatprep.subr.mxu0 %v723
    %3410 = vmatpush1.msra.mxu0 %v722
    %3411 = vmatprep.subr.mxu0 %v691
    %3412 = vmatpush1.msra.mxu0 %v690
    %3413 = vmatprep.subr.mxu0 %v659
    %3414 = vmatpush1.msra.mxu0 %v658
    %3415 = vmatprep.subr.mxu0 %v627
    %3416 = vmatpush1.msra.mxu0 %v626
    %3417 = vmatprep.subr.mxu0 %v595
    %3418 = vmatpush1.msra.mxu0 %v594
    %3419 = vmatprep.subr.mxu0 %v563
    %3420 = vmatpush1.msra.mxu0 %v562
    %3421 = vmatprep.subr.mxu0 %v531
    %3422 = vmatpush1.msra.mxu0 %v530
    %3423 = vmatprep.subr.mxu0 %v499
    %3424 = vmatpush1.msra.mxu0 %v498
    %3425 = vmatprep.subr.mxu0 %v467
    %3426 = vmatpush1.msra.mxu0 %v466
    %3427 = vmatprep.subr.mxu0 %v435
    %3428 = vmatpush1.msra.mxu0 %v434
    %3429 = vmatprep.subr.mxu0 %v403
    %3430 = vmatpush1.msra.mxu0 %v402
    %3431 = vmatprep.subr.mxu0 %v371
    %3432 = vmatpush1.msra.mxu0 %v370
    %3433 = vmatprep.subr.mxu0 %v339
    %3434 = vmatpush1.msra.mxu0 %v338
    %3435 = vmatprep.subr.mxu0 0.0
    %3436 = vmatpush2.msra.mxu0 0.0
    %3437 = vmatprep.subr.mxu0 0.0
    %3438 = vmatpush2.msra.mxu0 0.0
    %3439 = vmatprep.subr.mxu0 0.0
    %3440 = vmatpush2.msra.mxu0 0.0
    %3441 = vmatprep.subr.mxu0 0.0
    %3442 = vmatpush2.msra.mxu0 0.0
    %3443 = vmatprep.subr.mxu0 0.0
    %3444 = vmatpush2.msra.mxu0 0.0
    %3445 = vmatprep.subr.mxu0 0.0
    %3446 = vmatpush2.msra.mxu0 0.0
    %3447 = vmatprep.subr.mxu0 0.0
    %3448 = vmatpush2.msra.mxu0 0.0
    %3449 = vmatprep.subr.mxu0 0.0
    %3450 = vmatpush2.msra.mxu0 0.0
    %3451 = vmatprep.subr.mxu0 0.0
    %3452 = vmatpush2.msra.mxu0 0.0
    %3453 = vmatprep.subr.mxu0 0.0
    %3454 = vmatpush2.msra.mxu0 0.0
    %3455 = vmatprep.subr.mxu0 0.0
    %3456 = vmatpush2.msra.mxu0 0.0
    %3457 = vmatprep.subr.mxu0 0.0
    %3458 = vmatpush2.msra.mxu0 0.0
    %3459 = vmatprep.subr.mxu0 0.0
    %3460 = vmatpush2.msra.mxu0 0.0
    %3461 = vmatprep.subr.mxu0 0.0
    %3462 = vmatpush2.msra.mxu0 0.0
    %3463 = vmatprep.subr.mxu0 0.0
    %3464 = vmatpush2.msra.mxu0 0.0
    %3465 = vmatprep.subr.mxu0 0.0
    %3466 = vmatpush2.msra.mxu0 0.0
    %3467 = vmatprep.mubr.f32.mxu0 0.0
    %3468 = vmatmul.mubr.f32.gmra.mxu0 %v292
    %v3469 = vpop.f32.mrf.mxu0
    %v3470 = vadd.f32 %v951, %v3469
    %v3471 = vpop.f32.mrf.mxu0
    %v3472 = vadd.f32 %v955, %v3471
    %3473 = vmatprep.mubr.f32.mxu0 0.0
    %3474 = vmatmul.mubr.f32.gmra.mxu0 %v293
    %v3475 = vpop.f32.mrf.mxu0
    %v3476 = vadd.f32 %v951, %v3475
    %v3477 = vpop.f32.mrf.mxu0
    %v3478 = vadd.f32 %v955, %v3477
    %3479 = vmatprep.mubr.f32.mxu0 0.0
    %3480 = vmatmul.mubr.f32.gmra.mxu0 %v294
    %v3481 = vpop.f32.mrf.mxu0
    %v3482 = vadd.f32 %v951, %v3481
    %v3483 = vpop.f32.mrf.mxu0
    %v3484 = vadd.f32 %v955, %v3483
    %3485 = vmatprep.mubr.f32.mxu0 0.0
    %3486 = vmatmul.mubr.f32.gmra.mxu0 %v295
    %v3487 = vpop.f32.mrf.mxu0
    %v3488 = vadd.f32 %v951, %v3487
    %v3489 = vpop.f32.mrf.mxu0
    %v3490 = vadd.f32 %v955, %v3489
    %3491 = vmatprep.mubr.f32.mxu0 0.0
    %3492 = vmatmul.mubr.f32.gmra.mxu0 %v296
    %v3493 = vpop.f32.mrf.mxu0
    %v3494 = vadd.f32 %v951, %v3493
    %v3495 = vpop.f32.mrf.mxu0
    %v3496 = vadd.f32 %v955, %v3495
    %3497 = vmatprep.mubr.f32.mxu0 0.0
    %3498 = vmatmul.mubr.f32.gmra.mxu0 %v297
    %v3499 = vpop.f32.mrf.mxu0
    %v3500 = vadd.f32 %v951, %v3499
    %v3501 = vpop.f32.mrf.mxu0
    %v3502 = vadd.f32 %v955, %v3501
    %3503 = vmatprep.mubr.f32.mxu0 0.0
    %3504 = vmatmul.mubr.f32.gmra.mxu0 %v298
    %v3505 = vpop.f32.mrf.mxu0
    %v3506 = vadd.f32 %v951, %v3505
    %v3507 = vpop.f32.mrf.mxu0
    %v3508 = vadd.f32 %v955, %v3507
    %3509 = vmatprep.mubr.f32.mxu0 0.0
    %3510 = vmatmul.mubr.f32.gmra.mxu0 %v299
    %v3511 = vpop.f32.mrf.mxu0
    %v3512 = vadd.f32 %v951, %v3511
    %v3513 = vpop.f32.mrf.mxu0
    %v3514 = vadd.f32 %v955, %v3513
    %3515 = vmatprep.mubr.f32.mxu0 0.0
    %3516 = vmatmul.mubr.f32.gmra.mxu0 %v300
    %v3517 = vpop.f32.mrf.mxu0
    %v3518 = vadd.f32 %v951, %v3517
    %v3519 = vpop.f32.mrf.mxu0
    %v3520 = vadd.f32 %v955, %v3519
    %3521 = vmatprep.mubr.f32.mxu0 0.0
    %3522 = vmatmul.mubr.f32.gmra.mxu0 %v301
    %v3523 = vpop.f32.mrf.mxu0
    %v3524 = vadd.f32 %v951, %v3523
    %v3525 = vpop.f32.mrf.mxu0
    %v3526 = vadd.f32 %v955, %v3525
    %3527 = vmatprep.mubr.f32.mxu0 0.0
    %3528 = vmatmul.mubr.f32.gmra.mxu0 %v302
    %v3529 = vpop.f32.mrf.mxu0
    %v3530 = vadd.f32 %v951, %v3529
    %v3531 = vpop.f32.mrf.mxu0
    %v3532 = vadd.f32 %v955, %v3531
    %3533 = vmatprep.mubr.f32.mxu0 0.0
    %3534 = vmatmul.mubr.f32.gmra.mxu0 %v303
    %v3535 = vpop.f32.mrf.mxu0
    %v3536 = vadd.f32 %v951, %v3535
    %v3537 = vpop.f32.mrf.mxu0
    %v3538 = vadd.f32 %v955, %v3537
    %3539 = vmatprep.mubr.f32.mxu0 0.0
    %3540 = vmatmul.mubr.f32.gmra.mxu0 %v304
    %v3541 = vpop.f32.mrf.mxu0
    %v3542 = vadd.f32 %v951, %v3541
    %v3543 = vpop.f32.mrf.mxu0
    %v3544 = vadd.f32 %v955, %v3543
    %3545 = vmatprep.mubr.f32.mxu0 0.0
    %3546 = vmatmul.mubr.f32.gmra.mxu0 %v305
    %v3547 = vpop.f32.mrf.mxu0
    %v3548 = vadd.f32 %v951, %v3547
    %v3549 = vpop.f32.mrf.mxu0
    %v3550 = vadd.f32 %v955, %v3549
    %3551 = vmatprep.mubr.f32.mxu0 0.0
    %3552 = vmatmul.mubr.f32.gmra.mxu0 %v306
    %v3553 = vpop.f32.mrf.mxu0
    %v3554 = vadd.f32 %v951, %v3553
    %v3555 = vpop.f32.mrf.mxu0
    %v3556 = vadd.f32 %v955, %v3555
    %3557 = vmatprep.mubr.f32.mxu0 0.0
    %3558 = vmatmul.mubr.f32.gmra.mxu0 %v307
    %v3559 = vpop.f32.mrf.mxu0
    %v3560 = vadd.f32 %v951, %v3559
    %v3561 = vpop.f32.mrf.mxu0
    %v3562 = vadd.f32 %v955, %v3561
    %3563 = vdwg.mxu0
    %v3564 = vpack.c.bf16 %v1061, %v1055
    %v3565 = vpack.c.bf16 %v1063, %v1057
    %v3566 = vpack.c.bf16 %v1222, %v1216
    %v3567 = vpack.c.bf16 %v1224, %v1218
    %v3568 = vpack.c.bf16 %v1383, %v1377
    %v3569 = vpack.c.bf16 %v1385, %v1379
    %v3570 = vpack.c.bf16 %v1544, %v1538
    %v3571 = vpack.c.bf16 %v1546, %v1540
    %v3572 = vpack.c.bf16 %v1705, %v1699
    %v3573 = vpack.c.bf16 %v1707, %v1701
    %v3574 = vpack.c.bf16 %v1866, %v1860
    %v3575 = vpack.c.bf16 %v1868, %v1862
    %v3576 = vpack.c.bf16 %v2027, %v2021
    %v3577 = vpack.c.bf16 %v2029, %v2023
    %v3578 = vpack.c.bf16 %v2188, %v2182
    %v3579 = vpack.c.bf16 %v2190, %v2184
    %v3580 = vpack.c.bf16 %v2349, %v2343
    %v3581 = vpack.c.bf16 %v2351, %v2345
    %v3582 = vpack.c.bf16 %v2510, %v2504
    %v3583 = vpack.c.bf16 %v2512, %v2506
    %v3584 = vpack.c.bf16 %v2671, %v2665
    %v3585 = vpack.c.bf16 %v2673, %v2667
    %v3586 = vpack.c.bf16 %v2832, %v2826
    %v3587 = vpack.c.bf16 %v2834, %v2828
    %v3588 = vpack.c.bf16 %v2993, %v2987
    %v3589 = vpack.c.bf16 %v2995, %v2989
    %v3590 = vpack.c.bf16 %v3154, %v3148
    %v3591 = vpack.c.bf16 %v3156, %v3150
    %v3592 = vpack.c.bf16 %v3315, %v3309
    %v3593 = vpack.c.bf16 %v3317, %v3311
    %v3594 = vpack.c.bf16 %v3476, %v3470
    %v3595 = vpack.c.bf16 %v3478, %v3472
    %v3596 = vpack.c.bf16 %v1073, %v1067
    %v3597 = vpack.c.bf16 %v1075, %v1069
    %v3598 = vpack.c.bf16 %v1234, %v1228
    %v3599 = vpack.c.bf16 %v1236, %v1230
    %v3600 = vpack.c.bf16 %v1395, %v1389
    %v3601 = vpack.c.bf16 %v1397, %v1391
    %v3602 = vpack.c.bf16 %v1556, %v1550
    %v3603 = vpack.c.bf16 %v1558, %v1552
    %v3604 = vpack.c.bf16 %v1717, %v1711
    %v3605 = vpack.c.bf16 %v1719, %v1713
    %v3606 = vpack.c.bf16 %v1878, %v1872
    %v3607 = vpack.c.bf16 %v1880, %v1874
    %v3608 = vpack.c.bf16 %v2039, %v2033
    %v3609 = vpack.c.bf16 %v2041, %v2035
    %v3610 = vpack.c.bf16 %v2200, %v2194
    %v3611 = vpack.c.bf16 %v2202, %v2196
    %v3612 = vpack.c.bf16 %v2361, %v2355
    %v3613 = vpack.c.bf16 %v2363, %v2357
    %v3614 = vpack.c.bf16 %v2522, %v2516
    %v3615 = vpack.c.bf16 %v2524, %v2518
    %v3616 = vpack.c.bf16 %v2683, %v2677
    %v3617 = vpack.c.bf16 %v2685, %v2679
    %v3618 = vpack.c.bf16 %v2844, %v2838
    %v3619 = vpack.c.bf16 %v2846, %v2840
    %v3620 = vpack.c.bf16 %v3005, %v2999
    %v3621 = vpack.c.bf16 %v3007, %v3001
    %v3622 = vpack.c.bf16 %v3166, %v3160
    %v3623 = vpack.c.bf16 %v3168, %v3162
    %v3624 = vpack.c.bf16 %v3327, %v3321
    %v3625 = vpack.c.bf16 %v3329, %v3323
    %v3626 = vpack.c.bf16 %v3488, %v3482
    %v3627 = vpack.c.bf16 %v3490, %v3484
    %v3628 = vpack.c.bf16 %v1085, %v1079
    %v3629 = vpack.c.bf16 %v1087, %v1081
    %v3630 = vpack.c.bf16 %v1246, %v1240
    %v3631 = vpack.c.bf16 %v1248, %v1242
    %v3632 = vpack.c.bf16 %v1407, %v1401
    %v3633 = vpack.c.bf16 %v1409, %v1403
    %v3634 = vpack.c.bf16 %v1568, %v1562
    %v3635 = vpack.c.bf16 %v1570, %v1564
    %v3636 = vpack.c.bf16 %v1729, %v1723
    %v3637 = vpack.c.bf16 %v1731, %v1725
    %v3638 = vpack.c.bf16 %v1890, %v1884
    %v3639 = vpack.c.bf16 %v1892, %v1886
    %v3640 = vpack.c.bf16 %v2051, %v2045
    %v3641 = vpack.c.bf16 %v2053, %v2047
    %v3642 = vpack.c.bf16 %v2212, %v2206
    %v3643 = vpack.c.bf16 %v2214, %v2208
    %v3644 = vpack.c.bf16 %v2373, %v2367
    %v3645 = vpack.c.bf16 %v2375, %v2369
    %v3646 = vpack.c.bf16 %v2534, %v2528
    %v3647 = vpack.c.bf16 %v2536, %v2530
    %v3648 = vpack.c.bf16 %v2695, %v2689
    %v3649 = vpack.c.bf16 %v2697, %v2691
    %v3650 = vpack.c.bf16 %v2856, %v2850
    %v3651 = vpack.c.bf16 %v2858, %v2852
    %v3652 = vpack.c.bf16 %v3017, %v3011
    %v3653 = vpack.c.bf16 %v3019, %v3013
    %v3654 = vpack.c.bf16 %v3178, %v3172
    %v3655 = vpack.c.bf16 %v3180, %v3174
    %v3656 = vpack.c.bf16 %v3339, %v3333
    %v3657 = vpack.c.bf16 %v3341, %v3335
    %v3658 = vpack.c.bf16 %v3500, %v3494
    %v3659 = vpack.c.bf16 %v3502, %v3496
    %v3660 = vpack.c.bf16 %v1097, %v1091
    %v3661 = vpack.c.bf16 %v1099, %v1093
    %v3662 = vpack.c.bf16 %v1258, %v1252
    %v3663 = vpack.c.bf16 %v1260, %v1254
    %v3664 = vpack.c.bf16 %v1419, %v1413
    %v3665 = vpack.c.bf16 %v1421, %v1415
    %v3666 = vpack.c.bf16 %v1580, %v1574
    %v3667 = vpack.c.bf16 %v1582, %v1576
    %v3668 = vpack.c.bf16 %v1741, %v1735
    %v3669 = vpack.c.bf16 %v1743, %v1737
    %v3670 = vpack.c.bf16 %v1902, %v1896
    %v3671 = vpack.c.bf16 %v1904, %v1898
    %v3672 = vpack.c.bf16 %v2063, %v2057
    %v3673 = vpack.c.bf16 %v2065, %v2059
    %v3674 = vpack.c.bf16 %v2224, %v2218
    %v3675 = vpack.c.bf16 %v2226, %v2220
    %v3676 = vpack.c.bf16 %v2385, %v2379
    %v3677 = vpack.c.bf16 %v2387, %v2381
    %v3678 = vpack.c.bf16 %v2546, %v2540
    %v3679 = vpack.c.bf16 %v2548, %v2542
    %v3680 = vpack.c.bf16 %v2707, %v2701
    %v3681 = vpack.c.bf16 %v2709, %v2703
    %v3682 = vpack.c.bf16 %v2868, %v2862
    %v3683 = vpack.c.bf16 %v2870, %v2864
    %v3684 = vpack.c.bf16 %v3029, %v3023
    %v3685 = vpack.c.bf16 %v3031, %v3025
    %v3686 = vpack.c.bf16 %v3190, %v3184
    %v3687 = vpack.c.bf16 %v3192, %v3186
    %v3688 = vpack.c.bf16 %v3351, %v3345
    %v3689 = vpack.c.bf16 %v3353, %v3347
    %v3690 = vpack.c.bf16 %v3512, %v3506
    %v3691 = vpack.c.bf16 %v3514, %v3508
    %v3692 = vpack.c.bf16 %v1109, %v1103
    %v3693 = vpack.c.bf16 %v1111, %v1105
    %v3694 = vpack.c.bf16 %v1270, %v1264
    %v3695 = vpack.c.bf16 %v1272, %v1266
    %v3696 = vpack.c.bf16 %v1431, %v1425
    %v3697 = vpack.c.bf16 %v1433, %v1427
    %v3698 = vpack.c.bf16 %v1592, %v1586
    %v3699 = vpack.c.bf16 %v1594, %v1588
    %v3700 = vpack.c.bf16 %v1753, %v1747
    %v3701 = vpack.c.bf16 %v1755, %v1749
    %v3702 = vpack.c.bf16 %v1914, %v1908
    %v3703 = vpack.c.bf16 %v1916, %v1910
    %v3704 = vpack.c.bf16 %v2075, %v2069
    %v3705 = vpack.c.bf16 %v2077, %v2071
    %v3706 = vpack.c.bf16 %v2236, %v2230
    %v3707 = vpack.c.bf16 %v2238, %v2232
    %v3708 = vpack.c.bf16 %v2397, %v2391
    %v3709 = vpack.c.bf16 %v2399, %v2393
    %v3710 = vpack.c.bf16 %v2558, %v2552
    %v3711 = vpack.c.bf16 %v2560, %v2554
    %v3712 = vpack.c.bf16 %v2719, %v2713
    %v3713 = vpack.c.bf16 %v2721, %v2715
    %v3714 = vpack.c.bf16 %v2880, %v2874
    %v3715 = vpack.c.bf16 %v2882, %v2876
    %v3716 = vpack.c.bf16 %v3041, %v3035
    %v3717 = vpack.c.bf16 %v3043, %v3037
    %v3718 = vpack.c.bf16 %v3202, %v3196
    %v3719 = vpack.c.bf16 %v3204, %v3198
    %v3720 = vpack.c.bf16 %v3363, %v3357
    %v3721 = vpack.c.bf16 %v3365, %v3359
    %v3722 = vpack.c.bf16 %v3524, %v3518
    %v3723 = vpack.c.bf16 %v3526, %v3520
    %v3724 = vpack.c.bf16 %v1121, %v1115
    %v3725 = vpack.c.bf16 %v1123, %v1117
    %v3726 = vpack.c.bf16 %v1282, %v1276
    %v3727 = vpack.c.bf16 %v1284, %v1278
    %v3728 = vpack.c.bf16 %v1443, %v1437
    %v3729 = vpack.c.bf16 %v1445, %v1439
    %v3730 = vpack.c.bf16 %v1604, %v1598
    %v3731 = vpack.c.bf16 %v1606, %v1600
    %v3732 = vpack.c.bf16 %v1765, %v1759
    %v3733 = vpack.c.bf16 %v1767, %v1761
    %v3734 = vpack.c.bf16 %v1926, %v1920
    %v3735 = vpack.c.bf16 %v1928, %v1922
    %v3736 = vpack.c.bf16 %v2087, %v2081
    %v3737 = vpack.c.bf16 %v2089, %v2083
    %v3738 = vpack.c.bf16 %v2248, %v2242
    %v3739 = vpack.c.bf16 %v2250, %v2244
    %v3740 = vpack.c.bf16 %v2409, %v2403
    %v3741 = vpack.c.bf16 %v2411, %v2405
    %v3742 = vpack.c.bf16 %v2570, %v2564
    %v3743 = vpack.c.bf16 %v2572, %v2566
    %v3744 = vpack.c.bf16 %v2731, %v2725
    %v3745 = vpack.c.bf16 %v2733, %v2727
    %v3746 = vpack.c.bf16 %v2892, %v2886
    %v3747 = vpack.c.bf16 %v2894, %v2888
    %v3748 = vpack.c.bf16 %v3053, %v3047
    %v3749 = vpack.c.bf16 %v3055, %v3049
    %v3750 = vpack.c.bf16 %v3214, %v3208
    %v3751 = vpack.c.bf16 %v3216, %v3210
    %v3752 = vpack.c.bf16 %v3375, %v3369
    %v3753 = vpack.c.bf16 %v3377, %v3371
    %v3754 = vpack.c.bf16 %v3536, %v3530
    %v3755 = vpack.c.bf16 %v3538, %v3532
    %v3756 = vpack.c.bf16 %v1133, %v1127
    %v3757 = vpack.c.bf16 %v1135, %v1129
    %v3758 = vpack.c.bf16 %v1294, %v1288
    %v3759 = vpack.c.bf16 %v1296, %v1290
    %v3760 = vpack.c.bf16 %v1455, %v1449
    %v3761 = vpack.c.bf16 %v1457, %v1451
    %v3762 = vpack.c.bf16 %v1616, %v1610
    %v3763 = vpack.c.bf16 %v1618, %v1612
    %v3764 = vpack.c.bf16 %v1777, %v1771
    %v3765 = vpack.c.bf16 %v1779, %v1773
    %v3766 = vpack.c.bf16 %v1938, %v1932
    %v3767 = vpack.c.bf16 %v1940, %v1934
    %v3768 = vpack.c.bf16 %v2099, %v2093
    %v3769 = vpack.c.bf16 %v2101, %v2095
    %v3770 = vpack.c.bf16 %v2260, %v2254
    %v3771 = vpack.c.bf16 %v2262, %v2256
    %v3772 = vpack.c.bf16 %v2421, %v2415
    %v3773 = vpack.c.bf16 %v2423, %v2417
    %v3774 = vpack.c.bf16 %v2582, %v2576
    %v3775 = vpack.c.bf16 %v2584, %v2578
    %v3776 = vpack.c.bf16 %v2743, %v2737
    %v3777 = vpack.c.bf16 %v2745, %v2739
    %v3778 = vpack.c.bf16 %v2904, %v2898
    %v3779 = vpack.c.bf16 %v2906, %v2900
    %v3780 = vpack.c.bf16 %v3065, %v3059
    %v3781 = vpack.c.bf16 %v3067, %v3061
    %v3782 = vpack.c.bf16 %v3226, %v3220
    %v3783 = vpack.c.bf16 %v3228, %v3222
    %v3784 = vpack.c.bf16 %v3387, %v3381
    %v3785 = vpack.c.bf16 %v3389, %v3383
    %v3786 = vpack.c.bf16 %v3548, %v3542
    %v3787 = vpack.c.bf16 %v3550, %v3544
    %v3788 = vpack.c.bf16 %v1145, %v1139
    %v3789 = vpack.c.bf16 %v1147, %v1141
    %v3790 = vpack.c.bf16 %v1306, %v1300
    %v3791 = vpack.c.bf16 %v1308, %v1302
    %v3792 = vpack.c.bf16 %v1467, %v1461
    %v3793 = vpack.c.bf16 %v1469, %v1463
    %v3794 = vpack.c.bf16 %v1628, %v1622
    %v3795 = vpack.c.bf16 %v1630, %v1624
    %v3796 = vpack.c.bf16 %v1789, %v1783
    %v3797 = vpack.c.bf16 %v1791, %v1785
    %v3798 = vpack.c.bf16 %v1950, %v1944
    %v3799 = vpack.c.bf16 %v1952, %v1946
    %v3800 = vpack.c.bf16 %v2111, %v2105
    %v3801 = vpack.c.bf16 %v2113, %v2107
    %v3802 = vpack.c.bf16 %v2272, %v2266
    %v3803 = vpack.c.bf16 %v2274, %v2268
    %v3804 = vpack.c.bf16 %v2433, %v2427
    %v3805 = vpack.c.bf16 %v2435, %v2429
    %v3806 = vpack.c.bf16 %v2594, %v2588
    %v3807 = vpack.c.bf16 %v2596, %v2590
    %v3808 = vpack.c.bf16 %v2755, %v2749
    %v3809 = vpack.c.bf16 %v2757, %v2751
    %v3810 = vpack.c.bf16 %v2916, %v2910
    %v3811 = vpack.c.bf16 %v2918, %v2912
    %v3812 = vpack.c.bf16 %v3077, %v3071
    %v3813 = vpack.c.bf16 %v3079, %v3073
    %v3814 = vpack.c.bf16 %v3238, %v3232
    %v3815 = vpack.c.bf16 %v3240, %v3234
    %v3816 = vpack.c.bf16 %v3399, %v3393
    %v3817 = vpack.c.bf16 %v3401, %v3395
    %v3818 = vpack.c.bf16 %v3560, %v3554
    %v3819 = vpack.c.bf16 %v3562, %v3556
    %v4076 = vunpack.c.l.b16 %v3564
    %v4077 = vunpack.c.l.b16 %v3565
    %v4078 = vunpack.c.l.b16 %v3566
    %v4079 = vunpack.c.l.b16 %v3567
    %v4080 = vunpack.c.l.b16 %v3568
    %v4081 = vunpack.c.l.b16 %v3569
    %v4082 = vunpack.c.l.b16 %v3570
    %v4083 = vunpack.c.l.b16 %v3571
    %v4084 = vunpack.c.l.b16 %v3572
    %v4085 = vunpack.c.l.b16 %v3573
    %v4086 = vunpack.c.l.b16 %v3574
    %v4087 = vunpack.c.l.b16 %v3575
    %v4088 = vunpack.c.l.b16 %v3576
    %v4089 = vunpack.c.l.b16 %v3577
    %v4090 = vunpack.c.l.b16 %v3578
    %v4091 = vunpack.c.l.b16 %v3579
    %v4092 = vunpack.c.l.b16 %v3580
    %v4093 = vunpack.c.l.b16 %v3581
    %v4094 = vunpack.c.l.b16 %v3582
    %v4095 = vunpack.c.l.b16 %v3583
    %v4096 = vunpack.c.l.b16 %v3584
    %v4097 = vunpack.c.l.b16 %v3585
    %v4098 = vunpack.c.l.b16 %v3586
    %v4099 = vunpack.c.l.b16 %v3587
    %v4100 = vunpack.c.l.b16 %v3588
    %v4101 = vunpack.c.l.b16 %v3589
    %v4102 = vunpack.c.l.b16 %v3590
    %v4103 = vunpack.c.l.b16 %v3591
    %v4104 = vunpack.c.l.b16 %v3592
    %v4105 = vunpack.c.l.b16 %v3593
    %v4106 = vunpack.c.l.b16 %v3594
    %v4107 = vunpack.c.l.b16 %v3595
    %v4108 = vunpack.c.h.b16 %v3564
    %v4109 = vunpack.c.h.b16 %v3565
    %v4110 = vunpack.c.h.b16 %v3566
    %v4111 = vunpack.c.h.b16 %v3567
    %v4112 = vunpack.c.h.b16 %v3568
    %v4113 = vunpack.c.h.b16 %v3569
    %v4114 = vunpack.c.h.b16 %v3570
    %v4115 = vunpack.c.h.b16 %v3571
    %v4116 = vunpack.c.h.b16 %v3572
    %v4117 = vunpack.c.h.b16 %v3573
    %v4118 = vunpack.c.h.b16 %v3574
    %v4119 = vunpack.c.h.b16 %v3575
    %v4120 = vunpack.c.h.b16 %v3576
    %v4121 = vunpack.c.h.b16 %v3577
    %v4122 = vunpack.c.h.b16 %v3578
    %v4123 = vunpack.c.h.b16 %v3579
    %v4124 = vunpack.c.h.b16 %v3580
    %v4125 = vunpack.c.h.b16 %v3581
    %v4126 = vunpack.c.h.b16 %v3582
    %v4127 = vunpack.c.h.b16 %v3583
    %v4128 = vunpack.c.h.b16 %v3584
    %v4129 = vunpack.c.h.b16 %v3585
    %v4130 = vunpack.c.h.b16 %v3586
    %v4131 = vunpack.c.h.b16 %v3587
    %v4132 = vunpack.c.h.b16 %v3588
    %v4133 = vunpack.c.h.b16 %v3589
    %v4134 = vunpack.c.h.b16 %v3590
    %v4135 = vunpack.c.h.b16 %v3591
    %v4136 = vunpack.c.h.b16 %v3592
    %v4137 = vunpack.c.h.b16 %v3593
    %v4138 = vunpack.c.h.b16 %v3594
    %v4139 = vunpack.c.h.b16 %v3595
    %v4140 = vunpack.c.l.b16 %v3596
    %v4141 = vunpack.c.l.b16 %v3597
    %v4142 = vunpack.c.l.b16 %v3598
    %v4143 = vunpack.c.l.b16 %v3599
    %v4144 = vunpack.c.l.b16 %v3600
    %v4145 = vunpack.c.l.b16 %v3601
    %v4146 = vunpack.c.l.b16 %v3602
    %v4147 = vunpack.c.l.b16 %v3603
    %v4148 = vunpack.c.l.b16 %v3604
    %v4149 = vunpack.c.l.b16 %v3605
    %v4150 = vunpack.c.l.b16 %v3606
    %v4151 = vunpack.c.l.b16 %v3607
    %v4152 = vunpack.c.l.b16 %v3608
    %v4153 = vunpack.c.l.b16 %v3609
    %v4154 = vunpack.c.l.b16 %v3610
    %v4155 = vunpack.c.l.b16 %v3611
    %v4156 = vunpack.c.l.b16 %v3612
    %v4157 = vunpack.c.l.b16 %v3613
    %v4158 = vunpack.c.l.b16 %v3614
    %v4159 = vunpack.c.l.b16 %v3615
    %v4160 = vunpack.c.l.b16 %v3616
    %v4161 = vunpack.c.l.b16 %v3617
    %v4162 = vunpack.c.l.b16 %v3618
    %v4163 = vunpack.c.l.b16 %v3619
    %v4164 = vunpack.c.l.b16 %v3620
    %v4165 = vunpack.c.l.b16 %v3621
    %v4166 = vunpack.c.l.b16 %v3622
    %v4167 = vunpack.c.l.b16 %v3623
    %v4168 = vunpack.c.l.b16 %v3624
    %v4169 = vunpack.c.l.b16 %v3625
    %v4170 = vunpack.c.l.b16 %v3626
    %v4171 = vunpack.c.l.b16 %v3627
    %v4172 = vunpack.c.h.b16 %v3596
    %v4173 = vunpack.c.h.b16 %v3597
    %v4174 = vunpack.c.h.b16 %v3598
    %v4175 = vunpack.c.h.b16 %v3599
    %v4176 = vunpack.c.h.b16 %v3600
    %v4177 = vunpack.c.h.b16 %v3601
    %v4178 = vunpack.c.h.b16 %v3602
    %v4179 = vunpack.c.h.b16 %v3603
    %v4180 = vunpack.c.h.b16 %v3604
    %v4181 = vunpack.c.h.b16 %v3605
    %v4182 = vunpack.c.h.b16 %v3606
    %v4183 = vunpack.c.h.b16 %v3607
    %v4184 = vunpack.c.h.b16 %v3608
    %v4185 = vunpack.c.h.b16 %v3609
    %v4186 = vunpack.c.h.b16 %v3610
    %v4187 = vunpack.c.h.b16 %v3611
    %v4188 = vunpack.c.h.b16 %v3612
    %v4189 = vunpack.c.h.b16 %v3613
    %v4190 = vunpack.c.h.b16 %v3614
    %v4191 = vunpack.c.h.b16 %v3615
    %v4192 = vunpack.c.h.b16 %v3616
    %v4193 = vunpack.c.h.b16 %v3617
    %v4194 = vunpack.c.h.b16 %v3618
    %v4195 = vunpack.c.h.b16 %v3619
    %v4196 = vunpack.c.h.b16 %v3620
    %v4197 = vunpack.c.h.b16 %v3621
    %v4198 = vunpack.c.h.b16 %v3622
    %v4199 = vunpack.c.h.b16 %v3623
    %v4200 = vunpack.c.h.b16 %v3624
    %v4201 = vunpack.c.h.b16 %v3625
    %v4202 = vunpack.c.h.b16 %v3626
    %v4203 = vunpack.c.h.b16 %v3627
    %v4204 = vunpack.c.l.b16 %v3628
    %v4205 = vunpack.c.l.b16 %v3629
    %v4206 = vunpack.c.l.b16 %v3630
    %v4207 = vunpack.c.l.b16 %v3631
    %v4208 = vunpack.c.l.b16 %v3632
    %v4209 = vunpack.c.l.b16 %v3633
    %v4210 = vunpack.c.l.b16 %v3634
    %v4211 = vunpack.c.l.b16 %v3635
    %v4212 = vunpack.c.l.b16 %v3636
    %v4213 = vunpack.c.l.b16 %v3637
    %v4214 = vunpack.c.l.b16 %v3638
    %v4215 = vunpack.c.l.b16 %v3639
    %v4216 = vunpack.c.l.b16 %v3640
    %v4217 = vunpack.c.l.b16 %v3641
    %v4218 = vunpack.c.l.b16 %v3642
    %v4219 = vunpack.c.l.b16 %v3643
    %v4220 = vunpack.c.l.b16 %v3644
    %v4221 = vunpack.c.l.b16 %v3645
    %v4222 = vunpack.c.l.b16 %v3646
    %v4223 = vunpack.c.l.b16 %v3647
    %v4224 = vunpack.c.l.b16 %v3648
    %v4225 = vunpack.c.l.b16 %v3649
    %v4226 = vunpack.c.l.b16 %v3650
    %v4227 = vunpack.c.l.b16 %v3651
    %v4228 = vunpack.c.l.b16 %v3652
    %v4229 = vunpack.c.l.b16 %v3653
    %v4230 = vunpack.c.l.b16 %v3654
    %v4231 = vunpack.c.l.b16 %v3655
    %v4232 = vunpack.c.l.b16 %v3656
    %v4233 = vunpack.c.l.b16 %v3657
    %v4234 = vunpack.c.l.b16 %v3658
    %v4235 = vunpack.c.l.b16 %v3659
    %v4236 = vunpack.c.h.b16 %v3628
    %v4237 = vunpack.c.h.b16 %v3629
    %v4238 = vunpack.c.h.b16 %v3630
    %v4239 = vunpack.c.h.b16 %v3631
    %v4240 = vunpack.c.h.b16 %v3632
    %v4241 = vunpack.c.h.b16 %v3633
    %v4242 = vunpack.c.h.b16 %v3634
    %v4243 = vunpack.c.h.b16 %v3635
    %v4244 = vunpack.c.h.b16 %v3636
    %v4245 = vunpack.c.h.b16 %v3637
    %v4246 = vunpack.c.h.b16 %v3638
    %v4247 = vunpack.c.h.b16 %v3639
    %v4248 = vunpack.c.h.b16 %v3640
    %v4249 = vunpack.c.h.b16 %v3641
    %v4250 = vunpack.c.h.b16 %v3642
    %v4251 = vunpack.c.h.b16 %v3643
    %v4252 = vunpack.c.h.b16 %v3644
    %v4253 = vunpack.c.h.b16 %v3645
    %v4254 = vunpack.c.h.b16 %v3646
    %v4255 = vunpack.c.h.b16 %v3647
    %v4256 = vunpack.c.h.b16 %v3648
    %v4257 = vunpack.c.h.b16 %v3649
    %v4258 = vunpack.c.h.b16 %v3650
    %v4259 = vunpack.c.h.b16 %v3651
    %v4260 = vunpack.c.h.b16 %v3652
    %v4261 = vunpack.c.h.b16 %v3653
    %v4262 = vunpack.c.h.b16 %v3654
    %v4263 = vunpack.c.h.b16 %v3655
    %v4264 = vunpack.c.h.b16 %v3656
    %v4265 = vunpack.c.h.b16 %v3657
    %v4266 = vunpack.c.h.b16 %v3658
    %v4267 = vunpack.c.h.b16 %v3659
    %v4268 = vunpack.c.l.b16 %v3660
    %v4269 = vunpack.c.l.b16 %v3661
    %v4270 = vunpack.c.l.b16 %v3662
    %v4271 = vunpack.c.l.b16 %v3663
    %v4272 = vunpack.c.l.b16 %v3664
    %v4273 = vunpack.c.l.b16 %v3665
    %v4274 = vunpack.c.l.b16 %v3666
    %v4275 = vunpack.c.l.b16 %v3667
    %v4276 = vunpack.c.l.b16 %v3668
    %v4277 = vunpack.c.l.b16 %v3669
    %v4278 = vunpack.c.l.b16 %v3670
    %v4279 = vunpack.c.l.b16 %v3671
    %v4280 = vunpack.c.l.b16 %v3672
    %v4281 = vunpack.c.l.b16 %v3673
    %v4282 = vunpack.c.l.b16 %v3674
    %v4283 = vunpack.c.l.b16 %v3675
    %v4284 = vunpack.c.l.b16 %v3676
    %v4285 = vunpack.c.l.b16 %v3677
    %v4286 = vunpack.c.l.b16 %v3678
    %v4287 = vunpack.c.l.b16 %v3679
    %v4288 = vunpack.c.l.b16 %v3680
    %v4289 = vunpack.c.l.b16 %v3681
    %v4290 = vunpack.c.l.b16 %v3682
    %v4291 = vunpack.c.l.b16 %v3683
    %v4292 = vunpack.c.l.b16 %v3684
    %v4293 = vunpack.c.l.b16 %v3685
    %v4294 = vunpack.c.l.b16 %v3686
    %v4295 = vunpack.c.l.b16 %v3687
    %v4296 = vunpack.c.l.b16 %v3688
    %v4297 = vunpack.c.l.b16 %v3689
    %v4298 = vunpack.c.l.b16 %v3690
    %v4299 = vunpack.c.l.b16 %v3691
    %v4300 = vunpack.c.h.b16 %v3660
    %v4301 = vunpack.c.h.b16 %v3661
    %v4302 = vunpack.c.h.b16 %v3662
    %v4303 = vunpack.c.h.b16 %v3663
    %v4304 = vunpack.c.h.b16 %v3664
    %v4305 = vunpack.c.h.b16 %v3665
    %v4306 = vunpack.c.h.b16 %v3666
    %v4307 = vunpack.c.h.b16 %v3667
    %v4308 = vunpack.c.h.b16 %v3668
    %v4309 = vunpack.c.h.b16 %v3669
    %v4310 = vunpack.c.h.b16 %v3670
    %v4311 = vunpack.c.h.b16 %v3671
    %v4312 = vunpack.c.h.b16 %v3672
    %v4313 = vunpack.c.h.b16 %v3673
    %v4314 = vunpack.c.h.b16 %v3674
    %v4315 = vunpack.c.h.b16 %v3675
    %v4316 = vunpack.c.h.b16 %v3676
    %v4317 = vunpack.c.h.b16 %v3677
    %v4318 = vunpack.c.h.b16 %v3678
    %v4319 = vunpack.c.h.b16 %v3679
    %v4320 = vunpack.c.h.b16 %v3680
    %v4321 = vunpack.c.h.b16 %v3681
    %v4322 = vunpack.c.h.b16 %v3682
    %v4323 = vunpack.c.h.b16 %v3683
    %v4324 = vunpack.c.h.b16 %v3684
    %v4325 = vunpack.c.h.b16 %v3685
    %v4326 = vunpack.c.h.b16 %v3686
    %v4327 = vunpack.c.h.b16 %v3687
    %v4328 = vunpack.c.h.b16 %v3688
    %v4329 = vunpack.c.h.b16 %v3689
    %v4330 = vunpack.c.h.b16 %v3690
    %v4331 = vunpack.c.h.b16 %v3691
    %v4332 = vunpack.c.l.b16 %v3692
    %v4333 = vunpack.c.l.b16 %v3693
    %v4334 = vunpack.c.l.b16 %v3694
    %v4335 = vunpack.c.l.b16 %v3695
    %v4336 = vunpack.c.l.b16 %v3696
    %v4337 = vunpack.c.l.b16 %v3697
    %v4338 = vunpack.c.l.b16 %v3698
    %v4339 = vunpack.c.l.b16 %v3699
    %v4340 = vunpack.c.l.b16 %v3700
    %v4341 = vunpack.c.l.b16 %v3701
    %v4342 = vunpack.c.l.b16 %v3702
    %v4343 = vunpack.c.l.b16 %v3703
    %v4344 = vunpack.c.l.b16 %v3704
    %v4345 = vunpack.c.l.b16 %v3705
    %v4346 = vunpack.c.l.b16 %v3706
    %v4347 = vunpack.c.l.b16 %v3707
    %v4348 = vunpack.c.l.b16 %v3708
    %v4349 = vunpack.c.l.b16 %v3709
    %v4350 = vunpack.c.l.b16 %v3710
    %v4351 = vunpack.c.l.b16 %v3711
    %v4352 = vunpack.c.l.b16 %v3712
    %v4353 = vunpack.c.l.b16 %v3713
    %v4354 = vunpack.c.l.b16 %v3714
    %v4355 = vunpack.c.l.b16 %v3715
    %v4356 = vunpack.c.l.b16 %v3716
    %v4357 = vunpack.c.l.b16 %v3717
    %v4358 = vunpack.c.l.b16 %v3718
    %v4359 = vunpack.c.l.b16 %v3719
    %v4360 = vunpack.c.l.b16 %v3720
    %v4361 = vunpack.c.l.b16 %v3721
    %v4362 = vunpack.c.l.b16 %v3722
    %v4363 = vunpack.c.l.b16 %v3723
    %v4364 = vunpack.c.h.b16 %v3692
    %v4365 = vunpack.c.h.b16 %v3693
    %v4366 = vunpack.c.h.b16 %v3694
    %v4367 = vunpack.c.h.b16 %v3695
    %v4368 = vunpack.c.h.b16 %v3696
    %v4369 = vunpack.c.h.b16 %v3697
    %v4370 = vunpack.c.h.b16 %v3698
    %v4371 = vunpack.c.h.b16 %v3699
    %v4372 = vunpack.c.h.b16 %v3700
    %v4373 = vunpack.c.h.b16 %v3701
    %v4374 = vunpack.c.h.b16 %v3702
    %v4375 = vunpack.c.h.b16 %v3703
    %v4376 = vunpack.c.h.b16 %v3704
    %v4377 = vunpack.c.h.b16 %v3705
    %v4378 = vunpack.c.h.b16 %v3706
    %v4379 = vunpack.c.h.b16 %v3707
    %v4380 = vunpack.c.h.b16 %v3708
    %v4381 = vunpack.c.h.b16 %v3709
    %v4382 = vunpack.c.h.b16 %v3710
    %v4383 = vunpack.c.h.b16 %v3711
    %v4384 = vunpack.c.h.b16 %v3712
    %v4385 = vunpack.c.h.b16 %v3713
    %v4386 = vunpack.c.h.b16 %v3714
    %v4387 = vunpack.c.h.b16 %v3715
    %v4388 = vunpack.c.h.b16 %v3716
    %v4389 = vunpack.c.h.b16 %v3717
    %v4390 = vunpack.c.h.b16 %v3718
    %v4391 = vunpack.c.h.b16 %v3719
    %v4392 = vunpack.c.h.b16 %v3720
    %v4393 = vunpack.c.h.b16 %v3721
    %v4394 = vunpack.c.h.b16 %v3722
    %v4395 = vunpack.c.h.b16 %v3723
    %v4396 = vunpack.c.l.b16 %v3724
    %v4397 = vunpack.c.l.b16 %v3725
    %v4398 = vunpack.c.l.b16 %v3726
    %v4399 = vunpack.c.l.b16 %v3727
    %v4400 = vunpack.c.l.b16 %v3728
    %v4401 = vunpack.c.l.b16 %v3729
    %v4402 = vunpack.c.l.b16 %v3730
    %v4403 = vunpack.c.l.b16 %v3731
    %v4404 = vunpack.c.l.b16 %v3732
    %v4405 = vunpack.c.l.b16 %v3733
    %v4406 = vunpack.c.l.b16 %v3734
    %v4407 = vunpack.c.l.b16 %v3735
    %v4408 = vunpack.c.l.b16 %v3736
    %v4409 = vunpack.c.l.b16 %v3737
    %v4410 = vunpack.c.l.b16 %v3738
    %v4411 = vunpack.c.l.b16 %v3739
    %v4412 = vunpack.c.l.b16 %v3740
    %v4413 = vunpack.c.l.b16 %v3741
    %v4414 = vunpack.c.l.b16 %v3742
    %v4415 = vunpack.c.l.b16 %v3743
    %v4416 = vunpack.c.l.b16 %v3744
    %v4417 = vunpack.c.l.b16 %v3745
    %v4418 = vunpack.c.l.b16 %v3746
    %v4419 = vunpack.c.l.b16 %v3747
    %v4420 = vunpack.c.l.b16 %v3748
    %v4421 = vunpack.c.l.b16 %v3749
    %v4422 = vunpack.c.l.b16 %v3750
    %v4423 = vunpack.c.l.b16 %v3751
    %v4424 = vunpack.c.l.b16 %v3752
    %v4425 = vunpack.c.l.b16 %v3753
    %v4426 = vunpack.c.l.b16 %v3754
    %v4427 = vunpack.c.l.b16 %v3755
    %v4428 = vunpack.c.h.b16 %v3724
    %v4429 = vunpack.c.h.b16 %v3725
    %v4430 = vunpack.c.h.b16 %v3726
    %v4431 = vunpack.c.h.b16 %v3727
    %v4432 = vunpack.c.h.b16 %v3728
    %v4433 = vunpack.c.h.b16 %v3729
    %v4434 = vunpack.c.h.b16 %v3730
    %v4435 = vunpack.c.h.b16 %v3731
    %v4436 = vunpack.c.h.b16 %v3732
    %v4437 = vunpack.c.h.b16 %v3733
    %v4438 = vunpack.c.h.b16 %v3734
    %v4439 = vunpack.c.h.b16 %v3735
    %v4440 = vunpack.c.h.b16 %v3736
    %v4441 = vunpack.c.h.b16 %v3737
    %v4442 = vunpack.c.h.b16 %v3738
    %v4443 = vunpack.c.h.b16 %v3739
    %v4444 = vunpack.c.h.b16 %v3740
    %v4445 = vunpack.c.h.b16 %v3741
    %v4446 = vunpack.c.h.b16 %v3742
    %v4447 = vunpack.c.h.b16 %v3743
    %v4448 = vunpack.c.h.b16 %v3744
    %v4449 = vunpack.c.h.b16 %v3745
    %v4450 = vunpack.c.h.b16 %v3746
    %v4451 = vunpack.c.h.b16 %v3747
    %v4452 = vunpack.c.h.b16 %v3748
    %v4453 = vunpack.c.h.b16 %v3749
    %v4454 = vunpack.c.h.b16 %v3750
    %v4455 = vunpack.c.h.b16 %v3751
    %v4456 = vunpack.c.h.b16 %v3752
    %v4457 = vunpack.c.h.b16 %v3753
    %v4458 = vunpack.c.h.b16 %v3754
    %v4459 = vunpack.c.h.b16 %v3755
    %v4460 = vunpack.c.l.b16 %v3756
    %v4461 = vunpack.c.l.b16 %v3757
    %v4462 = vunpack.c.l.b16 %v3758
    %v4463 = vunpack.c.l.b16 %v3759
    %v4464 = vunpack.c.l.b16 %v3760
    %v4465 = vunpack.c.l.b16 %v3761
    %v4466 = vunpack.c.l.b16 %v3762
    %v4467 = vunpack.c.l.b16 %v3763
    %v4468 = vunpack.c.l.b16 %v3764
    %v4469 = vunpack.c.l.b16 %v3765
    %v4470 = vunpack.c.l.b16 %v3766
    %v4471 = vunpack.c.l.b16 %v3767
    %v4472 = vunpack.c.l.b16 %v3768
    %v4473 = vunpack.c.l.b16 %v3769
    %v4474 = vunpack.c.l.b16 %v3770
    %v4475 = vunpack.c.l.b16 %v3771
    %v4476 = vunpack.c.l.b16 %v3772
    %v4477 = vunpack.c.l.b16 %v3773
    %v4478 = vunpack.c.l.b16 %v3774
    %v4479 = vunpack.c.l.b16 %v3775
    %v4480 = vunpack.c.l.b16 %v3776
    %v4481 = vunpack.c.l.b16 %v3777
    %v4482 = vunpack.c.l.b16 %v3778
    %v4483 = vunpack.c.l.b16 %v3779
    %v4484 = vunpack.c.l.b16 %v3780
    %v4485 = vunpack.c.l.b16 %v3781
    %v4486 = vunpack.c.l.b16 %v3782
    %v4487 = vunpack.c.l.b16 %v3783
    %v4488 = vunpack.c.l.b16 %v3784
    %v4489 = vunpack.c.l.b16 %v3785
    %v4490 = vunpack.c.l.b16 %v3786
    %v4491 = vunpack.c.l.b16 %v3787
    %v4492 = vunpack.c.h.b16 %v3756
    %v4493 = vunpack.c.h.b16 %v3757
    %v4494 = vunpack.c.h.b16 %v3758
    %v4495 = vunpack.c.h.b16 %v3759
    %v4496 = vunpack.c.h.b16 %v3760
    %v4497 = vunpack.c.h.b16 %v3761
    %v4498 = vunpack.c.h.b16 %v3762
    %v4499 = vunpack.c.h.b16 %v3763
    %v4500 = vunpack.c.h.b16 %v3764
    %v4501 = vunpack.c.h.b16 %v3765
    %v4502 = vunpack.c.h.b16 %v3766
    %v4503 = vunpack.c.h.b16 %v3767
    %v4504 = vunpack.c.h.b16 %v3768
    %v4505 = vunpack.c.h.b16 %v3769
    %v4506 = vunpack.c.h.b16 %v3770
    %v4507 = vunpack.c.h.b16 %v3771
    %v4508 = vunpack.c.h.b16 %v3772
    %v4509 = vunpack.c.h.b16 %v3773
    %v4510 = vunpack.c.h.b16 %v3774
    %v4511 = vunpack.c.h.b16 %v3775
    %v4512 = vunpack.c.h.b16 %v3776
    %v4513 = vunpack.c.h.b16 %v3777
    %v4514 = vunpack.c.h.b16 %v3778
    %v4515 = vunpack.c.h.b16 %v3779
    %v4516 = vunpack.c.h.b16 %v3780
    %v4517 = vunpack.c.h.b16 %v3781
    %v4518 = vunpack.c.h.b16 %v3782
    %v4519 = vunpack.c.h.b16 %v3783
    %v4520 = vunpack.c.h.b16 %v3784
    %v4521 = vunpack.c.h.b16 %v3785
    %v4522 = vunpack.c.h.b16 %v3786
    %v4523 = vunpack.c.h.b16 %v3787
    %v4524 = vunpack.c.l.b16 %v3788
    %v4525 = vunpack.c.l.b16 %v3789
    %v4526 = vunpack.c.l.b16 %v3790
    %v4527 = vunpack.c.l.b16 %v3791
    %v4528 = vunpack.c.l.b16 %v3792
    %v4529 = vunpack.c.l.b16 %v3793
    %v4530 = vunpack.c.l.b16 %v3794
    %v4531 = vunpack.c.l.b16 %v3795
    %v4532 = vunpack.c.l.b16 %v3796
    %v4533 = vunpack.c.l.b16 %v3797
    %v4534 = vunpack.c.l.b16 %v3798
    %v4535 = vunpack.c.l.b16 %v3799
    %v4536 = vunpack.c.l.b16 %v3800
    %v4537 = vunpack.c.l.b16 %v3801
    %v4538 = vunpack.c.l.b16 %v3802
    %v4539 = vunpack.c.l.b16 %v3803
    %v4540 = vunpack.c.l.b16 %v3804
    %v4541 = vunpack.c.l.b16 %v3805
    %v4542 = vunpack.c.l.b16 %v3806
    %v4543 = vunpack.c.l.b16 %v3807
    %v4544 = vunpack.c.l.b16 %v3808
    %v4545 = vunpack.c.l.b16 %v3809
    %v4546 = vunpack.c.l.b16 %v3810
    %v4547 = vunpack.c.l.b16 %v3811
    %v4548 = vunpack.c.l.b16 %v3812
    %v4549 = vunpack.c.l.b16 %v3813
    %v4550 = vunpack.c.l.b16 %v3814
    %v4551 = vunpack.c.l.b16 %v3815
    %v4552 = vunpack.c.l.b16 %v3816
    %v4553 = vunpack.c.l.b16 %v3817
    %v4554 = vunpack.c.l.b16 %v3818
    %v4555 = vunpack.c.l.b16 %v3819
    %v4556 = vunpack.c.h.b16 %v3788
    %v4557 = vunpack.c.h.b16 %v3789
    %v4558 = vunpack.c.h.b16 %v3790
    %v4559 = vunpack.c.h.b16 %v3791
    %v4560 = vunpack.c.h.b16 %v3792
    %v4561 = vunpack.c.h.b16 %v3793
    %v4562 = vunpack.c.h.b16 %v3794
    %v4563 = vunpack.c.h.b16 %v3795
    %v4564 = vunpack.c.h.b16 %v3796
    %v4565 = vunpack.c.h.b16 %v3797
    %v4566 = vunpack.c.h.b16 %v3798
    %v4567 = vunpack.c.h.b16 %v3799
    %v4568 = vunpack.c.h.b16 %v3800
    %v4569 = vunpack.c.h.b16 %v3801
    %v4570 = vunpack.c.h.b16 %v3802
    %v4571 = vunpack.c.h.b16 %v3803
    %v4572 = vunpack.c.h.b16 %v3804
    %v4573 = vunpack.c.h.b16 %v3805
    %v4574 = vunpack.c.h.b16 %v3806
    %v4575 = vunpack.c.h.b16 %v3807
    %v4576 = vunpack.c.h.b16 %v3808
    %v4577 = vunpack.c.h.b16 %v3809
    %v4578 = vunpack.c.h.b16 %v3810
    %v4579 = vunpack.c.h.b16 %v3811
    %v4580 = vunpack.c.h.b16 %v3812
    %v4581 = vunpack.c.h.b16 %v3813
    %v4582 = vunpack.c.h.b16 %v3814
    %v4583 = vunpack.c.h.b16 %v3815
    %v4584 = vunpack.c.h.b16 %v3816
    %v4585 = vunpack.c.h.b16 %v3817
    %v4586 = vunpack.c.h.b16 %v3818
    %v4587 = vunpack.c.h.b16 %v3819
    %v4588 = vpack.c.b16 %v4077, %v4076
    %v4589 = vpack.c.b16 %v4079, %v4078
    %v4590 = vpack.c.b16 %v4081, %v4080
    %v4591 = vpack.c.b16 %v4083, %v4082
    %v4592 = vpack.c.b16 %v4085, %v4084
    %v4593 = vpack.c.b16 %v4087, %v4086
    %v4594 = vpack.c.b16 %v4089, %v4088
    %v4595 = vpack.c.b16 %v4091, %v4090
    %v4596 = vpack.c.b16 %v4093, %v4092
    %v4597 = vpack.c.b16 %v4095, %v4094
    %v4598 = vpack.c.b16 %v4097, %v4096
    %v4599 = vpack.c.b16 %v4099, %v4098
    %v4600 = vpack.c.b16 %v4101, %v4100
    %v4601 = vpack.c.b16 %v4103, %v4102
    %v4602 = vpack.c.b16 %v4105, %v4104
    %v4603 = vpack.c.b16 %v4107, %v4106
    %v4604 = vpack.c.b16 %v4109, %v4108
    %v4605 = vpack.c.b16 %v4111, %v4110
    %v4606 = vpack.c.b16 %v4113, %v4112
    %v4607 = vpack.c.b16 %v4115, %v4114
    %v4608 = vpack.c.b16 %v4117, %v4116
    %v4609 = vpack.c.b16 %v4119, %v4118
    %v4610 = vpack.c.b16 %v4121, %v4120
    %v4611 = vpack.c.b16 %v4123, %v4122
    %v4612 = vpack.c.b16 %v4125, %v4124
    %v4613 = vpack.c.b16 %v4127, %v4126
    %v4614 = vpack.c.b16 %v4129, %v4128
    %v4615 = vpack.c.b16 %v4131, %v4130
    %v4616 = vpack.c.b16 %v4133, %v4132
    %v4617 = vpack.c.b16 %v4135, %v4134
    %v4618 = vpack.c.b16 %v4137, %v4136
    %v4619 = vpack.c.b16 %v4139, %v4138
    %v4620 = vpack.c.b16 %v4141, %v4140
    %v4621 = vpack.c.b16 %v4143, %v4142
    %v4622 = vpack.c.b16 %v4145, %v4144
    %v4623 = vpack.c.b16 %v4147, %v4146
    %v4624 = vpack.c.b16 %v4149, %v4148
    %v4625 = vpack.c.b16 %v4151, %v4150
    %v4626 = vpack.c.b16 %v4153, %v4152
    %v4627 = vpack.c.b16 %v4155, %v4154
    %v4628 = vpack.c.b16 %v4157, %v4156
    %v4629 = vpack.c.b16 %v4159, %v4158
    %v4630 = vpack.c.b16 %v4161, %v4160
    %v4631 = vpack.c.b16 %v4163, %v4162
    %v4632 = vpack.c.b16 %v4165, %v4164
    %v4633 = vpack.c.b16 %v4167, %v4166
    %v4634 = vpack.c.b16 %v4169, %v4168
    %v4635 = vpack.c.b16 %v4171, %v4170
    %v4636 = vpack.c.b16 %v4173, %v4172
    %v4637 = vpack.c.b16 %v4175, %v4174
    %v4638 = vpack.c.b16 %v4177, %v4176
    %v4639 = vpack.c.b16 %v4179, %v4178
    %v4640 = vpack.c.b16 %v4181, %v4180
    %v4641 = vpack.c.b16 %v4183, %v4182
    %v4642 = vpack.c.b16 %v4185, %v4184
    %v4643 = vpack.c.b16 %v4187, %v4186
    %v4644 = vpack.c.b16 %v4189, %v4188
    %v4645 = vpack.c.b16 %v4191, %v4190
    %v4646 = vpack.c.b16 %v4193, %v4192
    %v4647 = vpack.c.b16 %v4195, %v4194
    %v4648 = vpack.c.b16 %v4197, %v4196
    %v4649 = vpack.c.b16 %v4199, %v4198
    %v4650 = vpack.c.b16 %v4201, %v4200
    %v4651 = vpack.c.b16 %v4203, %v4202
    %v4652 = vpack.c.b16 %v4205, %v4204
    %v4653 = vpack.c.b16 %v4207, %v4206
    %v4654 = vpack.c.b16 %v4209, %v4208
    %v4655 = vpack.c.b16 %v4211, %v4210
    %v4656 = vpack.c.b16 %v4213, %v4212
    %v4657 = vpack.c.b16 %v4215, %v4214
    %v4658 = vpack.c.b16 %v4217, %v4216
    %v4659 = vpack.c.b16 %v4219, %v4218
    %v4660 = vpack.c.b16 %v4221, %v4220
    %v4661 = vpack.c.b16 %v4223, %v4222
    %v4662 = vpack.c.b16 %v4225, %v4224
    %v4663 = vpack.c.b16 %v4227, %v4226
    %v4664 = vpack.c.b16 %v4229, %v4228
    %v4665 = vpack.c.b16 %v4231, %v4230
    %v4666 = vpack.c.b16 %v4233, %v4232
    %v4667 = vpack.c.b16 %v4235, %v4234
    %v4668 = vpack.c.b16 %v4237, %v4236
    %v4669 = vpack.c.b16 %v4239, %v4238
    %v4670 = vpack.c.b16 %v4241, %v4240
    %v4671 = vpack.c.b16 %v4243, %v4242
    %v4672 = vpack.c.b16 %v4245, %v4244
    %v4673 = vpack.c.b16 %v4247, %v4246
    %v4674 = vpack.c.b16 %v4249, %v4248
    %v4675 = vpack.c.b16 %v4251, %v4250
    %v4676 = vpack.c.b16 %v4253, %v4252
    %v4677 = vpack.c.b16 %v4255, %v4254
    %v4678 = vpack.c.b16 %v4257, %v4256
    %v4679 = vpack.c.b16 %v4259, %v4258
    %v4680 = vpack.c.b16 %v4261, %v4260
    %v4681 = vpack.c.b16 %v4263, %v4262
    %v4682 = vpack.c.b16 %v4265, %v4264
    %v4683 = vpack.c.b16 %v4267, %v4266
    %v4684 = vpack.c.b16 %v4269, %v4268
    %v4685 = vpack.c.b16 %v4271, %v4270
    %v4686 = vpack.c.b16 %v4273, %v4272
    %v4687 = vpack.c.b16 %v4275, %v4274
    %v4688 = vpack.c.b16 %v4277, %v4276
    %v4689 = vpack.c.b16 %v4279, %v4278
    %v4690 = vpack.c.b16 %v4281, %v4280
    %v4691 = vpack.c.b16 %v4283, %v4282
    %v4692 = vpack.c.b16 %v4285, %v4284
    %v4693 = vpack.c.b16 %v4287, %v4286
    %v4694 = vpack.c.b16 %v4289, %v4288
    %v4695 = vpack.c.b16 %v4291, %v4290
    %v4696 = vpack.c.b16 %v4293, %v4292
    %v4697 = vpack.c.b16 %v4295, %v4294
    %v4698 = vpack.c.b16 %v4297, %v4296
    %v4699 = vpack.c.b16 %v4299, %v4298
    %v4700 = vpack.c.b16 %v4301, %v4300
    %v4701 = vpack.c.b16 %v4303, %v4302
    %v4702 = vpack.c.b16 %v4305, %v4304
    %v4703 = vpack.c.b16 %v4307, %v4306
    %v4704 = vpack.c.b16 %v4309, %v4308
    %v4705 = vpack.c.b16 %v4311, %v4310
    %v4706 = vpack.c.b16 %v4313, %v4312
    %v4707 = vpack.c.b16 %v4315, %v4314
    %v4708 = vpack.c.b16 %v4317, %v4316
    %v4709 = vpack.c.b16 %v4319, %v4318
    %v4710 = vpack.c.b16 %v4321, %v4320
    %v4711 = vpack.c.b16 %v4323, %v4322
    %v4712 = vpack.c.b16 %v4325, %v4324
    %v4713 = vpack.c.b16 %v4327, %v4326
    %v4714 = vpack.c.b16 %v4329, %v4328
    %v4715 = vpack.c.b16 %v4331, %v4330
    %v4716 = vpack.c.b16 %v4333, %v4332
    %v4717 = vpack.c.b16 %v4335, %v4334
    %v4718 = vpack.c.b16 %v4337, %v4336
    %v4719 = vpack.c.b16 %v4339, %v4338
    %v4720 = vpack.c.b16 %v4341, %v4340
    %v4721 = vpack.c.b16 %v4343, %v4342
    %v4722 = vpack.c.b16 %v4345, %v4344
    %v4723 = vpack.c.b16 %v4347, %v4346
    %v4724 = vpack.c.b16 %v4349, %v4348
    %v4725 = vpack.c.b16 %v4351, %v4350
    %v4726 = vpack.c.b16 %v4353, %v4352
    %v4727 = vpack.c.b16 %v4355, %v4354
    %v4728 = vpack.c.b16 %v4357, %v4356
    %v4729 = vpack.c.b16 %v4359, %v4358
    %v4730 = vpack.c.b16 %v4361, %v4360
    %v4731 = vpack.c.b16 %v4363, %v4362
    %v4732 = vpack.c.b16 %v4365, %v4364
    %v4733 = vpack.c.b16 %v4367, %v4366
    %v4734 = vpack.c.b16 %v4369, %v4368
    %v4735 = vpack.c.b16 %v4371, %v4370
    %v4736 = vpack.c.b16 %v4373, %v4372
    %v4737 = vpack.c.b16 %v4375, %v4374
    %v4738 = vpack.c.b16 %v4377, %v4376
    %v4739 = vpack.c.b16 %v4379, %v4378
    %v4740 = vpack.c.b16 %v4381, %v4380
    %v4741 = vpack.c.b16 %v4383, %v4382
    %v4742 = vpack.c.b16 %v4385, %v4384
    %v4743 = vpack.c.b16 %v4387, %v4386
    %v4744 = vpack.c.b16 %v4389, %v4388
    %v4745 = vpack.c.b16 %v4391, %v4390
    %v4746 = vpack.c.b16 %v4393, %v4392
    %v4747 = vpack.c.b16 %v4395, %v4394
    %v4748 = vpack.c.b16 %v4397, %v4396
    %v4749 = vpack.c.b16 %v4399, %v4398
    %v4750 = vpack.c.b16 %v4401, %v4400
    %v4751 = vpack.c.b16 %v4403, %v4402
    %v4752 = vpack.c.b16 %v4405, %v4404
    %v4753 = vpack.c.b16 %v4407, %v4406
    %v4754 = vpack.c.b16 %v4409, %v4408
    %v4755 = vpack.c.b16 %v4411, %v4410
    %v4756 = vpack.c.b16 %v4413, %v4412
    %v4757 = vpack.c.b16 %v4415, %v4414
    %v4758 = vpack.c.b16 %v4417, %v4416
    %v4759 = vpack.c.b16 %v4419, %v4418
    %v4760 = vpack.c.b16 %v4421, %v4420
    %v4761 = vpack.c.b16 %v4423, %v4422
    %v4762 = vpack.c.b16 %v4425, %v4424
    %v4763 = vpack.c.b16 %v4427, %v4426
    %v4764 = vpack.c.b16 %v4429, %v4428
    %v4765 = vpack.c.b16 %v4431, %v4430
    %v4766 = vpack.c.b16 %v4433, %v4432
    %v4767 = vpack.c.b16 %v4435, %v4434
    %v4768 = vpack.c.b16 %v4437, %v4436
    %v4769 = vpack.c.b16 %v4439, %v4438
    %v4770 = vpack.c.b16 %v4441, %v4440
    %v4771 = vpack.c.b16 %v4443, %v4442
    %v4772 = vpack.c.b16 %v4445, %v4444
    %v4773 = vpack.c.b16 %v4447, %v4446
    %v4774 = vpack.c.b16 %v4449, %v4448
    %v4775 = vpack.c.b16 %v4451, %v4450
    %v4776 = vpack.c.b16 %v4453, %v4452
    %v4777 = vpack.c.b16 %v4455, %v4454
    %v4778 = vpack.c.b16 %v4457, %v4456
    %v4779 = vpack.c.b16 %v4459, %v4458
    %v4780 = vpack.c.b16 %v4461, %v4460
    %v4781 = vpack.c.b16 %v4463, %v4462
    %v4782 = vpack.c.b16 %v4465, %v4464
    %v4783 = vpack.c.b16 %v4467, %v4466
    %v4784 = vpack.c.b16 %v4469, %v4468
    %v4785 = vpack.c.b16 %v4471, %v4470
    %v4786 = vpack.c.b16 %v4473, %v4472
    %v4787 = vpack.c.b16 %v4475, %v4474
    %v4788 = vpack.c.b16 %v4477, %v4476
    %v4789 = vpack.c.b16 %v4479, %v4478
    %v4790 = vpack.c.b16 %v4481, %v4480
    %v4791 = vpack.c.b16 %v4483, %v4482
    %v4792 = vpack.c.b16 %v4485, %v4484
    %v4793 = vpack.c.b16 %v4487, %v4486
    %v4794 = vpack.c.b16 %v4489, %v4488
    %v4795 = vpack.c.b16 %v4491, %v4490
    %v4796 = vpack.c.b16 %v4493, %v4492
    %v4797 = vpack.c.b16 %v4495, %v4494
    %v4798 = vpack.c.b16 %v4497, %v4496
    %v4799 = vpack.c.b16 %v4499, %v4498
    %v4800 = vpack.c.b16 %v4501, %v4500
    %v4801 = vpack.c.b16 %v4503, %v4502
    %v4802 = vpack.c.b16 %v4505, %v4504
    %v4803 = vpack.c.b16 %v4507, %v4506
    %v4804 = vpack.c.b16 %v4509, %v4508
    %v4805 = vpack.c.b16 %v4511, %v4510
    %v4806 = vpack.c.b16 %v4513, %v4512
    %v4807 = vpack.c.b16 %v4515, %v4514
    %v4808 = vpack.c.b16 %v4517, %v4516
    %v4809 = vpack.c.b16 %v4519, %v4518
    %v4810 = vpack.c.b16 %v4521, %v4520
    %v4811 = vpack.c.b16 %v4523, %v4522
    %v4812 = vpack.c.b16 %v4525, %v4524
    %v4813 = vpack.c.b16 %v4527, %v4526
    %v4814 = vpack.c.b16 %v4529, %v4528
    %v4815 = vpack.c.b16 %v4531, %v4530
    %v4816 = vpack.c.b16 %v4533, %v4532
    %v4817 = vpack.c.b16 %v4535, %v4534
    %v4818 = vpack.c.b16 %v4537, %v4536
    %v4819 = vpack.c.b16 %v4539, %v4538
    %v4820 = vpack.c.b16 %v4541, %v4540
    %v4821 = vpack.c.b16 %v4543, %v4542
    %v4822 = vpack.c.b16 %v4545, %v4544
    %v4823 = vpack.c.b16 %v4547, %v4546
    %v4824 = vpack.c.b16 %v4549, %v4548
    %v4825 = vpack.c.b16 %v4551, %v4550
    %v4826 = vpack.c.b16 %v4553, %v4552
    %v4827 = vpack.c.b16 %v4555, %v4554
    %v4828 = vpack.c.b16 %v4557, %v4556
    %v4829 = vpack.c.b16 %v4559, %v4558
    %v4830 = vpack.c.b16 %v4561, %v4560
    %v4831 = vpack.c.b16 %v4563, %v4562
    %v4832 = vpack.c.b16 %v4565, %v4564
    %v4833 = vpack.c.b16 %v4567, %v4566
    %v4834 = vpack.c.b16 %v4569, %v4568
    %v4835 = vpack.c.b16 %v4571, %v4570
    %v4836 = vpack.c.b16 %v4573, %v4572
    %v4837 = vpack.c.b16 %v4575, %v4574
    %v4838 = vpack.c.b16 %v4577, %v4576
    %v4839 = vpack.c.b16 %v4579, %v4578
    %v4840 = vpack.c.b16 %v4581, %v4580
    %v4841 = vpack.c.b16 %v4583, %v4582
    %v4842 = vpack.c.b16 %v4585, %v4584
    %v4843 = vpack.c.b16 %v4587, %v4586
    %5100 = vst [vmem:[#allocation10] sm:$0xff] %v4588
    %5101 = vst [vmem:[#allocation10 + $0x8] sm:$0xff] %v4589
    %5102 = vst [vmem:[#allocation10 + $0x10] sm:$0xff] %v4590
    %5103 = vst [vmem:[#allocation10 + $0x18] sm:$0xff] %v4591
    %5104 = vst [vmem:[#allocation10 + $0x20] sm:$0xff] %v4592
    %5105 = vst [vmem:[#allocation10 + $0x28] sm:$0xff] %v4593
    %5106 = vst [vmem:[#allocation10 + $0x30] sm:$0xff] %v4594
    %5107 = vst [vmem:[#allocation10 + $0x38] sm:$0xff] %v4595
    %5108 = vst [vmem:[#allocation10 + $0x40] sm:$0xff] %v4596
    %5109 = vst [vmem:[#allocation10 + $0x48] sm:$0xff] %v4597
    %5110 = vst [vmem:[#allocation10 + $0x50] sm:$0xff] %v4598
    %5111 = vst [vmem:[#allocation10 + $0x58] sm:$0xff] %v4599
    %5112 = vst [vmem:[#allocation10 + $0x60] sm:$0xff] %v4600
    %5113 = vst [vmem:[#allocation10 + $0x68] sm:$0xff] %v4601
    %5114 = vst [vmem:[#allocation10 + $0x70] sm:$0xff] %v4602
    %5115 = vst [vmem:[#allocation10 + $0x78] sm:$0xff] %v4603
    %5116 = vst [vmem:[#allocation10 + $0x80] sm:$0xff] %v4604
    %5117 = vst [vmem:[#allocation10 + $0x88] sm:$0xff] %v4605
    %5118 = vst [vmem:[#allocation10 + $0x90] sm:$0xff] %v4606
    %5119 = vst [vmem:[#allocation10 + $0x98] sm:$0xff] %v4607
    %5120 = vst [vmem:[#allocation10 + $0xa0] sm:$0xff] %v4608
    %5121 = vst [vmem:[#allocation10 + $0xa8] sm:$0xff] %v4609
    %5122 = vst [vmem:[#allocation10 + $0xb0] sm:$0xff] %v4610
    %5123 = vst [vmem:[#allocation10 + $0xb8] sm:$0xff] %v4611
    %5124 = vst [vmem:[#allocation10 + $0xc0] sm:$0xff] %v4612
    %5125 = vst [vmem:[#allocation10 + $0xc8] sm:$0xff] %v4613
    %5126 = vst [vmem:[#allocation10 + $0xd0] sm:$0xff] %v4614
    %5127 = vst [vmem:[#allocation10 + $0xd8] sm:$0xff] %v4615
    %5128 = vst [vmem:[#allocation10 + $0xe0] sm:$0xff] %v4616
    %5129 = vst [vmem:[#allocation10 + $0xe8] sm:$0xff] %v4617
    %5130 = vst [vmem:[#allocation10 + $0xf0] sm:$0xff] %v4618
    %5131 = vst [vmem:[#allocation10 + $0xf8] sm:$0xff] %v4619
    %5132 = vst [vmem:[#allocation10 + $0x100] sm:$0xff] %v4620
    %5133 = vst [vmem:[#allocation10 + $0x108] sm:$0xff] %v4621
    %5134 = vst [vmem:[#allocation10 + $0x110] sm:$0xff] %v4622
    %5135 = vst [vmem:[#allocation10 + $0x118] sm:$0xff] %v4623
    %5136 = vst [vmem:[#allocation10 + $0x120] sm:$0xff] %v4624
    %5137 = vst [vmem:[#allocation10 + $0x128] sm:$0xff] %v4625
    %5138 = vst [vmem:[#allocation10 + $0x130] sm:$0xff] %v4626
    %5139 = vst [vmem:[#allocation10 + $0x138] sm:$0xff] %v4627
    %5140 = vst [vmem:[#allocation10 + $0x140] sm:$0xff] %v4628
    %5141 = vst [vmem:[#allocation10 + $0x148] sm:$0xff] %v4629
    %5142 = vst [vmem:[#allocation10 + $0x150] sm:$0xff] %v4630
    %5143 = vst [vmem:[#allocation10 + $0x158] sm:$0xff] %v4631
    %5144 = vst [vmem:[#allocation10 + $0x160] sm:$0xff] %v4632
    %5145 = vst [vmem:[#allocation10 + $0x168] sm:$0xff] %v4633
    %5146 = vst [vmem:[#allocation10 + $0x170] sm:$0xff] %v4634
    %5147 = vst [vmem:[#allocation10 + $0x178] sm:$0xff] %v4635
    %5148 = vst [vmem:[#allocation10 + $0x180] sm:$0xff] %v4636
    %5149 = vst [vmem:[#allocation10 + $0x188] sm:$0xff] %v4637
    %5150 = vst [vmem:[#allocation10 + $0x190] sm:$0xff] %v4638
    %5151 = vst [vmem:[#allocation10 + $0x198] sm:$0xff] %v4639
    %5152 = vst [vmem:[#allocation10 + $0x1a0] sm:$0xff] %v4640
    %5153 = vst [vmem:[#allocation10 + $0x1a8] sm:$0xff] %v4641
    %5154 = vst [vmem:[#allocation10 + $0x1b0] sm:$0xff] %v4642
    %5155 = vst [vmem:[#allocation10 + $0x1b8] sm:$0xff] %v4643
    %5156 = vst [vmem:[#allocation10 + $0x1c0] sm:$0xff] %v4644
    %5157 = vst [vmem:[#allocation10 + $0x1c8] sm:$0xff] %v4645
    %5158 = vst [vmem:[#allocation10 + $0x1d0] sm:$0xff] %v4646
    %5159 = vst [vmem:[#allocation10 + $0x1d8] sm:$0xff] %v4647
    %5160 = vst [vmem:[#allocation10 + $0x1e0] sm:$0xff] %v4648
    %5161 = vst [vmem:[#allocation10 + $0x1e8] sm:$0xff] %v4649
    %5162 = vst [vmem:[#allocation10 + $0x1f0] sm:$0xff] %v4650
    %5163 = vst [vmem:[#allocation10 + $0x1f8] sm:$0xff] %v4651
    %5164 = vst [vmem:[#allocation10 + $0x200] sm:$0xff] %v4652
    %5165 = vst [vmem:[#allocation10 + $0x208] sm:$0xff] %v4653
    %5166 = vst [vmem:[#allocation10 + $0x210] sm:$0xff] %v4654
    %5167 = vst [vmem:[#allocation10 + $0x218] sm:$0xff] %v4655
    %5168 = vst [vmem:[#allocation10 + $0x220] sm:$0xff] %v4656
    %5169 = vst [vmem:[#allocation10 + $0x228] sm:$0xff] %v4657
    %5170 = vst [vmem:[#allocation10 + $0x230] sm:$0xff] %v4658
    %5171 = vst [vmem:[#allocation10 + $0x238] sm:$0xff] %v4659
    %5172 = vst [vmem:[#allocation10 + $0x240] sm:$0xff] %v4660
    %5173 = vst [vmem:[#allocation10 + $0x248] sm:$0xff] %v4661
    %5174 = vst [vmem:[#allocation10 + $0x250] sm:$0xff] %v4662
    %5175 = vst [vmem:[#allocation10 + $0x258] sm:$0xff] %v4663
    %5176 = vst [vmem:[#allocation10 + $0x260] sm:$0xff] %v4664
    %5177 = vst [vmem:[#allocation10 + $0x268] sm:$0xff] %v4665
    %5178 = vst [vmem:[#allocation10 + $0x270] sm:$0xff] %v4666
    %5179 = vst [vmem:[#allocation10 + $0x278] sm:$0xff] %v4667
    %5180 = vst [vmem:[#allocation10 + $0x280] sm:$0xff] %v4668
    %5181 = vst [vmem:[#allocation10 + $0x288] sm:$0xff] %v4669
    %5182 = vst [vmem:[#allocation10 + $0x290] sm:$0xff] %v4670
    %5183 = vst [vmem:[#allocation10 + $0x298] sm:$0xff] %v4671
    %5184 = vst [vmem:[#allocation10 + $0x2a0] sm:$0xff] %v4672
    %5185 = vst [vmem:[#allocation10 + $0x2a8] sm:$0xff] %v4673
    %5186 = vst [vmem:[#allocation10 + $0x2b0] sm:$0xff] %v4674
    %5187 = vst [vmem:[#allocation10 + $0x2b8] sm:$0xff] %v4675
    %5188 = vst [vmem:[#allocation10 + $0x2c0] sm:$0xff] %v4676
    %5189 = vst [vmem:[#allocation10 + $0x2c8] sm:$0xff] %v4677
    %5190 = vst [vmem:[#allocation10 + $0x2d0] sm:$0xff] %v4678
    %5191 = vst [vmem:[#allocation10 + $0x2d8] sm:$0xff] %v4679
    %5192 = vst [vmem:[#allocation10 + $0x2e0] sm:$0xff] %v4680
    %5193 = vst [vmem:[#allocation10 + $0x2e8] sm:$0xff] %v4681
    %5194 = vst [vmem:[#allocation10 + $0x2f0] sm:$0xff] %v4682
    %5195 = vst [vmem:[#allocation10 + $0x2f8] sm:$0xff] %v4683
    %5196 = vst [vmem:[#allocation10 + $0x300] sm:$0xff] %v4684
    %5197 = vst [vmem:[#allocation10 + $0x308] sm:$0xff] %v4685
    %5198 = vst [vmem:[#allocation10 + $0x310] sm:$0xff] %v4686
    %5199 = vst [vmem:[#allocation10 + $0x318] sm:$0xff] %v4687
    %5200 = vst [vmem:[#allocation10 + $0x320] sm:$0xff] %v4688
    %5201 = vst [vmem:[#allocation10 + $0x328] sm:$0xff] %v4689
    %5202 = vst [vmem:[#allocation10 + $0x330] sm:$0xff] %v4690
    %5203 = vst [vmem:[#allocation10 + $0x338] sm:$0xff] %v4691
    %5204 = vst [vmem:[#allocation10 + $0x340] sm:$0xff] %v4692
    %5205 = vst [vmem:[#allocation10 + $0x348] sm:$0xff] %v4693
    %5206 = vst [vmem:[#allocation10 + $0x350] sm:$0xff] %v4694
    %5207 = vst [vmem:[#allocation10 + $0x358] sm:$0xff] %v4695
    %5208 = vst [vmem:[#allocation10 + $0x360] sm:$0xff] %v4696
    %5209 = vst [vmem:[#allocation10 + $0x368] sm:$0xff] %v4697
    %5210 = vst [vmem:[#allocation10 + $0x370] sm:$0xff] %v4698
    %5211 = vst [vmem:[#allocation10 + $0x378] sm:$0xff] %v4699
    %5212 = vst [vmem:[#allocation10 + $0x380] sm:$0xff] %v4700
    %5213 = vst [vmem:[#allocation10 + $0x388] sm:$0xff] %v4701
    %5214 = vst [vmem:[#allocation10 + $0x390] sm:$0xff] %v4702
    %5215 = vst [vmem:[#allocation10 + $0x398] sm:$0xff] %v4703
    %5216 = vst [vmem:[#allocation10 + $0x3a0] sm:$0xff] %v4704
    %5217 = vst [vmem:[#allocation10 + $0x3a8] sm:$0xff] %v4705
    %5218 = vst [vmem:[#allocation10 + $0x3b0] sm:$0xff] %v4706
    %5219 = vst [vmem:[#allocation10 + $0x3b8] sm:$0xff] %v4707
    %5220 = vst [vmem:[#allocation10 + $0x3c0] sm:$0xff] %v4708
    %5221 = vst [vmem:[#allocation10 + $0x3c8] sm:$0xff] %v4709
    %5222 = vst [vmem:[#allocation10 + $0x3d0] sm:$0xff] %v4710
    %5223 = vst [vmem:[#allocation10 + $0x3d8] sm:$0xff] %v4711
    %5224 = vst [vmem:[#allocation10 + $0x3e0] sm:$0xff] %v4712
    %5225 = vst [vmem:[#allocation10 + $0x3e8] sm:$0xff] %v4713
    %5226 = vst [vmem:[#allocation10 + $0x3f0] sm:$0xff] %v4714
    %5227 = vst [vmem:[#allocation10 + $0x3f8] sm:$0xff] %v4715
    %5228 = vst [vmem:[#allocation10 + $0x400] sm:$0xff] %v4716
    %5229 = vst [vmem:[#allocation10 + $0x408] sm:$0xff] %v4717
    %5230 = vst [vmem:[#allocation10 + $0x410] sm:$0xff] %v4718
    %5231 = vst [vmem:[#allocation10 + $0x418] sm:$0xff] %v4719
    %5232 = vst [vmem:[#allocation10 + $0x420] sm:$0xff] %v4720
    %5233 = vst [vmem:[#allocation10 + $0x428] sm:$0xff] %v4721
    %5234 = vst [vmem:[#allocation10 + $0x430] sm:$0xff] %v4722
    %5235 = vst [vmem:[#allocation10 + $0x438] sm:$0xff] %v4723
    %5236 = vst [vmem:[#allocation10 + $0x440] sm:$0xff] %v4724
    %5237 = vst [vmem:[#allocation10 + $0x448] sm:$0xff] %v4725
    %5238 = vst [vmem:[#allocation10 + $0x450] sm:$0xff] %v4726
    %5239 = vst [vmem:[#allocation10 + $0x458] sm:$0xff] %v4727
    %5240 = vst [vmem:[#allocation10 + $0x460] sm:$0xff] %v4728
    %5241 = vst [vmem:[#allocation10 + $0x468] sm:$0xff] %v4729
    %5242 = vst [vmem:[#allocation10 + $0x470] sm:$0xff] %v4730
    %5243 = vst [vmem:[#allocation10 + $0x478] sm:$0xff] %v4731
    %5244 = vst [vmem:[#allocation10 + $0x480] sm:$0xff] %v4732
    %5245 = vst [vmem:[#allocation10 + $0x488] sm:$0xff] %v4733
    %5246 = vst [vmem:[#allocation10 + $0x490] sm:$0xff] %v4734
    %5247 = vst [vmem:[#allocation10 + $0x498] sm:$0xff] %v4735
    %5248 = vst [vmem:[#allocation10 + $0x4a0] sm:$0xff] %v4736
    %5249 = vst [vmem:[#allocation10 + $0x4a8] sm:$0xff] %v4737
    %5250 = vst [vmem:[#allocation10 + $0x4b0] sm:$0xff] %v4738
    %5251 = vst [vmem:[#allocation10 + $0x4b8] sm:$0xff] %v4739
    %5252 = vst [vmem:[#allocation10 + $0x4c0] sm:$0xff] %v4740
    %5253 = vst [vmem:[#allocation10 + $0x4c8] sm:$0xff] %v4741
    %5254 = vst [vmem:[#allocation10 + $0x4d0] sm:$0xff] %v4742
    %5255 = vst [vmem:[#allocation10 + $0x4d8] sm:$0xff] %v4743
    %5256 = vst [vmem:[#allocation10 + $0x4e0] sm:$0xff] %v4744
    %5257 = vst [vmem:[#allocation10 + $0x4e8] sm:$0xff] %v4745
    %5258 = vst [vmem:[#allocation10 + $0x4f0] sm:$0xff] %v4746
    %5259 = vst [vmem:[#allocation10 + $0x4f8] sm:$0xff] %v4747
    %5260 = vst [vmem:[#allocation10 + $0x500] sm:$0xff] %v4748
    %5261 = vst [vmem:[#allocation10 + $0x508] sm:$0xff] %v4749
    %5262 = vst [vmem:[#allocation10 + $0x510] sm:$0xff] %v4750
    %5263 = vst [vmem:[#allocation10 + $0x518] sm:$0xff] %v4751
    %5264 = vst [vmem:[#allocation10 + $0x520] sm:$0xff] %v4752
    %5265 = vst [vmem:[#allocation10 + $0x528] sm:$0xff] %v4753
    %5266 = vst [vmem:[#allocation10 + $0x530] sm:$0xff] %v4754
    %5267 = vst [vmem:[#allocation10 + $0x538] sm:$0xff] %v4755
    %5268 = vst [vmem:[#allocation10 + $0x540] sm:$0xff] %v4756
    %5269 = vst [vmem:[#allocation10 + $0x548] sm:$0xff] %v4757
    %5270 = vst [vmem:[#allocation10 + $0x550] sm:$0xff] %v4758
    %5271 = vst [vmem:[#allocation10 + $0x558] sm:$0xff] %v4759
    %5272 = vst [vmem:[#allocation10 + $0x560] sm:$0xff] %v4760
    %5273 = vst [vmem:[#allocation10 + $0x568] sm:$0xff] %v4761
    %5274 = vst [vmem:[#allocation10 + $0x570] sm:$0xff] %v4762
    %5275 = vst [vmem:[#allocation10 + $0x578] sm:$0xff] %v4763
    %5276 = vst [vmem:[#allocation10 + $0x580] sm:$0xff] %v4764
    %5277 = vst [vmem:[#allocation10 + $0x588] sm:$0xff] %v4765
    %5278 = vst [vmem:[#allocation10 + $0x590] sm:$0xff] %v4766
    %5279 = vst [vmem:[#allocation10 + $0x598] sm:$0xff] %v4767
    %5280 = vst [vmem:[#allocation10 + $0x5a0] sm:$0xff] %v4768
    %5281 = vst [vmem:[#allocation10 + $0x5a8] sm:$0xff] %v4769
    %5282 = vst [vmem:[#allocation10 + $0x5b0] sm:$0xff] %v4770
    %5283 = vst [vmem:[#allocation10 + $0x5b8] sm:$0xff] %v4771
    %5284 = vst [vmem:[#allocation10 + $0x5c0] sm:$0xff] %v4772
    %5285 = vst [vmem:[#allocation10 + $0x5c8] sm:$0xff] %v4773
    %5286 = vst [vmem:[#allocation10 + $0x5d0] sm:$0xff] %v4774
    %5287 = vst [vmem:[#allocation10 + $0x5d8] sm:$0xff] %v4775
    %5288 = vst [vmem:[#allocation10 + $0x5e0] sm:$0xff] %v4776
    %5289 = vst [vmem:[#allocation10 + $0x5e8] sm:$0xff] %v4777
    %5290 = vst [vmem:[#allocation10 + $0x5f0] sm:$0xff] %v4778
    %5291 = vst [vmem:[#allocation10 + $0x5f8] sm:$0xff] %v4779
    %5292 = vst [vmem:[#allocation10 + $0x600] sm:$0xff] %v4780
    %5293 = vst [vmem:[#allocation10 + $0x608] sm:$0xff] %v4781
    %5294 = vst [vmem:[#allocation10 + $0x610] sm:$0xff] %v4782
    %5295 = vst [vmem:[#allocation10 + $0x618] sm:$0xff] %v4783
    %5296 = vst [vmem:[#allocation10 + $0x620] sm:$0xff] %v4784
    %5297 = vst [vmem:[#allocation10 + $0x628] sm:$0xff] %v4785
    %5298 = vst [vmem:[#allocation10 + $0x630] sm:$0xff] %v4786
    %5299 = vst [vmem:[#allocation10 + $0x638] sm:$0xff] %v4787
    %5300 = vst [vmem:[#allocation10 + $0x640] sm:$0xff] %v4788
    %5301 = vst [vmem:[#allocation10 + $0x648] sm:$0xff] %v4789
    %5302 = vst [vmem:[#allocation10 + $0x650] sm:$0xff] %v4790
    %5303 = vst [vmem:[#allocation10 + $0x658] sm:$0xff] %v4791
    %5304 = vst [vmem:[#allocation10 + $0x660] sm:$0xff] %v4792
    %5305 = vst [vmem:[#allocation10 + $0x668] sm:$0xff] %v4793
    %5306 = vst [vmem:[#allocation10 + $0x670] sm:$0xff] %v4794
    %5307 = vst [vmem:[#allocation10 + $0x678] sm:$0xff] %v4795
    %5308 = vst [vmem:[#allocation10 + $0x680] sm:$0xff] %v4796
    %5309 = vst [vmem:[#allocation10 + $0x688] sm:$0xff] %v4797
    %5310 = vst [vmem:[#allocation10 + $0x690] sm:$0xff] %v4798
    %5311 = vst [vmem:[#allocation10 + $0x698] sm:$0xff] %v4799
    %5312 = vst [vmem:[#allocation10 + $0x6a0] sm:$0xff] %v4800
    %5313 = vst [vmem:[#allocation10 + $0x6a8] sm:$0xff] %v4801
    %5314 = vst [vmem:[#allocation10 + $0x6b0] sm:$0xff] %v4802
    %5315 = vst [vmem:[#allocation10 + $0x6b8] sm:$0xff] %v4803
    %5316 = vst [vmem:[#allocation10 + $0x6c0] sm:$0xff] %v4804
    %5317 = vst [vmem:[#allocation10 + $0x6c8] sm:$0xff] %v4805
    %5318 = vst [vmem:[#allocation10 + $0x6d0] sm:$0xff] %v4806
    %5319 = vst [vmem:[#allocation10 + $0x6d8] sm:$0xff] %v4807
    %5320 = vst [vmem:[#allocation10 + $0x6e0] sm:$0xff] %v4808
    %5321 = vst [vmem:[#allocation10 + $0x6e8] sm:$0xff] %v4809
    %5322 = vst [vmem:[#allocation10 + $0x6f0] sm:$0xff] %v4810
    %5323 = vst [vmem:[#allocation10 + $0x6f8] sm:$0xff] %v4811
    %5324 = vst [vmem:[#allocation10 + $0x700] sm:$0xff] %v4812
    %5325 = vst [vmem:[#allocation10 + $0x708] sm:$0xff] %v4813
    %5326 = vst [vmem:[#allocation10 + $0x710] sm:$0xff] %v4814
    %5327 = vst [vmem:[#allocation10 + $0x718] sm:$0xff] %v4815
    %5328 = vst [vmem:[#allocation10 + $0x720] sm:$0xff] %v4816
    %5329 = vst [vmem:[#allocation10 + $0x728] sm:$0xff] %v4817
    %5330 = vst [vmem:[#allocation10 + $0x730] sm:$0xff] %v4818
    %5331 = vst [vmem:[#allocation10 + $0x738] sm:$0xff] %v4819
    %5332 = vst [vmem:[#allocation10 + $0x740] sm:$0xff] %v4820
    %5333 = vst [vmem:[#allocation10 + $0x748] sm:$0xff] %v4821
    %5334 = vst [vmem:[#allocation10 + $0x750] sm:$0xff] %v4822
    %5335 = vst [vmem:[#allocation10 + $0x758] sm:$0xff] %v4823
    %5336 = vst [vmem:[#allocation10 + $0x760] sm:$0xff] %v4824
    %5337 = vst [vmem:[#allocation10 + $0x768] sm:$0xff] %v4825
    %5338 = vst [vmem:[#allocation10 + $0x770] sm:$0xff] %v4826
    %5339 = vst [vmem:[#allocation10 + $0x778] sm:$0xff] %v4827
    %5340 = vst [vmem:[#allocation10 + $0x780] sm:$0xff] %v4828
    %5341 = vst [vmem:[#allocation10 + $0x788] sm:$0xff] %v4829
    %5342 = vst [vmem:[#allocation10 + $0x790] sm:$0xff] %v4830
    %5343 = vst [vmem:[#allocation10 + $0x798] sm:$0xff] %v4831
    %5344 = vst [vmem:[#allocation10 + $0x7a0] sm:$0xff] %v4832
    %5345 = vst [vmem:[#allocation10 + $0x7a8] sm:$0xff] %v4833
    %5346 = vst [vmem:[#allocation10 + $0x7b0] sm:$0xff] %v4834
    %5347 = vst [vmem:[#allocation10 + $0x7b8] sm:$0xff] %v4835
    %5348 = vst [vmem:[#allocation10 + $0x7c0] sm:$0xff] %v4836
    %5349 = vst [vmem:[#allocation10 + $0x7c8] sm:$0xff] %v4837
    %5350 = vst [vmem:[#allocation10 + $0x7d0] sm:$0xff] %v4838
    %5351 = vst [vmem:[#allocation10 + $0x7d8] sm:$0xff] %v4839
    %5352 = vst [vmem:[#allocation10 + $0x7e0] sm:$0xff] %v4840
    %5353 = vst [vmem:[#allocation10 + $0x7e8] sm:$0xff] %v4841
    %5354 = vst [vmem:[#allocation10 + $0x7f0] sm:$0xff] %v4842
    %5355 = vst [vmem:[#allocation10 + $0x7f8] sm:$0xff] %v4843
    // Predicated region
    $region38: #{tpu_custom_call.1} parent=1 // pred_check
      _
    $region39: #{tpu_custom_call.1} parent=1 // pred_check_branch
      %5357 = sbr.rel (0) target = $region41
    $region40: #{tpu_custom_call.1} parent=1 // pred_region
      %s5359 = ssub.s32 32768, 32768
      %5360 = vsyncadd [#allocation4], %s5359
      %s5361 = sshll.u32 [#allocation10], 4
      %s5362 = int_to_ptr.vmem [resolvable:$true] %s5361
      %5367 = dma.vmem_to_hbm [thread:$0]  %s5362, 32768, %s5, [#allocation4], 2048, 2048, 128
    $region41: #{tpu_custom_call.1} parent=1 // pred_fallthru
      _
    // Predicated region
    $region42: #{tpu_custom_call.1} parent=1 // pred_check
      _
    $region43: #{tpu_custom_call.1} parent=1 // pred_check_branch
      %5369 = sbr.rel (0) target = $region45
    $region44: #{tpu_custom_call.1} parent=1 // pred_region
      %5370 = dma.done [#allocation4], 32768
    $region45: #{tpu_custom_call.1} parent=1 // pred_fallthru
      _
    %5371 = vsyncpa [#allocation3], 1
    %5372 = vsyncpa [#allocation6], 1
    %5373 = vsyncpa [#allocation9], 1
    %5374 = vsyncpa [#allocation4], 1

</llo_original>
